<compile_context>
chip_gen: v6e
topology: v6e:2x2x1
jax: 0.10.0
libtpu: 0.0.40
codegen_flags: <defaults>
</compile_context>

<pallas_src>
import functools

import jax
import jax.numpy as jnp
from jax.experimental import pallas as pl
from jax.experimental.pallas import tpu as pltpu

D_IN = 792
D_H1 = 1024
D_H2 = 256
D_OUT = 32

D_OUT_PAD = 128   # 32 padded up to a full lane width (lane-dense store)


def _round_up(x, m):
    return (x + m - 1) // m * m


def _pick_block_b(B):
    """Batch tile: fill the MXU M dim, keep >=2 grid steps / TC when B allows."""
    if B >= 2048:
        return 512
    if B >= 1024:
        return 256
    if B >= 256:
        return 128
    # Small batch: single grid step; call is launch/DMA-overhead bound anyway.
    return _round_up(max(B, 8), 8)


def _invariant_spec(shape):
    """BlockSpec for a grid-invariant (weight/bias) operand.

    Single-buffered: the block index never changes, so one resident VMEM copy
    suffices -- saves VMEM and guarantees no per-step re-fetch.
    """
    index_map = lambda i: (0,) * len(shape)
    if hasattr(pl, "Buffered"):
        try:
            return pl.BlockSpec(shape, index_map, pipeline_mode=pl.Buffered(1))
        except TypeError:
            pass
    return pl.BlockSpec(shape, index_map)


def _mlp_kernel(x_ref, w1_ref, b1_ref, w2_ref, b2_ref, w3_ref, b3_ref, o_ref):
    # Fused 3-layer MLP for one batch tile.  Weights are fully resident in
    # VMEM (~2.2 MB bf16).  Matmuls run bf16 x bf16 -> f32 accumulate on the
    # MXU; bias + ReLU are done in f32, then cast back to bf16 for the next
    # layer.  The f32 -> bf16 cast of x is VPU work hidden under the MXU.
    x = x_ref[...].astype(jnp.bfloat16)                               # [bb, 792]

    h1 = jnp.dot(x, w1_ref[...], preferred_element_type=jnp.float32)
    h1 = jnp.maximum(h1 + b1_ref[...], 0.0)                           # f32
    h1 = h1.astype(jnp.bfloat16)

    # nn.Dropout(p=0.5) is identity in eval mode.
    h2 = jnp.dot(h1, w2_ref[...], preferred_element_type=jnp.float32)
    h2 = jnp.maximum(h2 + b2_ref[...], 0.0)                           # f32
    h2 = h2.astype(jnp.bfloat16)

    h3 = jnp.dot(h2, w3_ref[...], preferred_element_type=jnp.float32)
    h3 = jnp.maximum(h3 + b3_ref[...], 0.0)                           # final ReLU

    o_ref[...] = h3.astype(o_ref.dtype)                               # [bb, 128] lane-dense


@functools.partial(jax.jit, static_argnames=("block_b",))
def b_k_model_forward(x, prepared, block_b=None):
    """x: [B, 792] float32 -> [B, 32] float32."""
    w1, b1, w2, b2, w3, b3 = prepared
    B = x.shape[0]
    if block_b is None:
        block_b = _pick_block_b(B)
    B_pad = _round_up(B, block_b)

    # Only pad the batch dim (zeros), and only when needed.  No feature pad,
    # no wrapper-side dtype cast -- the kernel reads x in f32 directly.
    xp = x if B_pad == B else jnp.pad(x, ((0, B_pad - B), (0, 0)))

    grid = (B_pad // block_b,)

    flops = 2 * B_pad * (D_IN * D_H1 + D_H1 * D_H2 + D_H2 * D_OUT_PAD)
    bytes_accessed = (
        B_pad * D_IN * 4                                              # x (f32)
        + (D_IN * D_H1 + D_H1 * D_H2 + D_H2 * D_OUT_PAD) * 2          # weights (bf16)
        + (D_H1 + D_H2 + D_OUT_PAD) * 4                               # biases (f32)
        + B_pad * D_OUT_PAD * 4                                       # output (f32)
    )

    out = pl.pallas_call(
        _mlp_kernel,
        out_shape=jax.ShapeDtypeStruct((B_pad, D_OUT_PAD), jnp.float32),
        grid_spec=pltpu.PrefetchScalarGridSpec(
            num_scalar_prefetch=0,
            grid=grid,
            in_specs=[
                pl.BlockSpec((block_b, D_IN), lambda i: (i, 0)),      # x tile
                _invariant_spec((D_IN, D_H1)),
                _invariant_spec((1, D_H1)),
                _invariant_spec((D_H1, D_H2)),
                _invariant_spec((1, D_H2)),
                _invariant_spec((D_H2, D_OUT_PAD)),
                _invariant_spec((1, D_OUT_PAD)),
            ],
            out_specs=pl.BlockSpec((block_b, D_OUT_PAD), lambda i: (i, 0)),
        ),
        compiler_params=pltpu.CompilerParams(
            dimension_semantics=("parallel",),
            vmem_limit_bytes=32 * 1024 * 1024,
        ),
        cost_estimate=pl.CostEstimate(
            flops=flops, transcendentals=0, bytes_accessed=bytes_accessed
        ),
    )(xp, w1, b1, w2, b2, w3, b3)

    return out[:B, :D_OUT]


def init_params(key):
    """Deterministic init mirroring nn.Linear's uniform(-1/sqrt(fan_in), +).

    Weights are returned already transposed to [in_features, out_features];
    biases are [1, out_features].  All float32 (the "master" copy).
    """
    def linear(k, fan_in, fan_out):
        kw, kb = jax.random.split(k)
        bound = 1.0 / jnp.sqrt(fan_in)
        w = jax.random.uniform(kw, (fan_in, fan_out), jnp.float32, -bound, bound)
        b = jax.random.uniform(kb, (1, fan_out), jnp.float32, -bound, bound)
        return w, b

    k1, k2, k3 = jax.random.split(key, 3)
    w1, b1 = linear(k1, D_IN, D_H1)
    w2, b2 = linear(k2, D_H1, D_H2)
    w3, b3 = linear(k3, D_H2, D_OUT)
    return (w1, b1, w2, b2, w3, b3)


def prepare_params(params_f32):
    """Cast / pad master f32 params into the kernel's layout.

    Weights cast to bf16 (MXU dtype); W3/b3 columns zero-padded 32 -> 128 so
    the output store is lane-dense; biases kept f32.  W1 is NOT padded.
    """
    w1, b1, w2, b2, w3, b3 = params_f32
    w1p = w1.astype(jnp.bfloat16)
    w2p = w2.astype(jnp.bfloat16)
    w3p = jnp.pad(w3, ((0, 0), (0, D_OUT_PAD - D_OUT))).astype(jnp.bfloat16)
    b3p = jnp.pad(b3, ((0, 0), (0, D_OUT_PAD - D_OUT)))
    return (w1p, b1, w2p, b2, w3p, b3p)


def reference_forward(x, prepared):
    """Pure-JAX reference using the same bf16/padded params as the kernel."""
    w1, b1, w2, b2, w3, b3 = prepared
    h1 = jnp.maximum(
        jnp.dot(x.astype(jnp.bfloat16), w1, preferred_element_type=jnp.float32) + b1, 0.0)
    h2 = jnp.maximum(
        jnp.dot(h1.astype(jnp.bfloat16), w2, preferred_element_type=jnp.float32) + b2, 0.0)
    h3 = jnp.maximum(
        jnp.dot(h2.astype(jnp.bfloat16), w3, preferred_element_type=jnp.float32) + b3, 0.0)
    return h3[:, :D_OUT]


if __name__ == "__main__":
    key = jax.random.PRNGKey(0)
    k_param, k_x1, k_x2 = jax.random.split(key, 3)

    params = init_params(k_param)
    prepared = prepare_params(params)

    # Small deterministic test batch (single grid step).
    batch = 8
    x = jax.random.normal(k_x1, (batch, D_IN), jnp.float32)
    out = jax.block_until_ready(b_k_model_forward(x, prepared))
    ref = reference_forward(x, prepared)
    assert out.shape == (batch, D_OUT), out.shape
    assert jnp.allclose(out, ref, atol=1e-2, rtol=1e-2), "mismatch vs reference"

    # Ragged batch exercises the batch-dim padding path.
    batch2 = 5
    x2 = jax.random.normal(k_x2, (batch2, D_IN), jnp.float32)
    out2 = jax.block_until_ready(b_k_model_forward(x2, prepared))
    ref2 = reference_forward(x2, prepared)
    assert out2.shape == (batch2, D_OUT), out2.shape
    assert jnp.allclose(out2, ref2, atol=1e-2, rtol=1e-2), "ragged mismatch vs reference"

    print("KERNEL_OK")
</pallas_src>

<mosaic_0001>
module attributes {stable_mosaic.version = 11 : i64} {
  func.func @_mlp_kernel(%arg0: i32, %arg1: memref<8x792xf32, #tpu.memory_space<vmem>>, %arg2: memref<792x1024xbf16, #tpu.memory_space<vmem>>, %arg3: memref<1x1024xf32, #tpu.memory_space<vmem>>, %arg4: memref<1024x256xbf16, #tpu.memory_space<vmem>>, %arg5: memref<1x256xf32, #tpu.memory_space<vmem>>, %arg6: memref<256x128xbf16, #tpu.memory_space<vmem>>, %arg7: memref<1x128xf32, #tpu.memory_space<vmem>>, %arg8: memref<8x128xf32, #tpu.memory_space<vmem>>) attributes {dimension_semantics = [#tpu.dimension_semantics<parallel>], iteration_bounds = array<i64: 1>, scalar_prefetch = 0 : i64, scratch_operands = 0 : i64, tpu.core_type = #tpu.core_type<tc>, window_params = [{transform_indices = @transform_0, window_bounds = array<i64: 8, 792>}, {pipeline_mode = #tpu.pipeline_mode<synchronous>, transform_indices = @transform_1, window_bounds = array<i64: 792, 1024>}, {pipeline_mode = #tpu.pipeline_mode<synchronous>, transform_indices = @transform_2, window_bounds = array<i64: 1, 1024>}, {pipeline_mode = #tpu.pipeline_mode<synchronous>, transform_indices = @transform_3, window_bounds = array<i64: 1024, 256>}, {pipeline_mode = #tpu.pipeline_mode<synchronous>, transform_indices = @transform_4, window_bounds = array<i64: 1, 256>}, {pipeline_mode = #tpu.pipeline_mode<synchronous>, transform_indices = @transform_5, window_bounds = array<i64: 256, 128>}, {pipeline_mode = #tpu.pipeline_mode<synchronous>, transform_indices = @transform_6, window_bounds = array<i64: 1, 128>}, {transform_indices = @transform_7, window_bounds = array<i64: 8, 128>}]} {
    %c0 = arith.constant 0 : index
    %c0_0 = arith.constant 0 : index
    %0 = vector.load %arg1[%c0, %c0_0] : memref<8x792xf32, #tpu.memory_space<vmem>>, vector<8x792xf32>
    %1 = arith.truncf %0 : vector<8x792xf32> to vector<8x792xbf16>
    %c0_1 = arith.constant 0 : index
    %c0_2 = arith.constant 0 : index
    %2 = vector.load %arg2[%c0_1, %c0_2] : memref<792x1024xbf16, #tpu.memory_space<vmem>>, vector<792x1024xbf16>
    %cst = arith.constant dense<0.000000e+00> : vector<8x1024xf32>
    %3 = tpu.matmul %1, %2, %cst {dimension_numbers = #tpu.dot_dimension_numbers<[1], [0], [0], [1], [0, 0, 1, 1], [], []>} : vector<8x792xbf16>, vector<792x1024xbf16>, vector<8x1024xf32> -> vector<8x1024xf32>
    %c0_3 = arith.constant 0 : index
    %c0_4 = arith.constant 0 : index
    %4 = vector.load %arg3[%c0_3, %c0_4] : memref<1x1024xf32, #tpu.memory_space<vmem>>, vector<1x1024xf32>
    %5 = vector.broadcast %4 : vector<1x1024xf32> to vector<8x1024xf32>
    %6 = arith.addf %3, %5 : vector<8x1024xf32>
    %cst_5 = arith.constant 0.000000e+00 : f32
    %7 = vector.broadcast %cst_5 : f32 to vector<8x1024xf32>
    %8 = arith.maximumf %6, %7 : vector<8x1024xf32>
    %9 = arith.truncf %8 : vector<8x1024xf32> to vector<8x1024xbf16>
    %c0_6 = arith.constant 0 : index
    %c0_7 = arith.constant 0 : index
    %10 = vector.load %arg4[%c0_6, %c0_7] : memref<1024x256xbf16, #tpu.memory_space<vmem>>, vector<1024x256xbf16>
    %cst_8 = arith.constant dense<0.000000e+00> : vector<8x256xf32>
    %11 = tpu.matmul %9, %10, %cst_8 {dimension_numbers = #tpu.dot_dimension_numbers<[1], [0], [0], [1], [0, 0, 1, 1], [], []>} : vector<8x1024xbf16>, vector<1024x256xbf16>, vector<8x256xf32> -> vector<8x256xf32>
    %c0_9 = arith.constant 0 : index
    %c0_10 = arith.constant 0 : index
    %12 = vector.load %arg5[%c0_9, %c0_10] : memref<1x256xf32, #tpu.memory_space<vmem>>, vector<1x256xf32>
    %13 = vector.broadcast %12 : vector<1x256xf32> to vector<8x256xf32>
    %14 = arith.addf %11, %13 : vector<8x256xf32>
    %cst_11 = arith.constant 0.000000e+00 : f32
    %15 = vector.broadcast %cst_11 : f32 to vector<8x256xf32>
    %16 = arith.maximumf %14, %15 : vector<8x256xf32>
    %17 = arith.truncf %16 : vector<8x256xf32> to vector<8x256xbf16>
    %c0_12 = arith.constant 0 : index
    %c0_13 = arith.constant 0 : index
    %18 = vector.load %arg6[%c0_12, %c0_13] : memref<256x128xbf16, #tpu.memory_space<vmem>>, vector<256x128xbf16>
    %cst_14 = arith.constant dense<0.000000e+00> : vector<8x128xf32>
    %19 = tpu.matmul %17, %18, %cst_14 {dimension_numbers = #tpu.dot_dimension_numbers<[1], [0], [0], [1], [0, 0, 1, 1], [], []>} : vector<8x256xbf16>, vector<256x128xbf16>, vector<8x128xf32> -> vector<8x128xf32>
    %c0_15 = arith.constant 0 : index
    %c0_16 = arith.constant 0 : index
    %20 = vector.load %arg7[%c0_15, %c0_16] : memref<1x128xf32, #tpu.memory_space<vmem>>, vector<1x128xf32>
    %21 = vector.broadcast %20 : vector<1x128xf32> to vector<8x128xf32>
    %22 = arith.addf %19, %21 : vector<8x128xf32>
    %cst_17 = arith.constant 0.000000e+00 : f32
    %23 = vector.broadcast %cst_17 : f32 to vector<8x128xf32>
    %24 = arith.maximumf %22, %23 : vector<8x128xf32>
    %c0_18 = arith.constant 0 : index
    %c0_19 = arith.constant 0 : index
    %25 = vector.load %arg8[%c0_18, %c0_19] : memref<8x128xf32, #tpu.memory_space<vmem>>, vector<8x128xf32>
    tpu.vector_store %arg8[%c0_18, %c0_19], %24 {strides = array<i32>} : memref<8x128xf32, #tpu.memory_space<vmem>>, vector<8x128xf32>,
    return
  }
  func.func @transform_0(%arg0: i32) -> (i32, i32) {
    %c0_i32 = arith.constant 0 : i32
    %c0_i32_0 = arith.constant 0 : i32
    return %arg0, %c0_i32 : i32, i32
  }
  func.func @transform_1(%arg0: i32) -> (i32, i32) {
    %c0_i32 = arith.constant 0 : i32
    %c0_i32_0 = arith.constant 0 : i32
    %c0_i32_1 = arith.constant 0 : i32
    return %c0_i32, %c0_i32_0 : i32, i32
  }
  func.func @transform_2(%arg0: i32) -> (i32, i32) {
    %c0_i32 = arith.constant 0 : i32
    %c0_i32_0 = arith.constant 0 : i32
    %c0_i32_1 = arith.constant 0 : i32
    return %c0_i32, %c0_i32_0 : i32, i32
  }
  func.func @transform_3(%arg0: i32) -> (i32, i32) {
    %c0_i32 = arith.constant 0 : i32
    %c0_i32_0 = arith.constant 0 : i32
    %c0_i32_1 = arith.constant 0 : i32
    return %c0_i32, %c0_i32_0 : i32, i32
  }
  func.func @transform_4(%arg0: i32) -> (i32, i32) {
    %c0_i32 = arith.constant 0 : i32
    %c0_i32_0 = arith.constant 0 : i32
    %c0_i32_1 = arith.constant 0 : i32
    return %c0_i32, %c0_i32_0 : i32, i32
  }
  func.func @transform_5(%arg0: i32) -> (i32, i32) {
    %c0_i32 = arith.constant 0 : i32
    %c0_i32_0 = arith.constant 0 : i32
    %c0_i32_1 = arith.constant 0 : i32
    return %c0_i32, %c0_i32_0 : i32, i32
  }
  func.func @transform_6(%arg0: i32) -> (i32, i32) {
    %c0_i32 = arith.constant 0 : i32
    %c0_i32_0 = arith.constant 0 : i32
    %c0_i32_1 = arith.constant 0 : i32
    return %c0_i32, %c0_i32_0 : i32, i32
  }
  func.func @transform_7(%arg0: i32) -> (i32, i32) {
    %c0_i32 = arith.constant 0 : i32
    %c0_i32_0 = arith.constant 0 : i32
    return %arg0, %c0_i32 : i32, i32
  }
}

</mosaic_0001>

<llo_original>
// kernel: b_k_model_forward.1
$region0: #{b_k_model_forward.1}
  #allocation0 [shape = 'u32[]', space=smem, size = 0x4, offset = 0x4, fixed_abs, tag = 'smem constant byte address 0x4 - core index']
  #allocation1 [shape = 'u32[144,128]{1,0:T(1,128)}', space=vmem, size = 0x12000, scoped, tag = 'internal scratch']
  %s0 = inlined_call_operand.hbm [shape: f32[8,792], index: 0, kind: input, shape index: {}]
  %s1 = inlined_call_operand.hbm [shape: bf16[792,1024], index: 1, kind: input, shape index: {}]
  %s2 = inlined_call_operand.hbm [shape: f32[1,1024], index: 2, kind: input, shape index: {}]
  %s3 = inlined_call_operand.hbm [shape: bf16[1024,256], index: 3, kind: input, shape index: {}]
  %s4 = inlined_call_operand.hbm [shape: f32[1,256], index: 4, kind: input, shape index: {}]
  %s5 = inlined_call_operand.hbm [shape: bf16[256,128], index: 5, kind: input, shape index: {}]
  %s6 = inlined_call_operand.hbm [shape: f32[1,128], index: 6, kind: input, shape index: {}]
  %s7 = inlined_call_operand.hbm [shape: f32[8,128], index: 7, kind: output, shape index: {}]
  %s8 = sld [smem:[#allocation0]]
  $region66: #{b_k_model_forward.1} parent=0
    _
  %s10 = ssub.s32 1, %s8
  %s11 = scalar_select 0, %s10, %s8
  $region1: #{b_k_model_forward.1} parent=0
    #allocation2 [shape = 'u8[28672]{0}', space=vmem, size = 0x7000, scoped, tag = 'input window, operand 0, single buffered']
    #allocation3 [shape = 's32[1]{0}', space=sflag, size = 0x4, scoped, tag = 'scoped memory for b_k_model_forward.1']
    #allocation4 [shape = 's32[1]{0}', space=sflag, size = 0x4, scoped, tag = 'scoped memory for b_k_model_forward.1']
    #allocation5 [shape = 'u8[1622016]{0}', space=vmem, size = 0x18c000, scoped, tag = 'input window, operand 1, single buffered']
    #allocation6 [shape = 's32[1]{0}', space=sflag, size = 0x4, scoped, tag = 'scoped memory for b_k_model_forward.1']
    #allocation7 [shape = 'u8[4096]{0}', space=vmem, size = 0x1000, scoped, tag = 'input window, operand 2, single buffered']
    #allocation8 [shape = 'u8[524288]{0}', space=vmem, size = 0x80000, scoped, tag = 'input window, operand 3, single buffered']
    #allocation9 [shape = 's32[1]{0}', space=sflag, size = 0x4, scoped, tag = 'scoped memory for b_k_model_forward.1']
    #allocation10 [shape = 'u8[1024]{0}', space=vmem, size = 0x400, scoped, tag = 'input window, operand 4, single buffered']
    #allocation11 [shape = 'u8[65536]{0}', space=vmem, size = 0x10000, scoped, tag = 'input window, operand 5, single buffered']
    #allocation12 [shape = 's32[1]{0}', space=sflag, size = 0x4, scoped, tag = 'scoped memory for b_k_model_forward.1']
    #allocation13 [shape = 'u8[512]{0}', space=vmem, size = 0x400, scoped, tag = 'input window, operand 6, single buffered']
    #allocation14 [shape = 'u8[4096]{0}', space=vmem, size = 0x1000, scoped, tag = 'output window, operand 0, single buffered']
    %12 = vsyncpa [#allocation3], 0
    %13 = vsyncpa [#allocation6], 0
    %14 = vsyncpa [#allocation9], 0
    %15 = vsyncpa [#allocation12], 0
    %16 = vsyncpa [#allocation4], 0
    // Predicated region
    $region2: #{b_k_model_forward.1} parent=1 // pred_check
      _
    $region3: #{b_k_model_forward.1} parent=1 // pred_check_branch
      %18 = sbr.rel (0) target = $region5
    $region4: #{b_k_model_forward.1} parent=1 // pred_region
      %s20 = ssub.s32 896, 896
      %21 = vsyncadd [#allocation3], %s20
      %s23 = sshll.u32 [#allocation2], 4
      %s24 = int_to_ptr.vmem [resolvable:$true] %s23
      %26 = dma.hbm_to_vmem [thread:$0]  %s0, 896, %s24, [#allocation3]
    $region5: #{b_k_model_forward.1} parent=1 // pred_fallthru
      _
    // Predicated region
    $region6: #{b_k_model_forward.1} parent=1 // pred_check
      _
    $region7: #{b_k_model_forward.1} parent=1 // pred_check_branch
      %28 = sbr.rel (0) target = $region9
    $region8: #{b_k_model_forward.1} parent=1 // pred_region
      %s30 = ssub.s32 50688, 50688
      %31 = vsyncadd [#allocation6], %s30
      %s32 = sshll.u32 [#allocation5], 4
      %s33 = int_to_ptr.vmem [resolvable:$true] %s32
      %38 = dma.hbm_to_vmem [thread:$0]  %s1, 50688, %s33, [#allocation6], 512, 512, 32
    $region9: #{b_k_model_forward.1} parent=1 // pred_fallthru
      _
    // Predicated region
    $region10: #{b_k_model_forward.1} parent=1 // pred_check
      _
    $region11: #{b_k_model_forward.1} parent=1 // pred_check_branch
      %40 = sbr.rel (0) target = $region13
    $region12: #{b_k_model_forward.1} parent=1 // pred_region
      %s42 = ssub.s32 128, 128
      %43 = vsyncadd [#allocation6], %s42
      %s45 = sshll.u32 [#allocation7], 4
      %s46 = int_to_ptr.vmem [resolvable:$true] %s45
      %48 = dma.hbm_to_vmem [thread:$0]  %s2, 128, %s46, [#allocation6]
    $region13: #{b_k_model_forward.1} parent=1 // pred_fallthru
      _
    // Predicated region
    $region14: #{b_k_model_forward.1} parent=1 // pred_check
      _
    $region15: #{b_k_model_forward.1} parent=1 // pred_check_branch
      %50 = sbr.rel (0) target = $region17
    $region16: #{b_k_model_forward.1} parent=1 // pred_region
      %s52 = ssub.s32 16384, 16384
      %53 = vsyncadd [#allocation9], %s52
      %s54 = sshll.u32 [#allocation8], 4
      %s55 = int_to_ptr.vmem [resolvable:$true] %s54
      %60 = dma.hbm_to_vmem [thread:$0]  %s3, 16384, %s55, [#allocation9], 128, 128, 8
    $region17: #{b_k_model_forward.1} parent=1 // pred_fallthru
      _
    // Predicated region
    $region18: #{b_k_model_forward.1} parent=1 // pred_check
      _
    $region19: #{b_k_model_forward.1} parent=1 // pred_check_branch
      %62 = sbr.rel (0) target = $region21
    $region20: #{b_k_model_forward.1} parent=1 // pred_region
      %s64 = ssub.s32 32, 32
      %65 = vsyncadd [#allocation9], %s64
      %s67 = sshll.u32 [#allocation10], 4
      %s68 = int_to_ptr.vmem [resolvable:$true] %s67
      %70 = dma.hbm_to_vmem [thread:$0]  %s4, 32, %s68, [#allocation9]
    $region21: #{b_k_model_forward.1} parent=1 // pred_fallthru
      _
    // Predicated region
    $region22: #{b_k_model_forward.1} parent=1 // pred_check
      _
    $region23: #{b_k_model_forward.1} parent=1 // pred_check_branch
      %72 = sbr.rel (0) target = $region25
    $region24: #{b_k_model_forward.1} parent=1 // pred_region
      %s74 = ssub.s32 2048, 2048
      %75 = vsyncadd [#allocation12], %s74
      %s76 = sshll.u32 [#allocation11], 4
      %s77 = int_to_ptr.vmem [resolvable:$true] %s76
      %82 = dma.hbm_to_vmem [thread:$0]  %s5, 2048, %s77, [#allocation12], 64, 64, 4
    $region25: #{b_k_model_forward.1} parent=1 // pred_fallthru
      _
    // Predicated region
    $region26: #{b_k_model_forward.1} parent=1 // pred_check
      _
    $region27: #{b_k_model_forward.1} parent=1 // pred_check_branch
      %84 = sbr.rel (0) target = $region29
    $region28: #{b_k_model_forward.1} parent=1 // pred_region
      %s86 = ssub.s32 16, 16
      %87 = vsyncadd [#allocation12], %s86
      %s89 = sshll.u32 [#allocation13], 4
      %s90 = int_to_ptr.vmem [resolvable:$true] %s89
      %92 = dma.hbm_to_vmem [thread:$0]  %s6, 16, %s90, [#allocation12]
    $region29: #{b_k_model_forward.1} parent=1 // pred_fallthru
      _
    // Predicated region
    $region30: #{b_k_model_forward.1} parent=1 // pred_check
      _
    $region31: #{b_k_model_forward.1} parent=1 // pred_check_branch
      %94 = sbr.rel (0) target = $region33
    $region32: #{b_k_model_forward.1} parent=1 // pred_region
      %95 = dma.done [#allocation3], 896
    $region33: #{b_k_model_forward.1} parent=1 // pred_fallthru
      _
    // Predicated region
    $region34: #{b_k_model_forward.1} parent=1 // pred_check
      _
    $region35: #{b_k_model_forward.1} parent=1 // pred_check_branch
      %97 = sbr.rel (0) target = $region37
    $region36: #{b_k_model_forward.1} parent=1 // pred_region
      %98 = dma.done [#allocation6], 50688
    $region37: #{b_k_model_forward.1} parent=1 // pred_fallthru
      _
    // Predicated region
    $region38: #{b_k_model_forward.1} parent=1 // pred_check
      _
    $region39: #{b_k_model_forward.1} parent=1 // pred_check_branch
      %100 = sbr.rel (0) target = $region41
    $region40: #{b_k_model_forward.1} parent=1 // pred_region
      %101 = dma.done [#allocation6], 128
    $region41: #{b_k_model_forward.1} parent=1 // pred_fallthru
      _
    // Predicated region
    $region42: #{b_k_model_forward.1} parent=1 // pred_check
      _
    $region43: #{b_k_model_forward.1} parent=1 // pred_check_branch
      %103 = sbr.rel (0) target = $region45
    $region44: #{b_k_model_forward.1} parent=1 // pred_region
      %104 = dma.done [#allocation9], 16384
    $region45: #{b_k_model_forward.1} parent=1 // pred_fallthru
      _
    // Predicated region
    $region46: #{b_k_model_forward.1} parent=1 // pred_check
      _
    $region47: #{b_k_model_forward.1} parent=1 // pred_check_branch
      %106 = sbr.rel (0) target = $region49
    $region48: #{b_k_model_forward.1} parent=1 // pred_region
      %107 = dma.done [#allocation9], 32
    $region49: #{b_k_model_forward.1} parent=1 // pred_fallthru
      _
    // Predicated region
    $region50: #{b_k_model_forward.1} parent=1 // pred_check
      _
    $region51: #{b_k_model_forward.1} parent=1 // pred_check_branch
      %109 = sbr.rel (0) target = $region53
    $region52: #{b_k_model_forward.1} parent=1 // pred_region
      %110 = dma.done [#allocation12], 2048
    $region53: #{b_k_model_forward.1} parent=1 // pred_fallthru
      _
    // Predicated region
    $region54: #{b_k_model_forward.1} parent=1 // pred_check
      _
    $region55: #{b_k_model_forward.1} parent=1 // pred_check_branch
      %112 = sbr.rel (0) target = $region57
    $region56: #{b_k_model_forward.1} parent=1 // pred_region
      %113 = dma.done [#allocation12], 16
    $region57: #{b_k_model_forward.1} parent=1 // pred_fallthru
      _
    %v115 = vld [vmem:[#allocation2] sm:$0xff]
    %v116 = vld [vmem:[#allocation2 + $0x8] sm:$0xff]
    %v117 = vld [vmem:[#allocation2 + $0x10] sm:$0xff]
    %v118 = vld [vmem:[#allocation2 + $0x18] sm:$0xff]
    %v119 = vld [vmem:[#allocation2 + $0x20] sm:$0xff]
    %v120 = vld [vmem:[#allocation2 + $0x28] sm:$0xff]
    %v121 = vld [vmem:[#allocation2 + $0x30] sm:$0xff]
    %v122 = vpack.c.bf16 %v115, %v115
    %v123 = vpack.c.bf16 %v116, %v116
    %v124 = vpack.c.bf16 %v117, %v117
    %v125 = vpack.c.bf16 %v118, %v118
    %v126 = vpack.c.bf16 %v119, %v119
    %v127 = vpack.c.bf16 %v120, %v120
    %v128 = vpack.c.bf16 %v121, %v121
    %v129 = vld [vmem:[#allocation5] sm:$0xff]
    %v130 = vld [vmem:[#allocation5 + $0x8] sm:$0xff]
    %v131 = vld [vmem:[#allocation5 + $0x10] sm:$0xff]
    %v132 = vld [vmem:[#allocation5 + $0x18] sm:$0xff]
    %v133 = vld [vmem:[#allocation5 + $0x20] sm:$0xff]
    %v134 = vld [vmem:[#allocation5 + $0x28] sm:$0xff]
    %v135 = vld [vmem:[#allocation5 + $0x30] sm:$0xff]
    %v136 = vld [vmem:[#allocation5 + $0x38] sm:$0xff]
    %v137 = vld [vmem:[#allocation5 + $0x40] sm:$0xff]
    %v138 = vld [vmem:[#allocation5 + $0x48] sm:$0xff]
    %v139 = vld [vmem:[#allocation5 + $0x50] sm:$0xff]
    %v140 = vld [vmem:[#allocation5 + $0x58] sm:$0xff]
    %v141 = vld [vmem:[#allocation5 + $0x60] sm:$0xff]
    %v142 = vld [vmem:[#allocation5 + $0x68] sm:$0xff]
    %v143 = vld [vmem:[#allocation5 + $0x70] sm:$0xff]
    %v144 = vld [vmem:[#allocation5 + $0x78] sm:$0xff]
    %v145 = vld [vmem:[#allocation5 + $0x80] sm:$0xff]
    %v146 = vld [vmem:[#allocation5 + $0x88] sm:$0xff]
    %v147 = vld [vmem:[#allocation5 + $0x90] sm:$0xff]
    %v148 = vld [vmem:[#allocation5 + $0x98] sm:$0xff]
    %v149 = vld [vmem:[#allocation5 + $0xa0] sm:$0xff]
    %v150 = vld [vmem:[#allocation5 + $0xa8] sm:$0xff]
    %v151 = vld [vmem:[#allocation5 + $0xb0] sm:$0xff]
    %v152 = vld [vmem:[#allocation5 + $0xb8] sm:$0xff]
    %v153 = vld [vmem:[#allocation5 + $0xc0] sm:$0xff]
    %v154 = vld [vmem:[#allocation5 + $0xc8] sm:$0xff]
    %v155 = vld [vmem:[#allocation5 + $0xd0] sm:$0xff]
    %v156 = vld [vmem:[#allocation5 + $0xd8] sm:$0xff]
    %v157 = vld [vmem:[#allocation5 + $0xe0] sm:$0xff]
    %v158 = vld [vmem:[#allocation5 + $0xe8] sm:$0xff]
    %v159 = vld [vmem:[#allocation5 + $0xf0] sm:$0xff]
    %v160 = vld [vmem:[#allocation5 + $0xf8] sm:$0xff]
    %v161 = vld [vmem:[#allocation5 + $0x100] sm:$0xff]
    %v162 = vld [vmem:[#allocation5 + $0x108] sm:$0xff]
    %v163 = vld [vmem:[#allocation5 + $0x110] sm:$0xff]
    %v164 = vld [vmem:[#allocation5 + $0x118] sm:$0xff]
    %v165 = vld [vmem:[#allocation5 + $0x120] sm:$0xff]
    %v166 = vld [vmem:[#allocation5 + $0x128] sm:$0xff]
    %v167 = vld [vmem:[#allocation5 + $0x130] sm:$0xff]
    %v168 = vld [vmem:[#allocation5 + $0x138] sm:$0xff]
    %v169 = vld [vmem:[#allocation5 + $0x140] sm:$0xff]
    %v170 = vld [vmem:[#allocation5 + $0x148] sm:$0xff]
    %v171 = vld [vmem:[#allocation5 + $0x150] sm:$0xff]
    %v172 = vld [vmem:[#allocation5 + $0x158] sm:$0xff]
    %v173 = vld [vmem:[#allocation5 + $0x160] sm:$0xff]
    %v174 = vld [vmem:[#allocation5 + $0x168] sm:$0xff]
    %v175 = vld [vmem:[#allocation5 + $0x170] sm:$0xff]
    %v176 = vld [vmem:[#allocation5 + $0x178] sm:$0xff]
    %v177 = vld [vmem:[#allocation5 + $0x180] sm:$0xff]
    %v178 = vld [vmem:[#allocation5 + $0x188] sm:$0xff]
    %v179 = vld [vmem:[#allocation5 + $0x190] sm:$0xff]
    %v180 = vld [vmem:[#allocation5 + $0x198] sm:$0xff]
    %v181 = vld [vmem:[#allocation5 + $0x1a0] sm:$0xff]
    %v182 = vld [vmem:[#allocation5 + $0x1a8] sm:$0xff]
    %v183 = vld [vmem:[#allocation5 + $0x1b0] sm:$0xff]
    %v184 = vld [vmem:[#allocation5 + $0x1b8] sm:$0xff]
    %v185 = vld [vmem:[#allocation5 + $0x1c0] sm:$0xff]
    %v186 = vld [vmem:[#allocation5 + $0x1c8] sm:$0xff]
    %v187 = vld [vmem:[#allocation5 + $0x1d0] sm:$0xff]
    %v188 = vld [vmem:[#allocation5 + $0x1d8] sm:$0xff]
    %v189 = vld [vmem:[#allocation5 + $0x1e0] sm:$0xff]
    %v190 = vld [vmem:[#allocation5 + $0x1e8] sm:$0xff]
    %v191 = vld [vmem:[#allocation5 + $0x1f0] sm:$0xff]
    %v192 = vld [vmem:[#allocation5 + $0x1f8] sm:$0xff]
    %v193 = vld [vmem:[#allocation5 + $0x200] sm:$0xff]
    %v194 = vld [vmem:[#allocation5 + $0x208] sm:$0xff]
    %v195 = vld [vmem:[#allocation5 + $0x210] sm:$0xff]
    %v196 = vld [vmem:[#allocation5 + $0x218] sm:$0xff]
    %v197 = vld [vmem:[#allocation5 + $0x220] sm:$0xff]
    %v198 = vld [vmem:[#allocation5 + $0x228] sm:$0xff]
    %v199 = vld [vmem:[#allocation5 + $0x230] sm:$0xff]
    %v200 = vld [vmem:[#allocation5 + $0x238] sm:$0xff]
    %v201 = vld [vmem:[#allocation5 + $0x240] sm:$0xff]
    %v202 = vld [vmem:[#allocation5 + $0x248] sm:$0xff]
    %v203 = vld [vmem:[#allocation5 + $0x250] sm:$0xff]
    %v204 = vld [vmem:[#allocation5 + $0x258] sm:$0xff]
    %v205 = vld [vmem:[#allocation5 + $0x260] sm:$0xff]
    %v206 = vld [vmem:[#allocation5 + $0x268] sm:$0xff]
    %v207 = vld [vmem:[#allocation5 + $0x270] sm:$0xff]
    %v208 = vld [vmem:[#allocation5 + $0x278] sm:$0xff]
    %v209 = vld [vmem:[#allocation5 + $0x280] sm:$0xff]
    %v210 = vld [vmem:[#allocation5 + $0x288] sm:$0xff]
    %v211 = vld [vmem:[#allocation5 + $0x290] sm:$0xff]
    %v212 = vld [vmem:[#allocation5 + $0x298] sm:$0xff]
    %v213 = vld [vmem:[#allocation5 + $0x2a0] sm:$0xff]
    %v214 = vld [vmem:[#allocation5 + $0x2a8] sm:$0xff]
    %v215 = vld [vmem:[#allocation5 + $0x2b0] sm:$0xff]
    %v216 = vld [vmem:[#allocation5 + $0x2b8] sm:$0xff]
    %v217 = vld [vmem:[#allocation5 + $0x2c0] sm:$0xff]
    %v218 = vld [vmem:[#allocation5 + $0x2c8] sm:$0xff]
    %v219 = vld [vmem:[#allocation5 + $0x2d0] sm:$0xff]
    %v220 = vld [vmem:[#allocation5 + $0x2d8] sm:$0xff]
    %v221 = vld [vmem:[#allocation5 + $0x2e0] sm:$0xff]
    %v222 = vld [vmem:[#allocation5 + $0x2e8] sm:$0xff]
    %v223 = vld [vmem:[#allocation5 + $0x2f0] sm:$0xff]
    %v224 = vld [vmem:[#allocation5 + $0x2f8] sm:$0xff]
    %v225 = vld [vmem:[#allocation5 + $0x300] sm:$0xff]
    %v226 = vld [vmem:[#allocation5 + $0x308] sm:$0xff]
    %v227 = vld [vmem:[#allocation5 + $0x310] sm:$0xff]
    %v228 = vld [vmem:[#allocation5 + $0x318] sm:$0xff]
    %v229 = vld [vmem:[#allocation5 + $0x320] sm:$0xff]
    %v230 = vld [vmem:[#allocation5 + $0x328] sm:$0xff]
    %v231 = vld [vmem:[#allocation5 + $0x330] sm:$0xff]
    %v232 = vld [vmem:[#allocation5 + $0x338] sm:$0xff]
    %v233 = vld [vmem:[#allocation5 + $0x340] sm:$0xff]
    %v234 = vld [vmem:[#allocation5 + $0x348] sm:$0xff]
    %v235 = vld [vmem:[#allocation5 + $0x350] sm:$0xff]
    %v236 = vld [vmem:[#allocation5 + $0x358] sm:$0xff]
    %v237 = vld [vmem:[#allocation5 + $0x360] sm:$0xff]
    %v238 = vld [vmem:[#allocation5 + $0x368] sm:$0xff]
    %v239 = vld [vmem:[#allocation5 + $0x370] sm:$0xff]
    %v240 = vld [vmem:[#allocation5 + $0x378] sm:$0xff]
    %v241 = vld [vmem:[#allocation5 + $0x380] sm:$0xff]
    %v242 = vld [vmem:[#allocation5 + $0x388] sm:$0xff]
    %v243 = vld [vmem:[#allocation5 + $0x390] sm:$0xff]
    %v244 = vld [vmem:[#allocation5 + $0x398] sm:$0xff]
    %v245 = vld [vmem:[#allocation5 + $0x3a0] sm:$0xff]
    %v246 = vld [vmem:[#allocation5 + $0x3a8] sm:$0xff]
    %v247 = vld [vmem:[#allocation5 + $0x3b0] sm:$0xff]
    %v248 = vld [vmem:[#allocation5 + $0x3b8] sm:$0xff]
    %v249 = vld [vmem:[#allocation5 + $0x3c0] sm:$0xff]
    %v250 = vld [vmem:[#allocation5 + $0x3c8] sm:$0xff]
    %v251 = vld [vmem:[#allocation5 + $0x3d0] sm:$0xff]
    %v252 = vld [vmem:[#allocation5 + $0x3d8] sm:$0xff]
    %v253 = vld [vmem:[#allocation5 + $0x3e0] sm:$0xff]
    %v254 = vld [vmem:[#allocation5 + $0x3e8] sm:$0xff]
    %v255 = vld [vmem:[#allocation5 + $0x3f0] sm:$0xff]
    %v256 = vld [vmem:[#allocation5 + $0x3f8] sm:$0xff]
    %v257 = vld [vmem:[#allocation5 + $0x400] sm:$0xff]
    %v258 = vld [vmem:[#allocation5 + $0x408] sm:$0xff]
    %v259 = vld [vmem:[#allocation5 + $0x410] sm:$0xff]
    %v260 = vld [vmem:[#allocation5 + $0x418] sm:$0xff]
    %v261 = vld [vmem:[#allocation5 + $0x420] sm:$0xff]
    %v262 = vld [vmem:[#allocation5 + $0x428] sm:$0xff]
    %v263 = vld [vmem:[#allocation5 + $0x430] sm:$0xff]
    %v264 = vld [vmem:[#allocation5 + $0x438] sm:$0xff]
    %v265 = vld [vmem:[#allocation5 + $0x440] sm:$0xff]
    %v266 = vld [vmem:[#allocation5 + $0x448] sm:$0xff]
    %v267 = vld [vmem:[#allocation5 + $0x450] sm:$0xff]
    %v268 = vld [vmem:[#allocation5 + $0x458] sm:$0xff]
    %v269 = vld [vmem:[#allocation5 + $0x460] sm:$0xff]
    %v270 = vld [vmem:[#allocation5 + $0x468] sm:$0xff]
    %v271 = vld [vmem:[#allocation5 + $0x470] sm:$0xff]
    %v272 = vld [vmem:[#allocation5 + $0x478] sm:$0xff]
    %v273 = vld [vmem:[#allocation5 + $0x480] sm:$0xff]
    %v274 = vld [vmem:[#allocation5 + $0x488] sm:$0xff]
    %v275 = vld [vmem:[#allocation5 + $0x490] sm:$0xff]
    %v276 = vld [vmem:[#allocation5 + $0x498] sm:$0xff]
    %v277 = vld [vmem:[#allocation5 + $0x4a0] sm:$0xff]
    %v278 = vld [vmem:[#allocation5 + $0x4a8] sm:$0xff]
    %v279 = vld [vmem:[#allocation5 + $0x4b0] sm:$0xff]
    %v280 = vld [vmem:[#allocation5 + $0x4b8] sm:$0xff]
    %v281 = vld [vmem:[#allocation5 + $0x4c0] sm:$0xff]
    %v282 = vld [vmem:[#allocation5 + $0x4c8] sm:$0xff]
    %v283 = vld [vmem:[#allocation5 + $0x4d0] sm:$0xff]
    %v284 = vld [vmem:[#allocation5 + $0x4d8] sm:$0xff]
    %v285 = vld [vmem:[#allocation5 + $0x4e0] sm:$0xff]
    %v286 = vld [vmem:[#allocation5 + $0x4e8] sm:$0xff]
    %v287 = vld [vmem:[#allocation5 + $0x4f0] sm:$0xff]
    %v288 = vld [vmem:[#allocation5 + $0x4f8] sm:$0xff]
    %v289 = vld [vmem:[#allocation5 + $0x500] sm:$0xff]
    %v290 = vld [vmem:[#allocation5 + $0x508] sm:$0xff]
    %v291 = vld [vmem:[#allocation5 + $0x510] sm:$0xff]
    %v292 = vld [vmem:[#allocation5 + $0x518] sm:$0xff]
    %v293 = vld [vmem:[#allocation5 + $0x520] sm:$0xff]
    %v294 = vld [vmem:[#allocation5 + $0x528] sm:$0xff]
    %v295 = vld [vmem:[#allocation5 + $0x530] sm:$0xff]
    %v296 = vld [vmem:[#allocation5 + $0x538] sm:$0xff]
    %v297 = vld [vmem:[#allocation5 + $0x540] sm:$0xff]
    %v298 = vld [vmem:[#allocation5 + $0x548] sm:$0xff]
    %v299 = vld [vmem:[#allocation5 + $0x550] sm:$0xff]
    %v300 = vld [vmem:[#allocation5 + $0x558] sm:$0xff]
    %v301 = vld [vmem:[#allocation5 + $0x560] sm:$0xff]
    %v302 = vld [vmem:[#allocation5 + $0x568] sm:$0xff]
    %v303 = vld [vmem:[#allocation5 + $0x570] sm:$0xff]
    %v304 = vld [vmem:[#allocation5 + $0x578] sm:$0xff]
    %v305 = vld [vmem:[#allocation5 + $0x580] sm:$0xff]
    %v306 = vld [vmem:[#allocation5 + $0x588] sm:$0xff]
    %v307 = vld [vmem:[#allocation5 + $0x590] sm:$0xff]
    %v308 = vld [vmem:[#allocation5 + $0x598] sm:$0xff]
    %v309 = vld [vmem:[#allocation5 + $0x5a0] sm:$0xff]
    %v310 = vld [vmem:[#allocation5 + $0x5a8] sm:$0xff]
    %v311 = vld [vmem:[#allocation5 + $0x5b0] sm:$0xff]
    %v312 = vld [vmem:[#allocation5 + $0x5b8] sm:$0xff]
    %v313 = vld [vmem:[#allocation5 + $0x5c0] sm:$0xff]
    %v314 = vld [vmem:[#allocation5 + $0x5c8] sm:$0xff]
    %v315 = vld [vmem:[#allocation5 + $0x5d0] sm:$0xff]
    %v316 = vld [vmem:[#allocation5 + $0x5d8] sm:$0xff]
    %v317 = vld [vmem:[#allocation5 + $0x5e0] sm:$0xff]
    %v318 = vld [vmem:[#allocation5 + $0x5e8] sm:$0xff]
    %v319 = vld [vmem:[#allocation5 + $0x5f0] sm:$0xff]
    %v320 = vld [vmem:[#allocation5 + $0x5f8] sm:$0xff]
    %v321 = vld [vmem:[#allocation5 + $0x600] sm:$0xff]
    %v322 = vld [vmem:[#allocation5 + $0x608] sm:$0xff]
    %v323 = vld [vmem:[#allocation5 + $0x610] sm:$0xff]
    %v324 = vld [vmem:[#allocation5 + $0x618] sm:$0xff]
    %v325 = vld [vmem:[#allocation5 + $0x620] sm:$0xff]
    %v326 = vld [vmem:[#allocation5 + $0x628] sm:$0xff]
    %v327 = vld [vmem:[#allocation5 + $0x630] sm:$0xff]
    %v328 = vld [vmem:[#allocation5 + $0x638] sm:$0xff]
    %v329 = vld [vmem:[#allocation5 + $0x640] sm:$0xff]
    %v330 = vld [vmem:[#allocation5 + $0x648] sm:$0xff]
    %v331 = vld [vmem:[#allocation5 + $0x650] sm:$0xff]
    %v332 = vld [vmem:[#allocation5 + $0x658] sm:$0xff]
    %v333 = vld [vmem:[#allocation5 + $0x660] sm:$0xff]
    %v334 = vld [vmem:[#allocation5 + $0x668] sm:$0xff]
    %v335 = vld [vmem:[#allocation5 + $0x670] sm:$0xff]
    %v336 = vld [vmem:[#allocation5 + $0x678] sm:$0xff]
    %v337 = vld [vmem:[#allocation5 + $0x680] sm:$0xff]
    %v338 = vld [vmem:[#allocation5 + $0x688] sm:$0xff]
    %v339 = vld [vmem:[#allocation5 + $0x690] sm:$0xff]
    %v340 = vld [vmem:[#allocation5 + $0x698] sm:$0xff]
    %v341 = vld [vmem:[#allocation5 + $0x6a0] sm:$0xff]
    %v342 = vld [vmem:[#allocation5 + $0x6a8] sm:$0xff]
    %v343 = vld [vmem:[#allocation5 + $0x6b0] sm:$0xff]
    %v344 = vld [vmem:[#allocation5 + $0x6b8] sm:$0xff]
    %v345 = vld [vmem:[#allocation5 + $0x6c0] sm:$0xff]
    %v346 = vld [vmem:[#allocation5 + $0x6c8] sm:$0xff]
    %v347 = vld [vmem:[#allocation5 + $0x6d0] sm:$0xff]
    %v348 = vld [vmem:[#allocation5 + $0x6d8] sm:$0xff]
    %v349 = vld [vmem:[#allocation5 + $0x6e0] sm:$0xff]
    %v350 = vld [vmem:[#allocation5 + $0x6e8] sm:$0xff]
    %v351 = vld [vmem:[#allocation5 + $0x6f0] sm:$0xff]
    %v352 = vld [vmem:[#allocation5 + $0x6f8] sm:$0xff]
    %v353 = vld [vmem:[#allocation5 + $0x700] sm:$0xff]
    %v354 = vld [vmem:[#allocation5 + $0x708] sm:$0xff]
    %v355 = vld [vmem:[#allocation5 + $0x710] sm:$0xff]
    %v356 = vld [vmem:[#allocation5 + $0x718] sm:$0xff]
    %v357 = vld [vmem:[#allocation5 + $0x720] sm:$0xff]
    %v358 = vld [vmem:[#allocation5 + $0x728] sm:$0xff]
    %v359 = vld [vmem:[#allocation5 + $0x730] sm:$0xff]
    %v360 = vld [vmem:[#allocation5 + $0x738] sm:$0xff]
    %v361 = vld [vmem:[#allocation5 + $0x740] sm:$0xff]
    %v362 = vld [vmem:[#allocation5 + $0x748] sm:$0xff]
    %v363 = vld [vmem:[#allocation5 + $0x750] sm:$0xff]
    %v364 = vld [vmem:[#allocation5 + $0x758] sm:$0xff]
    %v365 = vld [vmem:[#allocation5 + $0x760] sm:$0xff]
    %v366 = vld [vmem:[#allocation5 + $0x768] sm:$0xff]
    %v367 = vld [vmem:[#allocation5 + $0x770] sm:$0xff]
    %v368 = vld [vmem:[#allocation5 + $0x778] sm:$0xff]
    %v369 = vld [vmem:[#allocation5 + $0x780] sm:$0xff]
    %v370 = vld [vmem:[#allocation5 + $0x788] sm:$0xff]
    %v371 = vld [vmem:[#allocation5 + $0x790] sm:$0xff]
    %v372 = vld [vmem:[#allocation5 + $0x798] sm:$0xff]
    %v373 = vld [vmem:[#allocation5 + $0x7a0] sm:$0xff]
    %v374 = vld [vmem:[#allocation5 + $0x7a8] sm:$0xff]
    %v375 = vld [vmem:[#allocation5 + $0x7b0] sm:$0xff]
    %v376 = vld [vmem:[#allocation5 + $0x7b8] sm:$0xff]
    %v377 = vld [vmem:[#allocation5 + $0x7c0] sm:$0xff]
    %v378 = vld [vmem:[#allocation5 + $0x7c8] sm:$0xff]
    %v379 = vld [vmem:[#allocation5 + $0x7d0] sm:$0xff]
    %v380 = vld [vmem:[#allocation5 + $0x7d8] sm:$0xff]
    %v381 = vld [vmem:[#allocation5 + $0x7e0] sm:$0xff]
    %v382 = vld [vmem:[#allocation5 + $0x7e8] sm:$0xff]
    %v383 = vld [vmem:[#allocation5 + $0x7f0] sm:$0xff]
    %v384 = vld [vmem:[#allocation5 + $0x7f8] sm:$0xff]
    %v385 = vld [vmem:[#allocation5 + $0x800] sm:$0xff]
    %v386 = vld [vmem:[#allocation5 + $0x808] sm:$0xff]
    %v387 = vld [vmem:[#allocation5 + $0x810] sm:$0xff]
    %v388 = vld [vmem:[#allocation5 + $0x818] sm:$0xff]
    %v389 = vld [vmem:[#allocation5 + $0x820] sm:$0xff]
    %v390 = vld [vmem:[#allocation5 + $0x828] sm:$0xff]
    %v391 = vld [vmem:[#allocation5 + $0x830] sm:$0xff]
    %v392 = vld [vmem:[#allocation5 + $0x838] sm:$0xff]
    %v393 = vld [vmem:[#allocation5 + $0x840] sm:$0xff]
    %v394 = vld [vmem:[#allocation5 + $0x848] sm:$0xff]
    %v395 = vld [vmem:[#allocation5 + $0x850] sm:$0xff]
    %v396 = vld [vmem:[#allocation5 + $0x858] sm:$0xff]
    %v397 = vld [vmem:[#allocation5 + $0x860] sm:$0xff]
    %v398 = vld [vmem:[#allocation5 + $0x868] sm:$0xff]
    %v399 = vld [vmem:[#allocation5 + $0x870] sm:$0xff]
    %v400 = vld [vmem:[#allocation5 + $0x878] sm:$0xff]
    %v401 = vld [vmem:[#allocation5 + $0x880] sm:$0xff]
    %v402 = vld [vmem:[#allocation5 + $0x888] sm:$0xff]
    %v403 = vld [vmem:[#allocation5 + $0x890] sm:$0xff]
    %v404 = vld [vmem:[#allocation5 + $0x898] sm:$0xff]
    %v405 = vld [vmem:[#allocation5 + $0x8a0] sm:$0xff]
    %v406 = vld [vmem:[#allocation5 + $0x8a8] sm:$0xff]
    %v407 = vld [vmem:[#allocation5 + $0x8b0] sm:$0xff]
    %v408 = vld [vmem:[#allocation5 + $0x8b8] sm:$0xff]
    %v409 = vld [vmem:[#allocation5 + $0x8c0] sm:$0xff]
    %v410 = vld [vmem:[#allocation5 + $0x8c8] sm:$0xff]
    %v411 = vld [vmem:[#allocation5 + $0x8d0] sm:$0xff]
    %v412 = vld [vmem:[#allocation5 + $0x8d8] sm:$0xff]
    %v413 = vld [vmem:[#allocation5 + $0x8e0] sm:$0xff]
    %v414 = vld [vmem:[#allocation5 + $0x8e8] sm:$0xff]
    %v415 = vld [vmem:[#allocation5 + $0x8f0] sm:$0xff]
    %v416 = vld [vmem:[#allocation5 + $0x8f8] sm:$0xff]
    %v417 = vld [vmem:[#allocation5 + $0x900] sm:$0xff]
    %v418 = vld [vmem:[#allocation5 + $0x908] sm:$0xff]
    %v419 = vld [vmem:[#allocation5 + $0x910] sm:$0xff]
    %v420 = vld [vmem:[#allocation5 + $0x918] sm:$0xff]
    %v421 = vld [vmem:[#allocation5 + $0x920] sm:$0xff]
    %v422 = vld [vmem:[#allocation5 + $0x928] sm:$0xff]
    %v423 = vld [vmem:[#allocation5 + $0x930] sm:$0xff]
    %v424 = vld [vmem:[#allocation5 + $0x938] sm:$0xff]
    %v425 = vld [vmem:[#allocation5 + $0x940] sm:$0xff]
    %v426 = vld [vmem:[#allocation5 + $0x948] sm:$0xff]
    %v427 = vld [vmem:[#allocation5 + $0x950] sm:$0xff]
    %v428 = vld [vmem:[#allocation5 + $0x958] sm:$0xff]
    %v429 = vld [vmem:[#allocation5 + $0x960] sm:$0xff]
    %v430 = vld [vmem:[#allocation5 + $0x968] sm:$0xff]
    %v431 = vld [vmem:[#allocation5 + $0x970] sm:$0xff]
    %v432 = vld [vmem:[#allocation5 + $0x978] sm:$0xff]
    %v433 = vld [vmem:[#allocation5 + $0x980] sm:$0xff]
    %v434 = vld [vmem:[#allocation5 + $0x988] sm:$0xff]
    %v435 = vld [vmem:[#allocation5 + $0x990] sm:$0xff]
    %v436 = vld [vmem:[#allocation5 + $0x998] sm:$0xff]
    %v437 = vld [vmem:[#allocation5 + $0x9a0] sm:$0xff]
    %v438 = vld [vmem:[#allocation5 + $0x9a8] sm:$0xff]
    %v439 = vld [vmem:[#allocation5 + $0x9b0] sm:$0xff]
    %v440 = vld [vmem:[#allocation5 + $0x9b8] sm:$0xff]
    %v441 = vld [vmem:[#allocation5 + $0x9c0] sm:$0xff]
    %v442 = vld [vmem:[#allocation5 + $0x9c8] sm:$0xff]
    %v443 = vld [vmem:[#allocation5 + $0x9d0] sm:$0xff]
    %v444 = vld [vmem:[#allocation5 + $0x9d8] sm:$0xff]
    %v445 = vld [vmem:[#allocation5 + $0x9e0] sm:$0xff]
    %v446 = vld [vmem:[#allocation5 + $0x9e8] sm:$0xff]
    %v447 = vld [vmem:[#allocation5 + $0x9f0] sm:$0xff]
    %v448 = vld [vmem:[#allocation5 + $0x9f8] sm:$0xff]
    %v449 = vld [vmem:[#allocation5 + $0xa00] sm:$0xff]
    %v450 = vld [vmem:[#allocation5 + $0xa08] sm:$0xff]
    %v451 = vld [vmem:[#allocation5 + $0xa10] sm:$0xff]
    %v452 = vld [vmem:[#allocation5 + $0xa18] sm:$0xff]
    %v453 = vld [vmem:[#allocation5 + $0xa20] sm:$0xff]
    %v454 = vld [vmem:[#allocation5 + $0xa28] sm:$0xff]
    %v455 = vld [vmem:[#allocation5 + $0xa30] sm:$0xff]
    %v456 = vld [vmem:[#allocation5 + $0xa38] sm:$0xff]
    %v457 = vld [vmem:[#allocation5 + $0xa40] sm:$0xff]
    %v458 = vld [vmem:[#allocation5 + $0xa48] sm:$0xff]
    %v459 = vld [vmem:[#allocation5 + $0xa50] sm:$0xff]
    %v460 = vld [vmem:[#allocation5 + $0xa58] sm:$0xff]
    %v461 = vld [vmem:[#allocation5 + $0xa60] sm:$0xff]
    %v462 = vld [vmem:[#allocation5 + $0xa68] sm:$0xff]
    %v463 = vld [vmem:[#allocation5 + $0xa70] sm:$0xff]
    %v464 = vld [vmem:[#allocation5 + $0xa78] sm:$0xff]
    %v465 = vld [vmem:[#allocation5 + $0xa80] sm:$0xff]
    %v466 = vld [vmem:[#allocation5 + $0xa88] sm:$0xff]
    %v467 = vld [vmem:[#allocation5 + $0xa90] sm:$0xff]
    %v468 = vld [vmem:[#allocation5 + $0xa98] sm:$0xff]
    %v469 = vld [vmem:[#allocation5 + $0xaa0] sm:$0xff]
    %v470 = vld [vmem:[#allocation5 + $0xaa8] sm:$0xff]
    %v471 = vld [vmem:[#allocation5 + $0xab0] sm:$0xff]
    %v472 = vld [vmem:[#allocation5 + $0xab8] sm:$0xff]
    %v473 = vld [vmem:[#allocation5 + $0xac0] sm:$0xff]
    %v474 = vld [vmem:[#allocation5 + $0xac8] sm:$0xff]
    %v475 = vld [vmem:[#allocation5 + $0xad0] sm:$0xff]
    %v476 = vld [vmem:[#allocation5 + $0xad8] sm:$0xff]
    %v477 = vld [vmem:[#allocation5 + $0xae0] sm:$0xff]
    %v478 = vld [vmem:[#allocation5 + $0xae8] sm:$0xff]
    %v479 = vld [vmem:[#allocation5 + $0xaf0] sm:$0xff]
    %v480 = vld [vmem:[#allocation5 + $0xaf8] sm:$0xff]
    %v481 = vld [vmem:[#allocation5 + $0xb00] sm:$0xff]
    %v482 = vld [vmem:[#allocation5 + $0xb08] sm:$0xff]
    %v483 = vld [vmem:[#allocation5 + $0xb10] sm:$0xff]
    %v484 = vld [vmem:[#allocation5 + $0xb18] sm:$0xff]
    %v485 = vld [vmem:[#allocation5 + $0xb20] sm:$0xff]
    %v486 = vld [vmem:[#allocation5 + $0xb28] sm:$0xff]
    %v487 = vld [vmem:[#allocation5 + $0xb30] sm:$0xff]
    %v488 = vld [vmem:[#allocation5 + $0xb38] sm:$0xff]
    %v489 = vld [vmem:[#allocation5 + $0xb40] sm:$0xff]
    %v490 = vld [vmem:[#allocation5 + $0xb48] sm:$0xff]
    %v491 = vld [vmem:[#allocation5 + $0xb50] sm:$0xff]
    %v492 = vld [vmem:[#allocation5 + $0xb58] sm:$0xff]
    %v493 = vld [vmem:[#allocation5 + $0xb60] sm:$0xff]
    %v494 = vld [vmem:[#allocation5 + $0xb68] sm:$0xff]
    %v495 = vld [vmem:[#allocation5 + $0xb70] sm:$0xff]
    %v496 = vld [vmem:[#allocation5 + $0xb78] sm:$0xff]
    %v497 = vld [vmem:[#allocation5 + $0xb80] sm:$0xff]
    %v498 = vld [vmem:[#allocation5 + $0xb88] sm:$0xff]
    %v499 = vld [vmem:[#allocation5 + $0xb90] sm:$0xff]
    %v500 = vld [vmem:[#allocation5 + $0xb98] sm:$0xff]
    %v501 = vld [vmem:[#allocation5 + $0xba0] sm:$0xff]
    %v502 = vld [vmem:[#allocation5 + $0xba8] sm:$0xff]
    %v503 = vld [vmem:[#allocation5 + $0xbb0] sm:$0xff]
    %v504 = vld [vmem:[#allocation5 + $0xbb8] sm:$0xff]
    %v505 = vld [vmem:[#allocation5 + $0xbc0] sm:$0xff]
    %v506 = vld [vmem:[#allocation5 + $0xbc8] sm:$0xff]
    %v507 = vld [vmem:[#allocation5 + $0xbd0] sm:$0xff]
    %v508 = vld [vmem:[#allocation5 + $0xbd8] sm:$0xff]
    %v509 = vld [vmem:[#allocation5 + $0xbe0] sm:$0xff]
    %v510 = vld [vmem:[#allocation5 + $0xbe8] sm:$0xff]
    %v511 = vld [vmem:[#allocation5 + $0xbf0] sm:$0xff]
    %v512 = vld [vmem:[#allocation5 + $0xbf8] sm:$0xff]
    %v513 = vld [vmem:[#allocation5 + $0xc00] sm:$0xff]
    %v514 = vld [vmem:[#allocation5 + $0xc08] sm:$0xff]
    %v515 = vld [vmem:[#allocation5 + $0xc10] sm:$0xff]
    %v516 = vld [vmem:[#allocation5 + $0xc18] sm:$0xff]
    %v517 = vld [vmem:[#allocation5 + $0xc20] sm:$0xff]
    %v518 = vld [vmem:[#allocation5 + $0xc28] sm:$0xff]
    %v519 = vld [vmem:[#allocation5 + $0xc30] sm:$0xff]
    %v520 = vld [vmem:[#allocation5 + $0xc38] sm:$0xff]
    %v521 = vld [vmem:[#allocation5 + $0xc40] sm:$0xff]
    %v522 = vld [vmem:[#allocation5 + $0xc48] sm:$0xff]
    %v523 = vld [vmem:[#allocation5 + $0xc50] sm:$0xff]
    %v524 = vld [vmem:[#allocation5 + $0xc58] sm:$0xff]
    %v525 = vld [vmem:[#allocation7] sm:$0xff]
    %v527 = vlaneseq
    %v528 = vshrl.u32 %v527, 7
    %v529 = vsub.s32 0, %v528
    %v530 = vrot.slane %v525, %v529
    %v531 = vlaneseq
    %v532 = vshrl.u32 %v531, 7
    %v533 = vsub.s32 1, %v532
    %v534 = vrot.slane %v525, %v533
    %v535 = vlaneseq
    %v536 = vshrl.u32 %v535, 7
    %v537 = vsub.s32 2, %v536
    %v538 = vrot.slane %v525, %v537
    %v539 = vlaneseq
    %v540 = vshrl.u32 %v539, 7
    %v541 = vsub.s32 3, %v540
    %v542 = vrot.slane %v525, %v541
    %v543 = vlaneseq
    %v544 = vshrl.u32 %v543, 7
    %v545 = vsub.s32 4, %v544
    %v546 = vrot.slane %v525, %v545
    %v547 = vlaneseq
    %v548 = vshrl.u32 %v547, 7
    %v549 = vsub.s32 5, %v548
    %v550 = vrot.slane %v525, %v549
    %v551 = vlaneseq
    %v552 = vshrl.u32 %v551, 7
    %v553 = vsub.s32 6, %v552
    %v554 = vrot.slane %v525, %v553
    %v555 = vlaneseq
    %v556 = vshrl.u32 %v555, 7
    %v557 = vsub.s32 7, %v556
    %v558 = vrot.slane %v525, %v557
    %v963 = vunpack.c.l.b16 %v129
    %v964 = vunpack.c.h.b16 %v129
    %v965 = vunpack.c.l.b16 %v130
    %v966 = vunpack.c.h.b16 %v130
    %v967 = vunpack.c.l.b16 %v131
    %v968 = vunpack.c.h.b16 %v131
    %v969 = vunpack.c.l.b16 %v132
    %v970 = vunpack.c.h.b16 %v132
    %v971 = vunpack.c.l.b16 %v133
    %v972 = vunpack.c.h.b16 %v133
    %v973 = vunpack.c.l.b16 %v134
    %v974 = vunpack.c.h.b16 %v134
    %v975 = vunpack.c.l.b16 %v135
    %v976 = vunpack.c.h.b16 %v135
    %v977 = vunpack.c.l.b16 %v136
    %v978 = vunpack.c.h.b16 %v136
    %v979 = vunpack.c.l.b16 %v137
    %v980 = vunpack.c.h.b16 %v137
    %v981 = vunpack.c.l.b16 %v138
    %v982 = vunpack.c.h.b16 %v138
    %v983 = vunpack.c.l.b16 %v139
    %v984 = vunpack.c.h.b16 %v139
    %v985 = vunpack.c.l.b16 %v140
    %v986 = vunpack.c.h.b16 %v140
    %v987 = vunpack.c.l.b16 %v141
    %v988 = vunpack.c.h.b16 %v141
    %v989 = vunpack.c.l.b16 %v142
    %v990 = vunpack.c.h.b16 %v142
    %v991 = vunpack.c.l.b16 %v143
    %v992 = vunpack.c.h.b16 %v143
    %v993 = vunpack.c.l.b16 %v144
    %v994 = vunpack.c.h.b16 %v144
    %v995 = vunpack.c.l.b16 %v145
    %v996 = vunpack.c.h.b16 %v145
    %v997 = vunpack.c.l.b16 %v146
    %v998 = vunpack.c.h.b16 %v146
    %v999 = vunpack.c.l.b16 %v147
    %v1000 = vunpack.c.h.b16 %v147
    %v1001 = vunpack.c.l.b16 %v148
    %v1002 = vunpack.c.h.b16 %v148
    %v1003 = vunpack.c.l.b16 %v149
    %v1004 = vunpack.c.h.b16 %v149
    %v1005 = vunpack.c.l.b16 %v150
    %v1006 = vunpack.c.h.b16 %v150
    %v1007 = vunpack.c.l.b16 %v151
    %v1008 = vunpack.c.h.b16 %v151
    %v1009 = vunpack.c.l.b16 %v152
    %v1010 = vunpack.c.h.b16 %v152
    %v1011 = vunpack.c.l.b16 %v153
    %v1012 = vunpack.c.h.b16 %v153
    %v1013 = vunpack.c.l.b16 %v154
    %v1014 = vunpack.c.h.b16 %v154
    %v1015 = vunpack.c.l.b16 %v155
    %v1016 = vunpack.c.h.b16 %v155
    %v1017 = vunpack.c.l.b16 %v156
    %v1018 = vunpack.c.h.b16 %v156
    %v1019 = vunpack.c.l.b16 %v157
    %v1020 = vunpack.c.h.b16 %v157
    %v1021 = vunpack.c.l.b16 %v158
    %v1022 = vunpack.c.h.b16 %v158
    %v1023 = vunpack.c.l.b16 %v159
    %v1024 = vunpack.c.h.b16 %v159
    %v1025 = vunpack.c.l.b16 %v160
    %v1026 = vunpack.c.h.b16 %v160
    %v1027 = vunpack.c.l.b16 %v161
    %v1028 = vunpack.c.h.b16 %v161
    %v1029 = vunpack.c.l.b16 %v162
    %v1030 = vunpack.c.h.b16 %v162
    %v1031 = vunpack.c.l.b16 %v163
    %v1032 = vunpack.c.h.b16 %v163
    %v1033 = vunpack.c.l.b16 %v164
    %v1034 = vunpack.c.h.b16 %v164
    %v1035 = vunpack.c.l.b16 %v165
    %v1036 = vunpack.c.h.b16 %v165
    %v1037 = vunpack.c.l.b16 %v166
    %v1038 = vunpack.c.h.b16 %v166
    %v1039 = vunpack.c.l.b16 %v167
    %v1040 = vunpack.c.h.b16 %v167
    %v1041 = vunpack.c.l.b16 %v168
    %v1042 = vunpack.c.h.b16 %v168
    %v1043 = vunpack.c.l.b16 %v169
    %v1044 = vunpack.c.h.b16 %v169
    %v1045 = vunpack.c.l.b16 %v170
    %v1046 = vunpack.c.h.b16 %v170
    %v1047 = vunpack.c.l.b16 %v171
    %v1048 = vunpack.c.h.b16 %v171
    %v1049 = vunpack.c.l.b16 %v172
    %v1050 = vunpack.c.h.b16 %v172
    %v1051 = vunpack.c.l.b16 %v173
    %v1052 = vunpack.c.h.b16 %v173
    %v1053 = vunpack.c.l.b16 %v174
    %v1054 = vunpack.c.h.b16 %v174
    %v1055 = vunpack.c.l.b16 %v175
    %v1056 = vunpack.c.h.b16 %v175
    %v1057 = vunpack.c.l.b16 %v176
    %v1058 = vunpack.c.h.b16 %v176
    %v1059 = vunpack.c.l.b16 %v177
    %v1060 = vunpack.c.h.b16 %v177
    %v1061 = vunpack.c.l.b16 %v178
    %v1062 = vunpack.c.h.b16 %v178
    %v1063 = vunpack.c.l.b16 %v179
    %v1064 = vunpack.c.h.b16 %v179
    %v1065 = vunpack.c.l.b16 %v180
    %v1066 = vunpack.c.h.b16 %v180
    %v1067 = vunpack.c.l.b16 %v181
    %v1068 = vunpack.c.h.b16 %v181
    %v1069 = vunpack.c.l.b16 %v182
    %v1070 = vunpack.c.h.b16 %v182
    %v1071 = vunpack.c.l.b16 %v183
    %v1072 = vunpack.c.h.b16 %v183
    %v1073 = vunpack.c.l.b16 %v184
    %v1074 = vunpack.c.h.b16 %v184
    %v1075 = vunpack.c.l.b16 %v185
    %v1076 = vunpack.c.h.b16 %v185
    %v1077 = vunpack.c.l.b16 %v186
    %v1078 = vunpack.c.h.b16 %v186
    %v1079 = vunpack.c.l.b16 %v187
    %v1080 = vunpack.c.h.b16 %v187
    %v1081 = vunpack.c.l.b16 %v188
    %v1082 = vunpack.c.h.b16 %v188
    %v1083 = vunpack.c.l.b16 %v189
    %v1084 = vunpack.c.h.b16 %v189
    %v1085 = vunpack.c.l.b16 %v190
    %v1086 = vunpack.c.h.b16 %v190
    %v1087 = vunpack.c.l.b16 %v191
    %v1088 = vunpack.c.h.b16 %v191
    %v1089 = vunpack.c.l.b16 %v192
    %v1090 = vunpack.c.h.b16 %v192
    %v1091 = vunpack.c.l.b16 %v193
    %v1092 = vunpack.c.h.b16 %v193
    %v1093 = vunpack.c.l.b16 %v194
    %v1094 = vunpack.c.h.b16 %v194
    %v1095 = vunpack.c.l.b16 %v195
    %v1096 = vunpack.c.h.b16 %v195
    %v1097 = vunpack.c.l.b16 %v196
    %v1098 = vunpack.c.h.b16 %v196
    %v1099 = vunpack.c.l.b16 %v197
    %v1100 = vunpack.c.h.b16 %v197
    %v1101 = vunpack.c.l.b16 %v198
    %v1102 = vunpack.c.h.b16 %v198
    %v1103 = vunpack.c.l.b16 %v199
    %v1104 = vunpack.c.h.b16 %v199
    %v1105 = vunpack.c.l.b16 %v200
    %v1106 = vunpack.c.h.b16 %v200
    %v1107 = vunpack.c.l.b16 %v201
    %v1108 = vunpack.c.h.b16 %v201
    %v1109 = vunpack.c.l.b16 %v202
    %v1110 = vunpack.c.h.b16 %v202
    %v1111 = vunpack.c.l.b16 %v203
    %v1112 = vunpack.c.h.b16 %v203
    %v1113 = vunpack.c.l.b16 %v204
    %v1114 = vunpack.c.h.b16 %v204
    %v1115 = vunpack.c.l.b16 %v205
    %v1116 = vunpack.c.h.b16 %v205
    %v1117 = vunpack.c.l.b16 %v206
    %v1118 = vunpack.c.h.b16 %v206
    %v1119 = vunpack.c.l.b16 %v207
    %v1120 = vunpack.c.h.b16 %v207
    %v1121 = vunpack.c.l.b16 %v208
    %v1122 = vunpack.c.h.b16 %v208
    %v1123 = vunpack.c.l.b16 %v209
    %v1124 = vunpack.c.h.b16 %v209
    %v1125 = vunpack.c.l.b16 %v210
    %v1126 = vunpack.c.h.b16 %v210
    %v1127 = vunpack.c.l.b16 %v211
    %v1128 = vunpack.c.h.b16 %v211
    %v1129 = vunpack.c.l.b16 %v212
    %v1130 = vunpack.c.h.b16 %v212
    %v1131 = vunpack.c.l.b16 %v213
    %v1132 = vunpack.c.h.b16 %v213
    %v1133 = vunpack.c.l.b16 %v214
    %v1134 = vunpack.c.h.b16 %v214
    %v1135 = vunpack.c.l.b16 %v215
    %v1136 = vunpack.c.h.b16 %v215
    %v1137 = vunpack.c.l.b16 %v216
    %v1138 = vunpack.c.h.b16 %v216
    %v1139 = vunpack.c.l.b16 %v217
    %v1140 = vunpack.c.h.b16 %v217
    %v1141 = vunpack.c.l.b16 %v218
    %v1142 = vunpack.c.h.b16 %v218
    %v1143 = vunpack.c.l.b16 %v219
    %v1144 = vunpack.c.h.b16 %v219
    %v1145 = vunpack.c.l.b16 %v220
    %v1146 = vunpack.c.h.b16 %v220
    %v1147 = vunpack.c.l.b16 %v221
    %v1148 = vunpack.c.h.b16 %v221
    %v1149 = vunpack.c.l.b16 %v222
    %v1150 = vunpack.c.h.b16 %v222
    %v1151 = vunpack.c.l.b16 %v223
    %v1152 = vunpack.c.h.b16 %v223
    %v1153 = vunpack.c.l.b16 %v224
    %v1154 = vunpack.c.h.b16 %v224
    %v1155 = vunpack.c.l.b16 %v225
    %v1156 = vunpack.c.h.b16 %v225
    %v1157 = vunpack.c.l.b16 %v226
    %v1158 = vunpack.c.h.b16 %v226
    %v1159 = vunpack.c.l.b16 %v227
    %v1160 = vunpack.c.h.b16 %v227
    %v1161 = vunpack.c.l.b16 %v228
    %v1162 = vunpack.c.h.b16 %v228
    %v1163 = vunpack.c.l.b16 %v229
    %v1164 = vunpack.c.h.b16 %v229
    %v1165 = vunpack.c.l.b16 %v230
    %v1166 = vunpack.c.h.b16 %v230
    %v1167 = vunpack.c.l.b16 %v231
    %v1168 = vunpack.c.h.b16 %v231
    %v1169 = vunpack.c.l.b16 %v232
    %v1170 = vunpack.c.h.b16 %v232
    %v1171 = vunpack.c.l.b16 %v233
    %v1172 = vunpack.c.h.b16 %v233
    %v1173 = vunpack.c.l.b16 %v234
    %v1174 = vunpack.c.h.b16 %v234
    %v1175 = vunpack.c.l.b16 %v235
    %v1176 = vunpack.c.h.b16 %v235
    %v1177 = vunpack.c.l.b16 %v236
    %v1178 = vunpack.c.h.b16 %v236
    %v1179 = vunpack.c.l.b16 %v237
    %v1180 = vunpack.c.h.b16 %v237
    %v1181 = vunpack.c.l.b16 %v238
    %v1182 = vunpack.c.h.b16 %v238
    %v1183 = vunpack.c.l.b16 %v239
    %v1184 = vunpack.c.h.b16 %v239
    %v1185 = vunpack.c.l.b16 %v240
    %v1186 = vunpack.c.h.b16 %v240
    %v1187 = vunpack.c.l.b16 %v241
    %v1188 = vunpack.c.h.b16 %v241
    %v1189 = vunpack.c.l.b16 %v242
    %v1190 = vunpack.c.h.b16 %v242
    %v1191 = vunpack.c.l.b16 %v243
    %v1192 = vunpack.c.h.b16 %v243
    %v1193 = vunpack.c.l.b16 %v244
    %v1194 = vunpack.c.h.b16 %v244
    %v1195 = vunpack.c.l.b16 %v245
    %v1196 = vunpack.c.h.b16 %v245
    %v1197 = vunpack.c.l.b16 %v246
    %v1198 = vunpack.c.h.b16 %v246
    %v1199 = vunpack.c.l.b16 %v247
    %v1200 = vunpack.c.h.b16 %v247
    %v1201 = vunpack.c.l.b16 %v248
    %v1202 = vunpack.c.h.b16 %v248
    %v1203 = vunpack.c.l.b16 %v249
    %v1204 = vunpack.c.h.b16 %v249
    %v1205 = vunpack.c.l.b16 %v250
    %v1206 = vunpack.c.h.b16 %v250
    %v1207 = vunpack.c.l.b16 %v251
    %v1208 = vunpack.c.h.b16 %v251
    %v1209 = vunpack.c.l.b16 %v252
    %v1210 = vunpack.c.h.b16 %v252
    %v1211 = vunpack.c.l.b16 %v253
    %v1212 = vunpack.c.h.b16 %v253
    %v1213 = vunpack.c.l.b16 %v254
    %v1214 = vunpack.c.h.b16 %v254
    %v1215 = vunpack.c.l.b16 %v255
    %v1216 = vunpack.c.h.b16 %v255
    %v1217 = vunpack.c.l.b16 %v256
    %v1218 = vunpack.c.h.b16 %v256
    %v1219 = vunpack.c.l.b16 %v257
    %v1220 = vunpack.c.h.b16 %v257
    %v1221 = vunpack.c.l.b16 %v258
    %v1222 = vunpack.c.h.b16 %v258
    %v1223 = vunpack.c.l.b16 %v259
    %v1224 = vunpack.c.h.b16 %v259
    %v1225 = vunpack.c.l.b16 %v260
    %v1226 = vunpack.c.h.b16 %v260
    %v1227 = vunpack.c.l.b16 %v261
    %v1228 = vunpack.c.h.b16 %v261
    %v1229 = vunpack.c.l.b16 %v262
    %v1230 = vunpack.c.h.b16 %v262
    %v1231 = vunpack.c.l.b16 %v263
    %v1232 = vunpack.c.h.b16 %v263
    %v1233 = vunpack.c.l.b16 %v264
    %v1234 = vunpack.c.h.b16 %v264
    %v1235 = vunpack.c.l.b16 %v265
    %v1236 = vunpack.c.h.b16 %v265
    %v1237 = vunpack.c.l.b16 %v266
    %v1238 = vunpack.c.h.b16 %v266
    %v1239 = vunpack.c.l.b16 %v267
    %v1240 = vunpack.c.h.b16 %v267
    %v1241 = vunpack.c.l.b16 %v268
    %v1242 = vunpack.c.h.b16 %v268
    %v1243 = vunpack.c.l.b16 %v269
    %v1244 = vunpack.c.h.b16 %v269
    %v1245 = vunpack.c.l.b16 %v270
    %v1246 = vunpack.c.h.b16 %v270
    %v1247 = vunpack.c.l.b16 %v271
    %v1248 = vunpack.c.h.b16 %v271
    %v1249 = vunpack.c.l.b16 %v272
    %v1250 = vunpack.c.h.b16 %v272
    %v1251 = vunpack.c.l.b16 %v273
    %v1252 = vunpack.c.h.b16 %v273
    %v1253 = vunpack.c.l.b16 %v274
    %v1254 = vunpack.c.h.b16 %v274
    %v1255 = vunpack.c.l.b16 %v275
    %v1256 = vunpack.c.h.b16 %v275
    %v1257 = vunpack.c.l.b16 %v276
    %v1258 = vunpack.c.h.b16 %v276
    %v1259 = vunpack.c.l.b16 %v277
    %v1260 = vunpack.c.h.b16 %v277
    %v1261 = vunpack.c.l.b16 %v278
    %v1262 = vunpack.c.h.b16 %v278
    %v1263 = vunpack.c.l.b16 %v279
    %v1264 = vunpack.c.h.b16 %v279
    %v1265 = vunpack.c.l.b16 %v280
    %v1266 = vunpack.c.h.b16 %v280
    %v1267 = vunpack.c.l.b16 %v281
    %v1268 = vunpack.c.h.b16 %v281
    %v1269 = vunpack.c.l.b16 %v282
    %v1270 = vunpack.c.h.b16 %v282
    %v1271 = vunpack.c.l.b16 %v283
    %v1272 = vunpack.c.h.b16 %v283
    %v1273 = vunpack.c.l.b16 %v284
    %v1274 = vunpack.c.h.b16 %v284
    %v1275 = vunpack.c.l.b16 %v285
    %v1276 = vunpack.c.h.b16 %v285
    %v1277 = vunpack.c.l.b16 %v286
    %v1278 = vunpack.c.h.b16 %v286
    %v1279 = vunpack.c.l.b16 %v287
    %v1280 = vunpack.c.h.b16 %v287
    %v1281 = vunpack.c.l.b16 %v288
    %v1282 = vunpack.c.h.b16 %v288
    %v1283 = vunpack.c.l.b16 %v289
    %v1284 = vunpack.c.h.b16 %v289
    %v1285 = vunpack.c.l.b16 %v290
    %v1286 = vunpack.c.h.b16 %v290
    %v1287 = vunpack.c.l.b16 %v291
    %v1288 = vunpack.c.h.b16 %v291
    %v1289 = vunpack.c.l.b16 %v292
    %v1290 = vunpack.c.h.b16 %v292
    %v1291 = vunpack.c.l.b16 %v293
    %v1292 = vunpack.c.h.b16 %v293
    %v1293 = vunpack.c.l.b16 %v294
    %v1294 = vunpack.c.h.b16 %v294
    %v1295 = vunpack.c.l.b16 %v295
    %v1296 = vunpack.c.h.b16 %v295
    %v1297 = vunpack.c.l.b16 %v296
    %v1298 = vunpack.c.h.b16 %v296
    %v1299 = vunpack.c.l.b16 %v297
    %v1300 = vunpack.c.h.b16 %v297
    %v1301 = vunpack.c.l.b16 %v298
    %v1302 = vunpack.c.h.b16 %v298
    %v1303 = vunpack.c.l.b16 %v299
    %v1304 = vunpack.c.h.b16 %v299
    %v1305 = vunpack.c.l.b16 %v300
    %v1306 = vunpack.c.h.b16 %v300
    %v1307 = vunpack.c.l.b16 %v301
    %v1308 = vunpack.c.h.b16 %v301
    %v1309 = vunpack.c.l.b16 %v302
    %v1310 = vunpack.c.h.b16 %v302
    %v1311 = vunpack.c.l.b16 %v303
    %v1312 = vunpack.c.h.b16 %v303
    %v1313 = vunpack.c.l.b16 %v304
    %v1314 = vunpack.c.h.b16 %v304
    %v1315 = vunpack.c.l.b16 %v305
    %v1316 = vunpack.c.h.b16 %v305
    %v1317 = vunpack.c.l.b16 %v306
    %v1318 = vunpack.c.h.b16 %v306
    %v1319 = vunpack.c.l.b16 %v307
    %v1320 = vunpack.c.h.b16 %v307
    %v1321 = vunpack.c.l.b16 %v308
    %v1322 = vunpack.c.h.b16 %v308
    %v1323 = vunpack.c.l.b16 %v309
    %v1324 = vunpack.c.h.b16 %v309
    %v1325 = vunpack.c.l.b16 %v310
    %v1326 = vunpack.c.h.b16 %v310
    %v1327 = vunpack.c.l.b16 %v311
    %v1328 = vunpack.c.h.b16 %v311
    %v1329 = vunpack.c.l.b16 %v312
    %v1330 = vunpack.c.h.b16 %v312
    %v1331 = vunpack.c.l.b16 %v313
    %v1332 = vunpack.c.h.b16 %v313
    %v1333 = vunpack.c.l.b16 %v314
    %v1334 = vunpack.c.h.b16 %v314
    %v1335 = vunpack.c.l.b16 %v315
    %v1336 = vunpack.c.h.b16 %v315
    %v1337 = vunpack.c.l.b16 %v316
    %v1338 = vunpack.c.h.b16 %v316
    %v1339 = vunpack.c.l.b16 %v317
    %v1340 = vunpack.c.h.b16 %v317
    %v1341 = vunpack.c.l.b16 %v318
    %v1342 = vunpack.c.h.b16 %v318
    %v1343 = vunpack.c.l.b16 %v319
    %v1344 = vunpack.c.h.b16 %v319
    %v1345 = vunpack.c.l.b16 %v320
    %v1346 = vunpack.c.h.b16 %v320
    %v1347 = vunpack.c.l.b16 %v321
    %v1348 = vunpack.c.h.b16 %v321
    %v1349 = vunpack.c.l.b16 %v322
    %v1350 = vunpack.c.h.b16 %v322
    %v1351 = vunpack.c.l.b16 %v323
    %v1352 = vunpack.c.h.b16 %v323
    %v1353 = vunpack.c.l.b16 %v324
    %v1354 = vunpack.c.h.b16 %v324
    %v1355 = vunpack.c.l.b16 %v325
    %v1356 = vunpack.c.h.b16 %v325
    %v1357 = vunpack.c.l.b16 %v326
    %v1358 = vunpack.c.h.b16 %v326
    %v1359 = vunpack.c.l.b16 %v327
    %v1360 = vunpack.c.h.b16 %v327
    %v1361 = vunpack.c.l.b16 %v328
    %v1362 = vunpack.c.h.b16 %v328
    %v1363 = vunpack.c.l.b16 %v329
    %v1364 = vunpack.c.h.b16 %v329
    %v1365 = vunpack.c.l.b16 %v330
    %v1366 = vunpack.c.h.b16 %v330
    %v1367 = vunpack.c.l.b16 %v331
    %v1368 = vunpack.c.h.b16 %v331
    %v1369 = vunpack.c.l.b16 %v332
    %v1370 = vunpack.c.h.b16 %v332
    %v1371 = vunpack.c.l.b16 %v333
    %v1372 = vunpack.c.h.b16 %v333
    %v1373 = vunpack.c.l.b16 %v334
    %v1374 = vunpack.c.h.b16 %v334
    %v1375 = vunpack.c.l.b16 %v335
    %v1376 = vunpack.c.h.b16 %v335
    %v1377 = vunpack.c.l.b16 %v336
    %v1378 = vunpack.c.h.b16 %v336
    %v1379 = vunpack.c.l.b16 %v337
    %v1380 = vunpack.c.h.b16 %v337
    %v1381 = vunpack.c.l.b16 %v338
    %v1382 = vunpack.c.h.b16 %v338
    %v1383 = vunpack.c.l.b16 %v339
    %v1384 = vunpack.c.h.b16 %v339
    %v1385 = vunpack.c.l.b16 %v340
    %v1386 = vunpack.c.h.b16 %v340
    %v1387 = vunpack.c.l.b16 %v341
    %v1388 = vunpack.c.h.b16 %v341
    %v1389 = vunpack.c.l.b16 %v342
    %v1390 = vunpack.c.h.b16 %v342
    %v1391 = vunpack.c.l.b16 %v343
    %v1392 = vunpack.c.h.b16 %v343
    %v1393 = vunpack.c.l.b16 %v344
    %v1394 = vunpack.c.h.b16 %v344
    %v1395 = vunpack.c.l.b16 %v345
    %v1396 = vunpack.c.h.b16 %v345
    %v1397 = vunpack.c.l.b16 %v346
    %v1398 = vunpack.c.h.b16 %v346
    %v1399 = vunpack.c.l.b16 %v347
    %v1400 = vunpack.c.h.b16 %v347
    %v1401 = vunpack.c.l.b16 %v348
    %v1402 = vunpack.c.h.b16 %v348
    %v1403 = vunpack.c.l.b16 %v349
    %v1404 = vunpack.c.h.b16 %v349
    %v1405 = vunpack.c.l.b16 %v350
    %v1406 = vunpack.c.h.b16 %v350
    %v1407 = vunpack.c.l.b16 %v351
    %v1408 = vunpack.c.h.b16 %v351
    %v1409 = vunpack.c.l.b16 %v352
    %v1410 = vunpack.c.h.b16 %v352
    %v1411 = vunpack.c.l.b16 %v353
    %v1412 = vunpack.c.h.b16 %v353
    %v1413 = vunpack.c.l.b16 %v354
    %v1414 = vunpack.c.h.b16 %v354
    %v1415 = vunpack.c.l.b16 %v355
    %v1416 = vunpack.c.h.b16 %v355
    %v1417 = vunpack.c.l.b16 %v356
    %v1418 = vunpack.c.h.b16 %v356
    %v1419 = vunpack.c.l.b16 %v357
    %v1420 = vunpack.c.h.b16 %v357
    %v1421 = vunpack.c.l.b16 %v358
    %v1422 = vunpack.c.h.b16 %v358
    %v1423 = vunpack.c.l.b16 %v359
    %v1424 = vunpack.c.h.b16 %v359
    %v1425 = vunpack.c.l.b16 %v360
    %v1426 = vunpack.c.h.b16 %v360
    %v1427 = vunpack.c.l.b16 %v361
    %v1428 = vunpack.c.h.b16 %v361
    %v1429 = vunpack.c.l.b16 %v362
    %v1430 = vunpack.c.h.b16 %v362
    %v1431 = vunpack.c.l.b16 %v363
    %v1432 = vunpack.c.h.b16 %v363
    %v1433 = vunpack.c.l.b16 %v364
    %v1434 = vunpack.c.h.b16 %v364
    %v1435 = vunpack.c.l.b16 %v365
    %v1436 = vunpack.c.h.b16 %v365
    %v1437 = vunpack.c.l.b16 %v366
    %v1438 = vunpack.c.h.b16 %v366
    %v1439 = vunpack.c.l.b16 %v367
    %v1440 = vunpack.c.h.b16 %v367
    %v1441 = vunpack.c.l.b16 %v368
    %v1442 = vunpack.c.h.b16 %v368
    %v1443 = vunpack.c.l.b16 %v369
    %v1444 = vunpack.c.h.b16 %v369
    %v1445 = vunpack.c.l.b16 %v370
    %v1446 = vunpack.c.h.b16 %v370
    %v1447 = vunpack.c.l.b16 %v371
    %v1448 = vunpack.c.h.b16 %v371
    %v1449 = vunpack.c.l.b16 %v372
    %v1450 = vunpack.c.h.b16 %v372
    %v1451 = vunpack.c.l.b16 %v373
    %v1452 = vunpack.c.h.b16 %v373
    %v1453 = vunpack.c.l.b16 %v374
    %v1454 = vunpack.c.h.b16 %v374
    %v1455 = vunpack.c.l.b16 %v375
    %v1456 = vunpack.c.h.b16 %v375
    %v1457 = vunpack.c.l.b16 %v376
    %v1458 = vunpack.c.h.b16 %v376
    %v1459 = vunpack.c.l.b16 %v377
    %v1460 = vunpack.c.h.b16 %v377
    %v1461 = vunpack.c.l.b16 %v378
    %v1462 = vunpack.c.h.b16 %v378
    %v1463 = vunpack.c.l.b16 %v379
    %v1464 = vunpack.c.h.b16 %v379
    %v1465 = vunpack.c.l.b16 %v380
    %v1466 = vunpack.c.h.b16 %v380
    %v1467 = vunpack.c.l.b16 %v381
    %v1468 = vunpack.c.h.b16 %v381
    %v1469 = vunpack.c.l.b16 %v382
    %v1470 = vunpack.c.h.b16 %v382
    %v1471 = vunpack.c.l.b16 %v383
    %v1472 = vunpack.c.h.b16 %v383
    %v1473 = vunpack.c.l.b16 %v384
    %v1474 = vunpack.c.h.b16 %v384
    %v1475 = vunpack.c.l.b16 %v385
    %v1476 = vunpack.c.h.b16 %v385
    %v1477 = vunpack.c.l.b16 %v386
    %v1478 = vunpack.c.h.b16 %v386
    %v1479 = vunpack.c.l.b16 %v387
    %v1480 = vunpack.c.h.b16 %v387
    %v1481 = vunpack.c.l.b16 %v388
    %v1482 = vunpack.c.h.b16 %v388
    %v1483 = vunpack.c.l.b16 %v389
    %v1484 = vunpack.c.h.b16 %v389
    %v1485 = vunpack.c.l.b16 %v390
    %v1486 = vunpack.c.h.b16 %v390
    %v1487 = vunpack.c.l.b16 %v391
    %v1488 = vunpack.c.h.b16 %v391
    %v1489 = vunpack.c.l.b16 %v392
    %v1490 = vunpack.c.h.b16 %v392
    %v1491 = vunpack.c.l.b16 %v393
    %v1492 = vunpack.c.h.b16 %v393
    %v1493 = vunpack.c.l.b16 %v394
    %v1494 = vunpack.c.h.b16 %v394
    %v1495 = vunpack.c.l.b16 %v395
    %v1496 = vunpack.c.h.b16 %v395
    %v1497 = vunpack.c.l.b16 %v396
    %v1498 = vunpack.c.h.b16 %v396
    %v1499 = vunpack.c.l.b16 %v397
    %v1500 = vunpack.c.h.b16 %v397
    %v1501 = vunpack.c.l.b16 %v398
    %v1502 = vunpack.c.h.b16 %v398
    %v1503 = vunpack.c.l.b16 %v399
    %v1504 = vunpack.c.h.b16 %v399
    %v1505 = vunpack.c.l.b16 %v400
    %v1506 = vunpack.c.h.b16 %v400
    %v1507 = vunpack.c.l.b16 %v401
    %v1508 = vunpack.c.h.b16 %v401
    %v1509 = vunpack.c.l.b16 %v402
    %v1510 = vunpack.c.h.b16 %v402
    %v1511 = vunpack.c.l.b16 %v403
    %v1512 = vunpack.c.h.b16 %v403
    %v1513 = vunpack.c.l.b16 %v404
    %v1514 = vunpack.c.h.b16 %v404
    %v1515 = vunpack.c.l.b16 %v405
    %v1516 = vunpack.c.h.b16 %v405
    %v1517 = vunpack.c.l.b16 %v406
    %v1518 = vunpack.c.h.b16 %v406
    %v1519 = vunpack.c.l.b16 %v407
    %v1520 = vunpack.c.h.b16 %v407
    %v1521 = vunpack.c.l.b16 %v408
    %v1522 = vunpack.c.h.b16 %v408
    %v1523 = vunpack.c.l.b16 %v409
    %v1524 = vunpack.c.h.b16 %v409
    %v1525 = vunpack.c.l.b16 %v410
    %v1526 = vunpack.c.h.b16 %v410
    %v1527 = vunpack.c.l.b16 %v411
    %v1528 = vunpack.c.h.b16 %v411
    %v1529 = vunpack.c.l.b16 %v412
    %v1530 = vunpack.c.h.b16 %v412
    %v1531 = vunpack.c.l.b16 %v413
    %v1532 = vunpack.c.h.b16 %v413
    %v1533 = vunpack.c.l.b16 %v414
    %v1534 = vunpack.c.h.b16 %v414
    %v1535 = vunpack.c.l.b16 %v415
    %v1536 = vunpack.c.h.b16 %v415
    %v1537 = vunpack.c.l.b16 %v416
    %v1538 = vunpack.c.h.b16 %v416
    %v1539 = vunpack.c.l.b16 %v417
    %v1540 = vunpack.c.h.b16 %v417
    %v1541 = vunpack.c.l.b16 %v418
    %v1542 = vunpack.c.h.b16 %v418
    %v1543 = vunpack.c.l.b16 %v419
    %v1544 = vunpack.c.h.b16 %v419
    %v1545 = vunpack.c.l.b16 %v420
    %v1546 = vunpack.c.h.b16 %v420
    %v1547 = vunpack.c.l.b16 %v421
    %v1548 = vunpack.c.h.b16 %v421
    %v1549 = vunpack.c.l.b16 %v422
    %v1550 = vunpack.c.h.b16 %v422
    %v1551 = vunpack.c.l.b16 %v423
    %v1552 = vunpack.c.h.b16 %v423
    %v1553 = vunpack.c.l.b16 %v424
    %v1554 = vunpack.c.h.b16 %v424
    %v1555 = vunpack.c.l.b16 %v425
    %v1556 = vunpack.c.h.b16 %v425
    %v1557 = vunpack.c.l.b16 %v426
    %v1558 = vunpack.c.h.b16 %v426
    %v1559 = vunpack.c.l.b16 %v427
    %v1560 = vunpack.c.h.b16 %v427
    %v1561 = vunpack.c.l.b16 %v428
    %v1562 = vunpack.c.h.b16 %v428
    %v1563 = vunpack.c.l.b16 %v429
    %v1564 = vunpack.c.h.b16 %v429
    %v1565 = vunpack.c.l.b16 %v430
    %v1566 = vunpack.c.h.b16 %v430
    %v1567 = vunpack.c.l.b16 %v431
    %v1568 = vunpack.c.h.b16 %v431
    %v1569 = vunpack.c.l.b16 %v432
    %v1570 = vunpack.c.h.b16 %v432
    %v1571 = vunpack.c.l.b16 %v433
    %v1572 = vunpack.c.h.b16 %v433
    %v1573 = vunpack.c.l.b16 %v434
    %v1574 = vunpack.c.h.b16 %v434
    %v1575 = vunpack.c.l.b16 %v435
    %v1576 = vunpack.c.h.b16 %v435
    %v1577 = vunpack.c.l.b16 %v436
    %v1578 = vunpack.c.h.b16 %v436
    %v1579 = vunpack.c.l.b16 %v437
    %v1580 = vunpack.c.h.b16 %v437
    %v1581 = vunpack.c.l.b16 %v438
    %v1582 = vunpack.c.h.b16 %v438
    %v1583 = vunpack.c.l.b16 %v439
    %v1584 = vunpack.c.h.b16 %v439
    %v1585 = vunpack.c.l.b16 %v440
    %v1586 = vunpack.c.h.b16 %v440
    %v1587 = vunpack.c.l.b16 %v441
    %v1588 = vunpack.c.h.b16 %v441
    %v1589 = vunpack.c.l.b16 %v442
    %v1590 = vunpack.c.h.b16 %v442
    %v1591 = vunpack.c.l.b16 %v443
    %v1592 = vunpack.c.h.b16 %v443
    %v1593 = vunpack.c.l.b16 %v444
    %v1594 = vunpack.c.h.b16 %v444
    %v1595 = vunpack.c.l.b16 %v445
    %v1596 = vunpack.c.h.b16 %v445
    %v1597 = vunpack.c.l.b16 %v446
    %v1598 = vunpack.c.h.b16 %v446
    %v1599 = vunpack.c.l.b16 %v447
    %v1600 = vunpack.c.h.b16 %v447
    %v1601 = vunpack.c.l.b16 %v448
    %v1602 = vunpack.c.h.b16 %v448
    %v1603 = vunpack.c.l.b16 %v449
    %v1604 = vunpack.c.h.b16 %v449
    %v1605 = vunpack.c.l.b16 %v450
    %v1606 = vunpack.c.h.b16 %v450
    %v1607 = vunpack.c.l.b16 %v451
    %v1608 = vunpack.c.h.b16 %v451
    %v1609 = vunpack.c.l.b16 %v452
    %v1610 = vunpack.c.h.b16 %v452
    %v1611 = vunpack.c.l.b16 %v453
    %v1612 = vunpack.c.h.b16 %v453
    %v1613 = vunpack.c.l.b16 %v454
    %v1614 = vunpack.c.h.b16 %v454
    %v1615 = vunpack.c.l.b16 %v455
    %v1616 = vunpack.c.h.b16 %v455
    %v1617 = vunpack.c.l.b16 %v456
    %v1618 = vunpack.c.h.b16 %v456
    %v1619 = vunpack.c.l.b16 %v457
    %v1620 = vunpack.c.h.b16 %v457
    %v1621 = vunpack.c.l.b16 %v458
    %v1622 = vunpack.c.h.b16 %v458
    %v1623 = vunpack.c.l.b16 %v459
    %v1624 = vunpack.c.h.b16 %v459
    %v1625 = vunpack.c.l.b16 %v460
    %v1626 = vunpack.c.h.b16 %v460
    %v1627 = vunpack.c.l.b16 %v461
    %v1628 = vunpack.c.h.b16 %v461
    %v1629 = vunpack.c.l.b16 %v462
    %v1630 = vunpack.c.h.b16 %v462
    %v1631 = vunpack.c.l.b16 %v463
    %v1632 = vunpack.c.h.b16 %v463
    %v1633 = vunpack.c.l.b16 %v464
    %v1634 = vunpack.c.h.b16 %v464
    %v1635 = vunpack.c.l.b16 %v465
    %v1636 = vunpack.c.h.b16 %v465
    %v1637 = vunpack.c.l.b16 %v466
    %v1638 = vunpack.c.h.b16 %v466
    %v1639 = vunpack.c.l.b16 %v467
    %v1640 = vunpack.c.h.b16 %v467
    %v1641 = vunpack.c.l.b16 %v468
    %v1642 = vunpack.c.h.b16 %v468
    %v1643 = vunpack.c.l.b16 %v469
    %v1644 = vunpack.c.h.b16 %v469
    %v1645 = vunpack.c.l.b16 %v470
    %v1646 = vunpack.c.h.b16 %v470
    %v1647 = vunpack.c.l.b16 %v471
    %v1648 = vunpack.c.h.b16 %v471
    %v1649 = vunpack.c.l.b16 %v472
    %v1650 = vunpack.c.h.b16 %v472
    %v1651 = vunpack.c.l.b16 %v473
    %v1652 = vunpack.c.h.b16 %v473
    %v1653 = vunpack.c.l.b16 %v474
    %v1654 = vunpack.c.h.b16 %v474
    %v1655 = vunpack.c.l.b16 %v475
    %v1656 = vunpack.c.h.b16 %v475
    %v1657 = vunpack.c.l.b16 %v476
    %v1658 = vunpack.c.h.b16 %v476
    %v1659 = vunpack.c.l.b16 %v477
    %v1660 = vunpack.c.h.b16 %v477
    %v1661 = vunpack.c.l.b16 %v478
    %v1662 = vunpack.c.h.b16 %v478
    %v1663 = vunpack.c.l.b16 %v479
    %v1664 = vunpack.c.h.b16 %v479
    %v1665 = vunpack.c.l.b16 %v480
    %v1666 = vunpack.c.h.b16 %v480
    %v1667 = vunpack.c.l.b16 %v481
    %v1668 = vunpack.c.h.b16 %v481
    %v1669 = vunpack.c.l.b16 %v482
    %v1670 = vunpack.c.h.b16 %v482
    %v1671 = vunpack.c.l.b16 %v483
    %v1672 = vunpack.c.h.b16 %v483
    %v1673 = vunpack.c.l.b16 %v484
    %v1674 = vunpack.c.h.b16 %v484
    %v1675 = vunpack.c.l.b16 %v485
    %v1676 = vunpack.c.h.b16 %v485
    %v1677 = vunpack.c.l.b16 %v486
    %v1678 = vunpack.c.h.b16 %v486
    %v1679 = vunpack.c.l.b16 %v487
    %v1680 = vunpack.c.h.b16 %v487
    %v1681 = vunpack.c.l.b16 %v488
    %v1682 = vunpack.c.h.b16 %v488
    %v1683 = vunpack.c.l.b16 %v489
    %v1684 = vunpack.c.h.b16 %v489
    %v1685 = vunpack.c.l.b16 %v490
    %v1686 = vunpack.c.h.b16 %v490
    %v1687 = vunpack.c.l.b16 %v491
    %v1688 = vunpack.c.h.b16 %v491
    %v1689 = vunpack.c.l.b16 %v492
    %v1690 = vunpack.c.h.b16 %v492
    %v1691 = vunpack.c.l.b16 %v493
    %v1692 = vunpack.c.h.b16 %v493
    %v1693 = vunpack.c.l.b16 %v494
    %v1694 = vunpack.c.h.b16 %v494
    %v1695 = vunpack.c.l.b16 %v495
    %v1696 = vunpack.c.h.b16 %v495
    %v1697 = vunpack.c.l.b16 %v496
    %v1698 = vunpack.c.h.b16 %v496
    %v1699 = vunpack.c.l.b16 %v497
    %v1700 = vunpack.c.h.b16 %v497
    %v1701 = vunpack.c.l.b16 %v498
    %v1702 = vunpack.c.h.b16 %v498
    %v1703 = vunpack.c.l.b16 %v499
    %v1704 = vunpack.c.h.b16 %v499
    %v1705 = vunpack.c.l.b16 %v500
    %v1706 = vunpack.c.h.b16 %v500
    %v1707 = vunpack.c.l.b16 %v501
    %v1708 = vunpack.c.h.b16 %v501
    %v1709 = vunpack.c.l.b16 %v502
    %v1710 = vunpack.c.h.b16 %v502
    %v1711 = vunpack.c.l.b16 %v503
    %v1712 = vunpack.c.h.b16 %v503
    %v1713 = vunpack.c.l.b16 %v504
    %v1714 = vunpack.c.h.b16 %v504
    %v1715 = vunpack.c.l.b16 %v505
    %v1716 = vunpack.c.h.b16 %v505
    %v1717 = vunpack.c.l.b16 %v506
    %v1718 = vunpack.c.h.b16 %v506
    %v1719 = vunpack.c.l.b16 %v507
    %v1720 = vunpack.c.h.b16 %v507
    %v1721 = vunpack.c.l.b16 %v508
    %v1722 = vunpack.c.h.b16 %v508
    %v1723 = vunpack.c.l.b16 %v509
    %v1724 = vunpack.c.h.b16 %v509
    %v1725 = vunpack.c.l.b16 %v510
    %v1726 = vunpack.c.h.b16 %v510
    %v1727 = vunpack.c.l.b16 %v511
    %v1728 = vunpack.c.h.b16 %v511
    %v1729 = vunpack.c.l.b16 %v512
    %v1730 = vunpack.c.h.b16 %v512
    %v1731 = vunpack.c.l.b16 %v513
    %v1732 = vunpack.c.h.b16 %v513
    %v1733 = vunpack.c.l.b16 %v514
    %v1734 = vunpack.c.h.b16 %v514
    %v1735 = vunpack.c.l.b16 %v515
    %v1736 = vunpack.c.h.b16 %v515
    %v1737 = vunpack.c.l.b16 %v516
    %v1738 = vunpack.c.h.b16 %v516
    %v1739 = vunpack.c.l.b16 %v517
    %v1740 = vunpack.c.h.b16 %v517
    %v1741 = vunpack.c.l.b16 %v518
    %v1742 = vunpack.c.h.b16 %v518
    %v1743 = vunpack.c.l.b16 %v519
    %v1744 = vunpack.c.h.b16 %v519
    %v1745 = vunpack.c.l.b16 %v520
    %v1746 = vunpack.c.h.b16 %v520
    %v1747 = vunpack.c.l.b16 %v521
    %v1748 = vunpack.c.h.b16 %v521
    %v1749 = vunpack.c.l.b16 %v522
    %v1750 = vunpack.c.h.b16 %v522
    %v1751 = vunpack.c.l.b16 %v523
    %v1752 = vunpack.c.h.b16 %v523
    %v1753 = vunpack.c.l.b16 %v524
    %v1754 = vunpack.c.h.b16 %v524
    %v1755 = vpack.c.b16 %v971, %v963
    %v1756 = vpack.c.b16 %v972, %v964
    %v1757 = vpack.c.b16 %v973, %v965
    %v1758 = vpack.c.b16 %v974, %v966
    %v1759 = vpack.c.b16 %v975, %v967
    %v1760 = vpack.c.b16 %v976, %v968
    %v1761 = vpack.c.b16 %v977, %v969
    %v1762 = vpack.c.b16 %v978, %v970
    %v1763 = vpack.c.b16 %v987, %v979
    %v1764 = vpack.c.b16 %v988, %v980
    %v1765 = vpack.c.b16 %v989, %v981
    %v1766 = vpack.c.b16 %v990, %v982
    %v1767 = vpack.c.b16 %v991, %v983
    %v1768 = vpack.c.b16 %v992, %v984
    %v1769 = vpack.c.b16 %v993, %v985
    %v1770 = vpack.c.b16 %v994, %v986
    %v1771 = vpack.c.b16 %v1003, %v995
    %v1772 = vpack.c.b16 %v1004, %v996
    %v1773 = vpack.c.b16 %v1005, %v997
    %v1774 = vpack.c.b16 %v1006, %v998
    %v1775 = vpack.c.b16 %v1007, %v999
    %v1776 = vpack.c.b16 %v1008, %v1000
    %v1777 = vpack.c.b16 %v1009, %v1001
    %v1778 = vpack.c.b16 %v1010, %v1002
    %v1779 = vpack.c.b16 %v1019, %v1011
    %v1780 = vpack.c.b16 %v1020, %v1012
    %v1781 = vpack.c.b16 %v1021, %v1013
    %v1782 = vpack.c.b16 %v1022, %v1014
    %v1783 = vpack.c.b16 %v1023, %v1015
    %v1784 = vpack.c.b16 %v1024, %v1016
    %v1785 = vpack.c.b16 %v1025, %v1017
    %v1786 = vpack.c.b16 %v1026, %v1018
    %v1787 = vpack.c.b16 %v1035, %v1027
    %v1788 = vpack.c.b16 %v1036, %v1028
    %v1789 = vpack.c.b16 %v1037, %v1029
    %v1790 = vpack.c.b16 %v1038, %v1030
    %v1791 = vpack.c.b16 %v1039, %v1031
    %v1792 = vpack.c.b16 %v1040, %v1032
    %v1793 = vpack.c.b16 %v1041, %v1033
    %v1794 = vpack.c.b16 %v1042, %v1034
    %v1795 = vpack.c.b16 %v1051, %v1043
    %v1796 = vpack.c.b16 %v1052, %v1044
    %v1797 = vpack.c.b16 %v1053, %v1045
    %v1798 = vpack.c.b16 %v1054, %v1046
    %v1799 = vpack.c.b16 %v1055, %v1047
    %v1800 = vpack.c.b16 %v1056, %v1048
    %v1801 = vpack.c.b16 %v1057, %v1049
    %v1802 = vpack.c.b16 %v1058, %v1050
    %v1803 = vpack.c.b16 %v1067, %v1059
    %v1804 = vpack.c.b16 %v1068, %v1060
    %v1805 = vpack.c.b16 %v1069, %v1061
    %v1806 = vpack.c.b16 %v1070, %v1062
    %v1807 = vpack.c.b16 %v1071, %v1063
    %v1808 = vpack.c.b16 %v1072, %v1064
    %v1809 = vpack.c.b16 %v1073, %v1065
    %v1810 = vpack.c.b16 %v1074, %v1066
    %v1811 = vpack.c.b16 %v1083, %v1075
    %v1812 = vpack.c.b16 %v1084, %v1076
    %v1813 = vpack.c.b16 %v1085, %v1077
    %v1814 = vpack.c.b16 %v1086, %v1078
    %v1815 = vpack.c.b16 %v1087, %v1079
    %v1816 = vpack.c.b16 %v1088, %v1080
    %v1817 = vpack.c.b16 %v1089, %v1081
    %v1818 = vpack.c.b16 %v1090, %v1082
    %v1819 = vpack.c.b16 %v1099, %v1091
    %v1820 = vpack.c.b16 %v1100, %v1092
    %v1821 = vpack.c.b16 %v1101, %v1093
    %v1822 = vpack.c.b16 %v1102, %v1094
    %v1823 = vpack.c.b16 %v1103, %v1095
    %v1824 = vpack.c.b16 %v1104, %v1096
    %v1825 = vpack.c.b16 %v1105, %v1097
    %v1826 = vpack.c.b16 %v1106, %v1098
    %v1827 = vpack.c.b16 %v1115, %v1107
    %v1828 = vpack.c.b16 %v1116, %v1108
    %v1829 = vpack.c.b16 %v1117, %v1109
    %v1830 = vpack.c.b16 %v1118, %v1110
    %v1831 = vpack.c.b16 %v1119, %v1111
    %v1832 = vpack.c.b16 %v1120, %v1112
    %v1833 = vpack.c.b16 %v1121, %v1113
    %v1834 = vpack.c.b16 %v1122, %v1114
    %v1835 = vpack.c.b16 %v1131, %v1123
    %v1836 = vpack.c.b16 %v1132, %v1124
    %v1837 = vpack.c.b16 %v1133, %v1125
    %v1838 = vpack.c.b16 %v1134, %v1126
    %v1839 = vpack.c.b16 %v1135, %v1127
    %v1840 = vpack.c.b16 %v1136, %v1128
    %v1841 = vpack.c.b16 %v1137, %v1129
    %v1842 = vpack.c.b16 %v1138, %v1130
    %v1843 = vpack.c.b16 %v1147, %v1139
    %v1844 = vpack.c.b16 %v1148, %v1140
    %v1845 = vpack.c.b16 %v1149, %v1141
    %v1846 = vpack.c.b16 %v1150, %v1142
    %v1847 = vpack.c.b16 %v1151, %v1143
    %v1848 = vpack.c.b16 %v1152, %v1144
    %v1849 = vpack.c.b16 %v1153, %v1145
    %v1850 = vpack.c.b16 %v1154, %v1146
    %v1851 = vpack.c.b16 %v1163, %v1155
    %v1852 = vpack.c.b16 %v1164, %v1156
    %v1853 = vpack.c.b16 %v1165, %v1157
    %v1854 = vpack.c.b16 %v1166, %v1158
    %v1855 = vpack.c.b16 %v1167, %v1159
    %v1856 = vpack.c.b16 %v1168, %v1160
    %v1857 = vpack.c.b16 %v1169, %v1161
    %v1858 = vpack.c.b16 %v1170, %v1162
    %v1859 = vpack.c.b16 %v1179, %v1171
    %v1860 = vpack.c.b16 %v1180, %v1172
    %v1861 = vpack.c.b16 %v1181, %v1173
    %v1862 = vpack.c.b16 %v1182, %v1174
    %v1863 = vpack.c.b16 %v1183, %v1175
    %v1864 = vpack.c.b16 %v1184, %v1176
    %v1865 = vpack.c.b16 %v1185, %v1177
    %v1866 = vpack.c.b16 %v1186, %v1178
    %v1867 = vpack.c.b16 %v1195, %v1187
    %v1868 = vpack.c.b16 %v1196, %v1188
    %v1869 = vpack.c.b16 %v1197, %v1189
    %v1870 = vpack.c.b16 %v1198, %v1190
    %v1871 = vpack.c.b16 %v1199, %v1191
    %v1872 = vpack.c.b16 %v1200, %v1192
    %v1873 = vpack.c.b16 %v1201, %v1193
    %v1874 = vpack.c.b16 %v1202, %v1194
    %v1875 = vpack.c.b16 %v1211, %v1203
    %v1876 = vpack.c.b16 %v1212, %v1204
    %v1877 = vpack.c.b16 %v1213, %v1205
    %v1878 = vpack.c.b16 %v1214, %v1206
    %v1879 = vpack.c.b16 %v1215, %v1207
    %v1880 = vpack.c.b16 %v1216, %v1208
    %v1881 = vpack.c.b16 %v1217, %v1209
    %v1882 = vpack.c.b16 %v1218, %v1210
    %v1883 = vpack.c.b16 %v1227, %v1219
    %v1884 = vpack.c.b16 %v1228, %v1220
    %v1885 = vpack.c.b16 %v1229, %v1221
    %v1886 = vpack.c.b16 %v1230, %v1222
    %v1887 = vpack.c.b16 %v1231, %v1223
    %v1888 = vpack.c.b16 %v1232, %v1224
    %v1889 = vpack.c.b16 %v1233, %v1225
    %v1890 = vpack.c.b16 %v1234, %v1226
    %v1891 = vpack.c.b16 %v1243, %v1235
    %v1892 = vpack.c.b16 %v1244, %v1236
    %v1893 = vpack.c.b16 %v1245, %v1237
    %v1894 = vpack.c.b16 %v1246, %v1238
    %v1895 = vpack.c.b16 %v1247, %v1239
    %v1896 = vpack.c.b16 %v1248, %v1240
    %v1897 = vpack.c.b16 %v1249, %v1241
    %v1898 = vpack.c.b16 %v1250, %v1242
    %v1899 = vpack.c.b16 %v1259, %v1251
    %v1900 = vpack.c.b16 %v1260, %v1252
    %v1901 = vpack.c.b16 %v1261, %v1253
    %v1902 = vpack.c.b16 %v1262, %v1254
    %v1903 = vpack.c.b16 %v1263, %v1255
    %v1904 = vpack.c.b16 %v1264, %v1256
    %v1905 = vpack.c.b16 %v1265, %v1257
    %v1906 = vpack.c.b16 %v1266, %v1258
    %v1907 = vpack.c.b16 %v1275, %v1267
    %v1908 = vpack.c.b16 %v1276, %v1268
    %v1909 = vpack.c.b16 %v1277, %v1269
    %v1910 = vpack.c.b16 %v1278, %v1270
    %v1911 = vpack.c.b16 %v1279, %v1271
    %v1912 = vpack.c.b16 %v1280, %v1272
    %v1913 = vpack.c.b16 %v1281, %v1273
    %v1914 = vpack.c.b16 %v1282, %v1274
    %v1915 = vpack.c.b16 %v1291, %v1283
    %v1916 = vpack.c.b16 %v1292, %v1284
    %v1917 = vpack.c.b16 %v1293, %v1285
    %v1918 = vpack.c.b16 %v1294, %v1286
    %v1919 = vpack.c.b16 %v1295, %v1287
    %v1920 = vpack.c.b16 %v1296, %v1288
    %v1921 = vpack.c.b16 %v1297, %v1289
    %v1922 = vpack.c.b16 %v1298, %v1290
    %v1923 = vpack.c.b16 %v1307, %v1299
    %v1924 = vpack.c.b16 %v1308, %v1300
    %v1925 = vpack.c.b16 %v1309, %v1301
    %v1926 = vpack.c.b16 %v1310, %v1302
    %v1927 = vpack.c.b16 %v1311, %v1303
    %v1928 = vpack.c.b16 %v1312, %v1304
    %v1929 = vpack.c.b16 %v1313, %v1305
    %v1930 = vpack.c.b16 %v1314, %v1306
    %v1931 = vpack.c.b16 %v1323, %v1315
    %v1932 = vpack.c.b16 %v1324, %v1316
    %v1933 = vpack.c.b16 %v1325, %v1317
    %v1934 = vpack.c.b16 %v1326, %v1318
    %v1935 = vpack.c.b16 %v1327, %v1319
    %v1936 = vpack.c.b16 %v1328, %v1320
    %v1937 = vpack.c.b16 %v1329, %v1321
    %v1938 = vpack.c.b16 %v1330, %v1322
    %v1939 = vpack.c.b16 %v1339, %v1331
    %v1940 = vpack.c.b16 %v1340, %v1332
    %v1941 = vpack.c.b16 %v1341, %v1333
    %v1942 = vpack.c.b16 %v1342, %v1334
    %v1943 = vpack.c.b16 %v1343, %v1335
    %v1944 = vpack.c.b16 %v1344, %v1336
    %v1945 = vpack.c.b16 %v1345, %v1337
    %v1946 = vpack.c.b16 %v1346, %v1338
    %v1947 = vpack.c.b16 %v1355, %v1347
    %v1948 = vpack.c.b16 %v1356, %v1348
    %v1949 = vpack.c.b16 %v1357, %v1349
    %v1950 = vpack.c.b16 %v1358, %v1350
    %v1951 = vpack.c.b16 %v1359, %v1351
    %v1952 = vpack.c.b16 %v1360, %v1352
    %v1953 = vpack.c.b16 %v1361, %v1353
    %v1954 = vpack.c.b16 %v1362, %v1354
    %v1955 = vpack.c.b16 %v1371, %v1363
    %v1956 = vpack.c.b16 %v1372, %v1364
    %v1957 = vpack.c.b16 %v1373, %v1365
    %v1958 = vpack.c.b16 %v1374, %v1366
    %v1959 = vpack.c.b16 %v1375, %v1367
    %v1960 = vpack.c.b16 %v1376, %v1368
    %v1961 = vpack.c.b16 %v1377, %v1369
    %v1962 = vpack.c.b16 %v1378, %v1370
    %v1963 = vpack.c.b16 %v1387, %v1379
    %v1964 = vpack.c.b16 %v1388, %v1380
    %v1965 = vpack.c.b16 %v1389, %v1381
    %v1966 = vpack.c.b16 %v1390, %v1382
    %v1967 = vpack.c.b16 %v1391, %v1383
    %v1968 = vpack.c.b16 %v1392, %v1384
    %v1969 = vpack.c.b16 %v1393, %v1385
    %v1970 = vpack.c.b16 %v1394, %v1386
    %v1971 = vpack.c.b16 %v1403, %v1395
    %v1972 = vpack.c.b16 %v1404, %v1396
    %v1973 = vpack.c.b16 %v1405, %v1397
    %v1974 = vpack.c.b16 %v1406, %v1398
    %v1975 = vpack.c.b16 %v1407, %v1399
    %v1976 = vpack.c.b16 %v1408, %v1400
    %v1977 = vpack.c.b16 %v1409, %v1401
    %v1978 = vpack.c.b16 %v1410, %v1402
    %v1979 = vpack.c.b16 %v1419, %v1411
    %v1980 = vpack.c.b16 %v1420, %v1412
    %v1981 = vpack.c.b16 %v1421, %v1413
    %v1982 = vpack.c.b16 %v1422, %v1414
    %v1983 = vpack.c.b16 %v1423, %v1415
    %v1984 = vpack.c.b16 %v1424, %v1416
    %v1985 = vpack.c.b16 %v1425, %v1417
    %v1986 = vpack.c.b16 %v1426, %v1418
    %v1987 = vpack.c.b16 %v1435, %v1427
    %v1988 = vpack.c.b16 %v1436, %v1428
    %v1989 = vpack.c.b16 %v1437, %v1429
    %v1990 = vpack.c.b16 %v1438, %v1430
    %v1991 = vpack.c.b16 %v1439, %v1431
    %v1992 = vpack.c.b16 %v1440, %v1432
    %v1993 = vpack.c.b16 %v1441, %v1433
    %v1994 = vpack.c.b16 %v1442, %v1434
    %v1995 = vpack.c.b16 %v1451, %v1443
    %v1996 = vpack.c.b16 %v1452, %v1444
    %v1997 = vpack.c.b16 %v1453, %v1445
    %v1998 = vpack.c.b16 %v1454, %v1446
    %v1999 = vpack.c.b16 %v1455, %v1447
    %v2000 = vpack.c.b16 %v1456, %v1448
    %v2001 = vpack.c.b16 %v1457, %v1449
    %v2002 = vpack.c.b16 %v1458, %v1450
    %v2003 = vpack.c.b16 %v1467, %v1459
    %v2004 = vpack.c.b16 %v1468, %v1460
    %v2005 = vpack.c.b16 %v1469, %v1461
    %v2006 = vpack.c.b16 %v1470, %v1462
    %v2007 = vpack.c.b16 %v1471, %v1463
    %v2008 = vpack.c.b16 %v1472, %v1464
    %v2009 = vpack.c.b16 %v1473, %v1465
    %v2010 = vpack.c.b16 %v1474, %v1466
    %v2011 = vpack.c.b16 %v1483, %v1475
    %v2012 = vpack.c.b16 %v1484, %v1476
    %v2013 = vpack.c.b16 %v1485, %v1477
    %v2014 = vpack.c.b16 %v1486, %v1478
    %v2015 = vpack.c.b16 %v1487, %v1479
    %v2016 = vpack.c.b16 %v1488, %v1480
    %v2017 = vpack.c.b16 %v1489, %v1481
    %v2018 = vpack.c.b16 %v1490, %v1482
    %v2019 = vpack.c.b16 %v1499, %v1491
    %v2020 = vpack.c.b16 %v1500, %v1492
    %v2021 = vpack.c.b16 %v1501, %v1493
    %v2022 = vpack.c.b16 %v1502, %v1494
    %v2023 = vpack.c.b16 %v1503, %v1495
    %v2024 = vpack.c.b16 %v1504, %v1496
    %v2025 = vpack.c.b16 %v1505, %v1497
    %v2026 = vpack.c.b16 %v1506, %v1498
    %v2027 = vpack.c.b16 %v1515, %v1507
    %v2028 = vpack.c.b16 %v1516, %v1508
    %v2029 = vpack.c.b16 %v1517, %v1509
    %v2030 = vpack.c.b16 %v1518, %v1510
    %v2031 = vpack.c.b16 %v1519, %v1511
    %v2032 = vpack.c.b16 %v1520, %v1512
    %v2033 = vpack.c.b16 %v1521, %v1513
    %v2034 = vpack.c.b16 %v1522, %v1514
    %v2035 = vpack.c.b16 %v1531, %v1523
    %v2036 = vpack.c.b16 %v1532, %v1524
    %v2037 = vpack.c.b16 %v1533, %v1525
    %v2038 = vpack.c.b16 %v1534, %v1526
    %v2039 = vpack.c.b16 %v1535, %v1527
    %v2040 = vpack.c.b16 %v1536, %v1528
    %v2041 = vpack.c.b16 %v1537, %v1529
    %v2042 = vpack.c.b16 %v1538, %v1530
    %v2043 = vpack.c.b16 %v1547, %v1539
    %v2044 = vpack.c.b16 %v1548, %v1540
    %v2045 = vpack.c.b16 %v1549, %v1541
    %v2046 = vpack.c.b16 %v1550, %v1542
    %v2047 = vpack.c.b16 %v1551, %v1543
    %v2048 = vpack.c.b16 %v1552, %v1544
    %v2049 = vpack.c.b16 %v1553, %v1545
    %v2050 = vpack.c.b16 %v1554, %v1546
    %v2051 = vpack.c.b16 %v1563, %v1555
    %v2052 = vpack.c.b16 %v1564, %v1556
    %v2053 = vpack.c.b16 %v1565, %v1557
    %v2054 = vpack.c.b16 %v1566, %v1558
    %v2055 = vpack.c.b16 %v1567, %v1559
    %v2056 = vpack.c.b16 %v1568, %v1560
    %v2057 = vpack.c.b16 %v1569, %v1561
    %v2058 = vpack.c.b16 %v1570, %v1562
    %v2059 = vpack.c.b16 %v1579, %v1571
    %v2060 = vpack.c.b16 %v1580, %v1572
    %v2061 = vpack.c.b16 %v1581, %v1573
    %v2062 = vpack.c.b16 %v1582, %v1574
    %v2063 = vpack.c.b16 %v1583, %v1575
    %v2064 = vpack.c.b16 %v1584, %v1576
    %v2065 = vpack.c.b16 %v1585, %v1577
    %v2066 = vpack.c.b16 %v1586, %v1578
    %v2067 = vpack.c.b16 %v1595, %v1587
    %v2068 = vpack.c.b16 %v1596, %v1588
    %v2069 = vpack.c.b16 %v1597, %v1589
    %v2070 = vpack.c.b16 %v1598, %v1590
    %v2071 = vpack.c.b16 %v1599, %v1591
    %v2072 = vpack.c.b16 %v1600, %v1592
    %v2073 = vpack.c.b16 %v1601, %v1593
    %v2074 = vpack.c.b16 %v1602, %v1594
    %v2075 = vpack.c.b16 %v1611, %v1603
    %v2076 = vpack.c.b16 %v1612, %v1604
    %v2077 = vpack.c.b16 %v1613, %v1605
    %v2078 = vpack.c.b16 %v1614, %v1606
    %v2079 = vpack.c.b16 %v1615, %v1607
    %v2080 = vpack.c.b16 %v1616, %v1608
    %v2081 = vpack.c.b16 %v1617, %v1609
    %v2082 = vpack.c.b16 %v1618, %v1610
    %v2083 = vpack.c.b16 %v1627, %v1619
    %v2084 = vpack.c.b16 %v1628, %v1620
    %v2085 = vpack.c.b16 %v1629, %v1621
    %v2086 = vpack.c.b16 %v1630, %v1622
    %v2087 = vpack.c.b16 %v1631, %v1623
    %v2088 = vpack.c.b16 %v1632, %v1624
    %v2089 = vpack.c.b16 %v1633, %v1625
    %v2090 = vpack.c.b16 %v1634, %v1626
    %v2091 = vpack.c.b16 %v1643, %v1635
    %v2092 = vpack.c.b16 %v1644, %v1636
    %v2093 = vpack.c.b16 %v1645, %v1637
    %v2094 = vpack.c.b16 %v1646, %v1638
    %v2095 = vpack.c.b16 %v1647, %v1639
    %v2096 = vpack.c.b16 %v1648, %v1640
    %v2097 = vpack.c.b16 %v1649, %v1641
    %v2098 = vpack.c.b16 %v1650, %v1642
    %v2099 = vpack.c.b16 %v1659, %v1651
    %v2100 = vpack.c.b16 %v1660, %v1652
    %v2101 = vpack.c.b16 %v1661, %v1653
    %v2102 = vpack.c.b16 %v1662, %v1654
    %v2103 = vpack.c.b16 %v1663, %v1655
    %v2104 = vpack.c.b16 %v1664, %v1656
    %v2105 = vpack.c.b16 %v1665, %v1657
    %v2106 = vpack.c.b16 %v1666, %v1658
    %v2107 = vpack.c.b16 %v1675, %v1667
    %v2108 = vpack.c.b16 %v1676, %v1668
    %v2109 = vpack.c.b16 %v1677, %v1669
    %v2110 = vpack.c.b16 %v1678, %v1670
    %v2111 = vpack.c.b16 %v1679, %v1671
    %v2112 = vpack.c.b16 %v1680, %v1672
    %v2113 = vpack.c.b16 %v1681, %v1673
    %v2114 = vpack.c.b16 %v1682, %v1674
    %v2115 = vpack.c.b16 %v1691, %v1683
    %v2116 = vpack.c.b16 %v1692, %v1684
    %v2117 = vpack.c.b16 %v1693, %v1685
    %v2118 = vpack.c.b16 %v1694, %v1686
    %v2119 = vpack.c.b16 %v1695, %v1687
    %v2120 = vpack.c.b16 %v1696, %v1688
    %v2121 = vpack.c.b16 %v1697, %v1689
    %v2122 = vpack.c.b16 %v1698, %v1690
    %v2123 = vpack.c.b16 %v1707, %v1699
    %v2124 = vpack.c.b16 %v1708, %v1700
    %v2125 = vpack.c.b16 %v1709, %v1701
    %v2126 = vpack.c.b16 %v1710, %v1702
    %v2127 = vpack.c.b16 %v1711, %v1703
    %v2128 = vpack.c.b16 %v1712, %v1704
    %v2129 = vpack.c.b16 %v1713, %v1705
    %v2130 = vpack.c.b16 %v1714, %v1706
    %v2131 = vpack.c.b16 %v1723, %v1715
    %v2132 = vpack.c.b16 %v1724, %v1716
    %v2133 = vpack.c.b16 %v1725, %v1717
    %v2134 = vpack.c.b16 %v1726, %v1718
    %v2135 = vpack.c.b16 %v1727, %v1719
    %v2136 = vpack.c.b16 %v1728, %v1720
    %v2137 = vpack.c.b16 %v1729, %v1721
    %v2138 = vpack.c.b16 %v1730, %v1722
    %v2139 = vpack.c.b16 %v1739, %v1731
    %v2140 = vpack.c.b16 %v1740, %v1732
    %v2141 = vpack.c.b16 %v1741, %v1733
    %v2142 = vpack.c.b16 %v1742, %v1734
    %v2143 = vpack.c.b16 %v1743, %v1735
    %v2144 = vpack.c.b16 %v1744, %v1736
    %v2145 = vpack.c.b16 %v1745, %v1737
    %v2146 = vpack.c.b16 %v1746, %v1738
    %v2147 = vpack.c.b16 %v1747, %v1747
    %v2148 = vpack.c.b16 %v1748, %v1748
    %v2149 = vpack.c.b16 %v1749, %v1749
    %v2150 = vpack.c.b16 %v1750, %v1750
    %v2151 = vpack.c.b16 %v1751, %v1751
    %v2152 = vpack.c.b16 %v1752, %v1752
    %v2153 = vpack.c.b16 %v1753, %v1753
    %v2154 = vpack.c.b16 %v1754, %v1754
    %vm2547 = vcmask 195584
    %v2549 = vsel %vm2547, %v128, 0
    %vm2551 = vcmask 1043456
    %v2553 = vsel %vm2551, %v2147, 0
    %v2556 = vsel %vm2551, %v2148, 0
    %v2559 = vsel %vm2551, %v2149, 0
    %v2562 = vsel %vm2551, %v2150, 0
    %v2565 = vsel %vm2551, %v2151, 0
    %v2568 = vsel %vm2551, %v2152, 0
    %v2571 = vsel %vm2551, %v2153, 0
    %v2574 = vsel %vm2551, %v2154, 0
    %2576 = vmatprep.subr.bf16.mxu0 %v1812
    %2577 = vmatpush1.bf16.msra.mxu0 %v1811
    %2578 = vmatprep.subr.bf16.mxu0 %v1804
    %2579 = vmatpush1.bf16.msra.mxu0 %v1803
    %2580 = vmatprep.subr.bf16.mxu0 %v1796
    %2581 = vmatpush1.bf16.msra.mxu0 %v1795
    %2582 = vmatprep.subr.bf16.mxu0 %v1788
    %2583 = vmatpush1.bf16.msra.mxu0 %v1787
    %2584 = vmatprep.subr.bf16.mxu0 %v1780
    %2585 = vmatpush1.bf16.msra.mxu0 %v1779
    %2586 = vmatprep.subr.bf16.mxu0 %v1772
    %2587 = vmatpush1.bf16.msra.mxu0 %v1771
    %2588 = vmatprep.subr.bf16.mxu0 %v1764
    %2589 = vmatpush1.bf16.msra.mxu0 %v1763
    %2590 = vmatprep.subr.bf16.mxu0 %v1756
    %2591 = vmatpush1.bf16.msra.mxu0 %v1755
    %2592 = vmatprep.subr.bf16.mxu0 %v1876
    %2593 = vmatpush2.bf16.msra.mxu0 %v1875
    %2594 = vmatprep.subr.bf16.mxu0 %v1868
    %2595 = vmatpush2.bf16.msra.mxu0 %v1867
    %2596 = vmatprep.subr.bf16.mxu0 %v1860
    %2597 = vmatpush2.bf16.msra.mxu0 %v1859
    %2598 = vmatprep.subr.bf16.mxu0 %v1852
    %2599 = vmatpush2.bf16.msra.mxu0 %v1851
    %2600 = vmatprep.subr.bf16.mxu0 %v1844
    %2601 = vmatpush2.bf16.msra.mxu0 %v1843
    %2602 = vmatprep.subr.bf16.mxu0 %v1836
    %2603 = vmatpush2.bf16.msra.mxu0 %v1835
    %2604 = vmatprep.subr.bf16.mxu0 %v1828
    %2605 = vmatpush2.bf16.msra.mxu0 %v1827
    %2606 = vmatprep.subr.bf16.mxu0 %v1820
    %2607 = vmatpush2.bf16.msra.mxu0 %v1819
    %2608 = vmatprep.mubr.bf16.mxu0 %v123
    %2609 = vmatmul.mubr.bf16.gmra.mxu0 %v122
    %v2610 = vpop.f32.mrf.mxu0
    %v2611 = vadd.f32 %v530, %v2610
    %v2612 = vpop.f32.mrf.mxu0
    %v2613 = vadd.f32 %v534, %v2612
    %v2614 = vpop.f32.mrf.mxu0
    %v2615 = vpop.f32.mrf.mxu0
    %2616 = vdwg.mxu0
    %2617 = vmatprep.subr.bf16.mxu0 %v1940
    %2618 = vmatpush1.bf16.msra.mxu0 %v1939
    %2619 = vmatprep.subr.bf16.mxu0 %v1932
    %2620 = vmatpush1.bf16.msra.mxu0 %v1931
    %2621 = vmatprep.subr.bf16.mxu0 %v1924
    %2622 = vmatpush1.bf16.msra.mxu0 %v1923
    %2623 = vmatprep.subr.bf16.mxu0 %v1916
    %2624 = vmatpush1.bf16.msra.mxu0 %v1915
    %2625 = vmatprep.subr.bf16.mxu0 %v1908
    %2626 = vmatpush1.bf16.msra.mxu0 %v1907
    %2627 = vmatprep.subr.bf16.mxu0 %v1900
    %2628 = vmatpush1.bf16.msra.mxu0 %v1899
    %2629 = vmatprep.subr.bf16.mxu0 %v1892
    %2630 = vmatpush1.bf16.msra.mxu0 %v1891
    %2631 = vmatprep.subr.bf16.mxu0 %v1884
    %2632 = vmatpush1.bf16.msra.mxu0 %v1883
    %2633 = vmatprep.subr.bf16.mxu0 %v2004
    %2634 = vmatpush2.bf16.msra.mxu0 %v2003
    %2635 = vmatprep.subr.bf16.mxu0 %v1996
    %2636 = vmatpush2.bf16.msra.mxu0 %v1995
    %2637 = vmatprep.subr.bf16.mxu0 %v1988
    %2638 = vmatpush2.bf16.msra.mxu0 %v1987
    %2639 = vmatprep.subr.bf16.mxu0 %v1980
    %2640 = vmatpush2.bf16.msra.mxu0 %v1979
    %2641 = vmatprep.subr.bf16.mxu0 %v1972
    %2642 = vmatpush2.bf16.msra.mxu0 %v1971
    %2643 = vmatprep.subr.bf16.mxu0 %v1964
    %2644 = vmatpush2.bf16.msra.mxu0 %v1963
    %2645 = vmatprep.subr.bf16.mxu0 %v1956
    %2646 = vmatpush2.bf16.msra.mxu0 %v1955
    %2647 = vmatprep.subr.bf16.mxu0 %v1948
    %2648 = vmatpush2.bf16.msra.mxu0 %v1947
    %2649 = vmatprep.mubr.bf16.mxu0 %v125
    %2650 = vmatmul.mubr.bf16.gmra.mxu0 %v124
    %v2651 = vpop.f32.mrf.mxu0
    %v2652 = vadd.f32 %v2611, %v2651
    %v2653 = vpop.f32.mrf.mxu0
    %v2654 = vadd.f32 %v2613, %v2653
    %v2655 = vpop.f32.mrf.mxu0
    %v2656 = vpop.f32.mrf.mxu0
    %2657 = vdwg.mxu0
    %2658 = vmatprep.subr.bf16.mxu0 %v2068
    %2659 = vmatpush1.bf16.msra.mxu0 %v2067
    %2660 = vmatprep.subr.bf16.mxu0 %v2060
    %2661 = vmatpush1.bf16.msra.mxu0 %v2059
    %2662 = vmatprep.subr.bf16.mxu0 %v2052
    %2663 = vmatpush1.bf16.msra.mxu0 %v2051
    %2664 = vmatprep.subr.bf16.mxu0 %v2044
    %2665 = vmatpush1.bf16.msra.mxu0 %v2043
    %2666 = vmatprep.subr.bf16.mxu0 %v2036
    %2667 = vmatpush1.bf16.msra.mxu0 %v2035
    %2668 = vmatprep.subr.bf16.mxu0 %v2028
    %2669 = vmatpush1.bf16.msra.mxu0 %v2027
    %2670 = vmatprep.subr.bf16.mxu0 %v2020
    %2671 = vmatpush1.bf16.msra.mxu0 %v2019
    %2672 = vmatprep.subr.bf16.mxu0 %v2012
    %2673 = vmatpush1.bf16.msra.mxu0 %v2011
    %2674 = vmatprep.subr.bf16.mxu0 %v2132
    %2675 = vmatpush2.bf16.msra.mxu0 %v2131
    %2676 = vmatprep.subr.bf16.mxu0 %v2124
    %2677 = vmatpush2.bf16.msra.mxu0 %v2123
    %2678 = vmatprep.subr.bf16.mxu0 %v2116
    %2679 = vmatpush2.bf16.msra.mxu0 %v2115
    %2680 = vmatprep.subr.bf16.mxu0 %v2108
    %2681 = vmatpush2.bf16.msra.mxu0 %v2107
    %2682 = vmatprep.subr.bf16.mxu0 %v2100
    %2683 = vmatpush2.bf16.msra.mxu0 %v2099
    %2684 = vmatprep.subr.bf16.mxu0 %v2092
    %2685 = vmatpush2.bf16.msra.mxu0 %v2091
    %2686 = vmatprep.subr.bf16.mxu0 %v2084
    %2687 = vmatpush2.bf16.msra.mxu0 %v2083
    %2688 = vmatprep.subr.bf16.mxu0 %v2076
    %2689 = vmatpush2.bf16.msra.mxu0 %v2075
    %2690 = vmatprep.mubr.bf16.mxu0 %v127
    %2691 = vmatmul.mubr.bf16.gmra.mxu0 %v126
    %v2692 = vpop.f32.mrf.mxu0
    %v2693 = vadd.f32 %v2652, %v2692
    %v2694 = vpop.f32.mrf.mxu0
    %v2695 = vadd.f32 %v2654, %v2694
    %v2696 = vpop.f32.mrf.mxu0
    %v2697 = vpop.f32.mrf.mxu0
    %2698 = vdwg.mxu0
    %2699 = vmatprep.subr.bf16.mxu0 0
    %2700 = vmatpush1.bf16.msra.mxu0 0
    %2701 = vmatprep.subr.bf16.mxu0 0
    %2702 = vmatpush1.bf16.msra.mxu0 0
    %2703 = vmatprep.subr.bf16.mxu0 0
    %2704 = vmatpush1.bf16.msra.mxu0 0
    %2705 = vmatprep.subr.bf16.mxu0 0
    %2706 = vmatpush1.bf16.msra.mxu0 0
    %2707 = vmatprep.subr.bf16.mxu0 0
    %2708 = vmatpush1.bf16.msra.mxu0 0
    %2709 = vmatprep.subr.bf16.mxu0 0
    %2710 = vmatpush1.bf16.msra.mxu0 0
    %2711 = vmatprep.subr.bf16.mxu0 %v2556
    %2712 = vmatpush1.bf16.msra.mxu0 %v2553
    %2713 = vmatprep.subr.bf16.mxu0 %v2140
    %2714 = vmatpush1.bf16.msra.mxu0 %v2139
    %2715 = vmatprep.subr.bf16.mxu0 0
    %2716 = vmatpush2.bf16.msra.mxu0 0
    %2717 = vmatprep.subr.bf16.mxu0 0
    %2718 = vmatpush2.bf16.msra.mxu0 0
    %2719 = vmatprep.subr.bf16.mxu0 0
    %2720 = vmatpush2.bf16.msra.mxu0 0
    %2721 = vmatprep.subr.bf16.mxu0 0
    %2722 = vmatpush2.bf16.msra.mxu0 0
    %2723 = vmatprep.subr.bf16.mxu0 0
    %2724 = vmatpush2.bf16.msra.mxu0 0
    %2725 = vmatprep.subr.bf16.mxu0 0
    %2726 = vmatpush2.bf16.msra.mxu0 0
    %2727 = vmatprep.subr.bf16.mxu0 0
    %2728 = vmatpush2.bf16.msra.mxu0 0
    %2729 = vmatprep.subr.bf16.mxu0 0
    %2730 = vmatpush2.bf16.msra.mxu0 0
    %2731 = vmatprep.mubr.bf16.mxu0 0
    %2732 = vmatmul.mubr.bf16.gmra.mxu0 %v2549
    %v2733 = vpop.f32.mrf.mxu0
    %v2734 = vadd.f32 %v2693, %v2733
    %v2735 = vpop.f32.mrf.mxu0
    %v2736 = vadd.f32 %v2695, %v2735
    %v2737 = vpop.f32.mrf.mxu0
    %v2738 = vpop.f32.mrf.mxu0
    %2739 = vdwg.mxu0
    %2740 = vmatprep.subr.bf16.mxu0 %v1814
    %2741 = vmatpush1.bf16.msra.mxu0 %v1813
    %2742 = vmatprep.subr.bf16.mxu0 %v1806
    %2743 = vmatpush1.bf16.msra.mxu0 %v1805
    %2744 = vmatprep.subr.bf16.mxu0 %v1798
    %2745 = vmatpush1.bf16.msra.mxu0 %v1797
    %2746 = vmatprep.subr.bf16.mxu0 %v1790
    %2747 = vmatpush1.bf16.msra.mxu0 %v1789
    %2748 = vmatprep.subr.bf16.mxu0 %v1782
    %2749 = vmatpush1.bf16.msra.mxu0 %v1781
    %2750 = vmatprep.subr.bf16.mxu0 %v1774
    %2751 = vmatpush1.bf16.msra.mxu0 %v1773
    %2752 = vmatprep.subr.bf16.mxu0 %v1766
    %2753 = vmatpush1.bf16.msra.mxu0 %v1765
    %2754 = vmatprep.subr.bf16.mxu0 %v1758
    %2755 = vmatpush1.bf16.msra.mxu0 %v1757
    %2756 = vmatprep.subr.bf16.mxu0 %v1878
    %2757 = vmatpush2.bf16.msra.mxu0 %v1877
    %2758 = vmatprep.subr.bf16.mxu0 %v1870
    %2759 = vmatpush2.bf16.msra.mxu0 %v1869
    %2760 = vmatprep.subr.bf16.mxu0 %v1862
    %2761 = vmatpush2.bf16.msra.mxu0 %v1861
    %2762 = vmatprep.subr.bf16.mxu0 %v1854
    %2763 = vmatpush2.bf16.msra.mxu0 %v1853
    %2764 = vmatprep.subr.bf16.mxu0 %v1846
    %2765 = vmatpush2.bf16.msra.mxu0 %v1845
    %2766 = vmatprep.subr.bf16.mxu0 %v1838
    %2767 = vmatpush2.bf16.msra.mxu0 %v1837
    %2768 = vmatprep.subr.bf16.mxu0 %v1830
    %2769 = vmatpush2.bf16.msra.mxu0 %v1829
    %2770 = vmatprep.subr.bf16.mxu0 %v1822
    %2771 = vmatpush2.bf16.msra.mxu0 %v1821
    %2772 = vmatprep.mubr.bf16.mxu0 %v123
    %2773 = vmatmul.mubr.bf16.gmra.mxu0 %v122
    %v2774 = vpop.f32.mrf.mxu0
    %v2775 = vadd.f32 %v538, %v2774
    %v2776 = vpop.f32.mrf.mxu0
    %v2777 = vadd.f32 %v542, %v2776
    %v2778 = vpop.f32.mrf.mxu0
    %v2779 = vpop.f32.mrf.mxu0
    %2780 = vdwg.mxu0
    %2781 = vmatprep.subr.bf16.mxu0 %v1942
    %2782 = vmatpush1.bf16.msra.mxu0 %v1941
    %2783 = vmatprep.subr.bf16.mxu0 %v1934
    %2784 = vmatpush1.bf16.msra.mxu0 %v1933
    %2785 = vmatprep.subr.bf16.mxu0 %v1926
    %2786 = vmatpush1.bf16.msra.mxu0 %v1925
    %2787 = vmatprep.subr.bf16.mxu0 %v1918
    %2788 = vmatpush1.bf16.msra.mxu0 %v1917
    %2789 = vmatprep.subr.bf16.mxu0 %v1910
    %2790 = vmatpush1.bf16.msra.mxu0 %v1909
    %2791 = vmatprep.subr.bf16.mxu0 %v1902
    %2792 = vmatpush1.bf16.msra.mxu0 %v1901
    %2793 = vmatprep.subr.bf16.mxu0 %v1894
    %2794 = vmatpush1.bf16.msra.mxu0 %v1893
    %2795 = vmatprep.subr.bf16.mxu0 %v1886
    %2796 = vmatpush1.bf16.msra.mxu0 %v1885
    %2797 = vmatprep.subr.bf16.mxu0 %v2006
    %2798 = vmatpush2.bf16.msra.mxu0 %v2005
    %2799 = vmatprep.subr.bf16.mxu0 %v1998
    %2800 = vmatpush2.bf16.msra.mxu0 %v1997
    %2801 = vmatprep.subr.bf16.mxu0 %v1990
    %2802 = vmatpush2.bf16.msra.mxu0 %v1989
    %2803 = vmatprep.subr.bf16.mxu0 %v1982
    %2804 = vmatpush2.bf16.msra.mxu0 %v1981
    %2805 = vmatprep.subr.bf16.mxu0 %v1974
    %2806 = vmatpush2.bf16.msra.mxu0 %v1973
    %2807 = vmatprep.subr.bf16.mxu0 %v1966
    %2808 = vmatpush2.bf16.msra.mxu0 %v1965
    %2809 = vmatprep.subr.bf16.mxu0 %v1958
    %2810 = vmatpush2.bf16.msra.mxu0 %v1957
    %2811 = vmatprep.subr.bf16.mxu0 %v1950
    %2812 = vmatpush2.bf16.msra.mxu0 %v1949
    %2813 = vmatprep.mubr.bf16.mxu0 %v125
    %2814 = vmatmul.mubr.bf16.gmra.mxu0 %v124
    %v2815 = vpop.f32.mrf.mxu0
    %v2816 = vadd.f32 %v2775, %v2815
    %v2817 = vpop.f32.mrf.mxu0
    %v2818 = vadd.f32 %v2777, %v2817
    %v2819 = vpop.f32.mrf.mxu0
    %v2820 = vpop.f32.mrf.mxu0
    %2821 = vdwg.mxu0
    %2822 = vmatprep.subr.bf16.mxu0 %v2070
    %2823 = vmatpush1.bf16.msra.mxu0 %v2069
    %2824 = vmatprep.subr.bf16.mxu0 %v2062
    %2825 = vmatpush1.bf16.msra.mxu0 %v2061
    %2826 = vmatprep.subr.bf16.mxu0 %v2054
    %2827 = vmatpush1.bf16.msra.mxu0 %v2053
    %2828 = vmatprep.subr.bf16.mxu0 %v2046
    %2829 = vmatpush1.bf16.msra.mxu0 %v2045
    %2830 = vmatprep.subr.bf16.mxu0 %v2038
    %2831 = vmatpush1.bf16.msra.mxu0 %v2037
    %2832 = vmatprep.subr.bf16.mxu0 %v2030
    %2833 = vmatpush1.bf16.msra.mxu0 %v2029
    %2834 = vmatprep.subr.bf16.mxu0 %v2022
    %2835 = vmatpush1.bf16.msra.mxu0 %v2021
    %2836 = vmatprep.subr.bf16.mxu0 %v2014
    %2837 = vmatpush1.bf16.msra.mxu0 %v2013
    %2838 = vmatprep.subr.bf16.mxu0 %v2134
    %2839 = vmatpush2.bf16.msra.mxu0 %v2133
    %2840 = vmatprep.subr.bf16.mxu0 %v2126
    %2841 = vmatpush2.bf16.msra.mxu0 %v2125
    %2842 = vmatprep.subr.bf16.mxu0 %v2118
    %2843 = vmatpush2.bf16.msra.mxu0 %v2117
    %2844 = vmatprep.subr.bf16.mxu0 %v2110
    %2845 = vmatpush2.bf16.msra.mxu0 %v2109
    %2846 = vmatprep.subr.bf16.mxu0 %v2102
    %2847 = vmatpush2.bf16.msra.mxu0 %v2101
    %2848 = vmatprep.subr.bf16.mxu0 %v2094
    %2849 = vmatpush2.bf16.msra.mxu0 %v2093
    %2850 = vmatprep.subr.bf16.mxu0 %v2086
    %2851 = vmatpush2.bf16.msra.mxu0 %v2085
    %2852 = vmatprep.subr.bf16.mxu0 %v2078
    %2853 = vmatpush2.bf16.msra.mxu0 %v2077
    %2854 = vmatprep.mubr.bf16.mxu0 %v127
    %2855 = vmatmul.mubr.bf16.gmra.mxu0 %v126
    %v2856 = vpop.f32.mrf.mxu0
    %v2857 = vadd.f32 %v2816, %v2856
    %v2858 = vpop.f32.mrf.mxu0
    %v2859 = vadd.f32 %v2818, %v2858
    %v2860 = vpop.f32.mrf.mxu0
    %v2861 = vpop.f32.mrf.mxu0
    %2862 = vdwg.mxu0
    %2863 = vmatprep.subr.bf16.mxu0 0
    %2864 = vmatpush1.bf16.msra.mxu0 0
    %2865 = vmatprep.subr.bf16.mxu0 0
    %2866 = vmatpush1.bf16.msra.mxu0 0
    %2867 = vmatprep.subr.bf16.mxu0 0
    %2868 = vmatpush1.bf16.msra.mxu0 0
    %2869 = vmatprep.subr.bf16.mxu0 0
    %2870 = vmatpush1.bf16.msra.mxu0 0
    %2871 = vmatprep.subr.bf16.mxu0 0
    %2872 = vmatpush1.bf16.msra.mxu0 0
    %2873 = vmatprep.subr.bf16.mxu0 0
    %2874 = vmatpush1.bf16.msra.mxu0 0
    %2875 = vmatprep.subr.bf16.mxu0 %v2562
    %2876 = vmatpush1.bf16.msra.mxu0 %v2559
    %2877 = vmatprep.subr.bf16.mxu0 %v2142
    %2878 = vmatpush1.bf16.msra.mxu0 %v2141
    %2879 = vmatprep.subr.bf16.mxu0 0
    %2880 = vmatpush2.bf16.msra.mxu0 0
    %2881 = vmatprep.subr.bf16.mxu0 0
    %2882 = vmatpush2.bf16.msra.mxu0 0
    %2883 = vmatprep.subr.bf16.mxu0 0
    %2884 = vmatpush2.bf16.msra.mxu0 0
    %2885 = vmatprep.subr.bf16.mxu0 0
    %2886 = vmatpush2.bf16.msra.mxu0 0
    %2887 = vmatprep.subr.bf16.mxu0 0
    %2888 = vmatpush2.bf16.msra.mxu0 0
    %2889 = vmatprep.subr.bf16.mxu0 0
    %2890 = vmatpush2.bf16.msra.mxu0 0
    %2891 = vmatprep.subr.bf16.mxu0 0
    %2892 = vmatpush2.bf16.msra.mxu0 0
    %2893 = vmatprep.subr.bf16.mxu0 0
    %2894 = vmatpush2.bf16.msra.mxu0 0
    %2895 = vmatprep.mubr.bf16.mxu0 0
    %2896 = vmatmul.mubr.bf16.gmra.mxu0 %v2549
    %v2897 = vpop.f32.mrf.mxu0
    %v2898 = vadd.f32 %v2857, %v2897
    %v2899 = vpop.f32.mrf.mxu0
    %v2900 = vadd.f32 %v2859, %v2899
    %v2901 = vpop.f32.mrf.mxu0
    %v2902 = vpop.f32.mrf.mxu0
    %2903 = vdwg.mxu0
    %2904 = vmatprep.subr.bf16.mxu0 %v1816
    %2905 = vmatpush1.bf16.msra.mxu0 %v1815
    %2906 = vmatprep.subr.bf16.mxu0 %v1808
    %2907 = vmatpush1.bf16.msra.mxu0 %v1807
    %2908 = vmatprep.subr.bf16.mxu0 %v1800
    %2909 = vmatpush1.bf16.msra.mxu0 %v1799
    %2910 = vmatprep.subr.bf16.mxu0 %v1792
    %2911 = vmatpush1.bf16.msra.mxu0 %v1791
    %2912 = vmatprep.subr.bf16.mxu0 %v1784
    %2913 = vmatpush1.bf16.msra.mxu0 %v1783
    %2914 = vmatprep.subr.bf16.mxu0 %v1776
    %2915 = vmatpush1.bf16.msra.mxu0 %v1775
    %2916 = vmatprep.subr.bf16.mxu0 %v1768
    %2917 = vmatpush1.bf16.msra.mxu0 %v1767
    %2918 = vmatprep.subr.bf16.mxu0 %v1760
    %2919 = vmatpush1.bf16.msra.mxu0 %v1759
    %2920 = vmatprep.subr.bf16.mxu0 %v1880
    %2921 = vmatpush2.bf16.msra.mxu0 %v1879
    %2922 = vmatprep.subr.bf16.mxu0 %v1872
    %2923 = vmatpush2.bf16.msra.mxu0 %v1871
    %2924 = vmatprep.subr.bf16.mxu0 %v1864
    %2925 = vmatpush2.bf16.msra.mxu0 %v1863
    %2926 = vmatprep.subr.bf16.mxu0 %v1856
    %2927 = vmatpush2.bf16.msra.mxu0 %v1855
    %2928 = vmatprep.subr.bf16.mxu0 %v1848
    %2929 = vmatpush2.bf16.msra.mxu0 %v1847
    %2930 = vmatprep.subr.bf16.mxu0 %v1840
    %2931 = vmatpush2.bf16.msra.mxu0 %v1839
    %2932 = vmatprep.subr.bf16.mxu0 %v1832
    %2933 = vmatpush2.bf16.msra.mxu0 %v1831
    %2934 = vmatprep.subr.bf16.mxu0 %v1824
    %2935 = vmatpush2.bf16.msra.mxu0 %v1823
    %2936 = vmatprep.mubr.bf16.mxu0 %v123
    %2937 = vmatmul.mubr.bf16.gmra.mxu0 %v122
    %v2938 = vpop.f32.mrf.mxu0
    %v2939 = vadd.f32 %v546, %v2938
    %v2940 = vpop.f32.mrf.mxu0
    %v2941 = vadd.f32 %v550, %v2940
    %v2942 = vpop.f32.mrf.mxu0
    %v2943 = vpop.f32.mrf.mxu0
    %2944 = vdwg.mxu0
    %2945 = vmatprep.subr.bf16.mxu0 %v1944
    %2946 = vmatpush1.bf16.msra.mxu0 %v1943
    %2947 = vmatprep.subr.bf16.mxu0 %v1936
    %2948 = vmatpush1.bf16.msra.mxu0 %v1935
    %2949 = vmatprep.subr.bf16.mxu0 %v1928
    %2950 = vmatpush1.bf16.msra.mxu0 %v1927
    %2951 = vmatprep.subr.bf16.mxu0 %v1920
    %2952 = vmatpush1.bf16.msra.mxu0 %v1919
    %2953 = vmatprep.subr.bf16.mxu0 %v1912
    %2954 = vmatpush1.bf16.msra.mxu0 %v1911
    %2955 = vmatprep.subr.bf16.mxu0 %v1904
    %2956 = vmatpush1.bf16.msra.mxu0 %v1903
    %2957 = vmatprep.subr.bf16.mxu0 %v1896
    %2958 = vmatpush1.bf16.msra.mxu0 %v1895
    %2959 = vmatprep.subr.bf16.mxu0 %v1888
    %2960 = vmatpush1.bf16.msra.mxu0 %v1887
    %2961 = vmatprep.subr.bf16.mxu0 %v2008
    %2962 = vmatpush2.bf16.msra.mxu0 %v2007
    %2963 = vmatprep.subr.bf16.mxu0 %v2000
    %2964 = vmatpush2.bf16.msra.mxu0 %v1999
    %2965 = vmatprep.subr.bf16.mxu0 %v1992
    %2966 = vmatpush2.bf16.msra.mxu0 %v1991
    %2967 = vmatprep.subr.bf16.mxu0 %v1984
    %2968 = vmatpush2.bf16.msra.mxu0 %v1983
    %2969 = vmatprep.subr.bf16.mxu0 %v1976
    %2970 = vmatpush2.bf16.msra.mxu0 %v1975
    %2971 = vmatprep.subr.bf16.mxu0 %v1968
    %2972 = vmatpush2.bf16.msra.mxu0 %v1967
    %2973 = vmatprep.subr.bf16.mxu0 %v1960
    %2974 = vmatpush2.bf16.msra.mxu0 %v1959
    %2975 = vmatprep.subr.bf16.mxu0 %v1952
    %2976 = vmatpush2.bf16.msra.mxu0 %v1951
    %2977 = vmatprep.mubr.bf16.mxu0 %v125
    %2978 = vmatmul.mubr.bf16.gmra.mxu0 %v124
    %v2979 = vpop.f32.mrf.mxu0
    %v2980 = vadd.f32 %v2939, %v2979
    %v2981 = vpop.f32.mrf.mxu0
    %v2982 = vadd.f32 %v2941, %v2981
    %v2983 = vpop.f32.mrf.mxu0
    %v2984 = vpop.f32.mrf.mxu0
    %2985 = vdwg.mxu0
    %2986 = vmatprep.subr.bf16.mxu0 %v2072
    %2987 = vmatpush1.bf16.msra.mxu0 %v2071
    %2988 = vmatprep.subr.bf16.mxu0 %v2064
    %2989 = vmatpush1.bf16.msra.mxu0 %v2063
    %2990 = vmatprep.subr.bf16.mxu0 %v2056
    %2991 = vmatpush1.bf16.msra.mxu0 %v2055
    %2992 = vmatprep.subr.bf16.mxu0 %v2048
    %2993 = vmatpush1.bf16.msra.mxu0 %v2047
    %2994 = vmatprep.subr.bf16.mxu0 %v2040
    %2995 = vmatpush1.bf16.msra.mxu0 %v2039
    %2996 = vmatprep.subr.bf16.mxu0 %v2032
    %2997 = vmatpush1.bf16.msra.mxu0 %v2031
    %2998 = vmatprep.subr.bf16.mxu0 %v2024
    %2999 = vmatpush1.bf16.msra.mxu0 %v2023
    %3000 = vmatprep.subr.bf16.mxu0 %v2016
    %3001 = vmatpush1.bf16.msra.mxu0 %v2015
    %3002 = vmatprep.subr.bf16.mxu0 %v2136
    %3003 = vmatpush2.bf16.msra.mxu0 %v2135
    %3004 = vmatprep.subr.bf16.mxu0 %v2128
    %3005 = vmatpush2.bf16.msra.mxu0 %v2127
    %3006 = vmatprep.subr.bf16.mxu0 %v2120
    %3007 = vmatpush2.bf16.msra.mxu0 %v2119
    %3008 = vmatprep.subr.bf16.mxu0 %v2112
    %3009 = vmatpush2.bf16.msra.mxu0 %v2111
    %3010 = vmatprep.subr.bf16.mxu0 %v2104
    %3011 = vmatpush2.bf16.msra.mxu0 %v2103
    %3012 = vmatprep.subr.bf16.mxu0 %v2096
    %3013 = vmatpush2.bf16.msra.mxu0 %v2095
    %3014 = vmatprep.subr.bf16.mxu0 %v2088
    %3015 = vmatpush2.bf16.msra.mxu0 %v2087
    %3016 = vmatprep.subr.bf16.mxu0 %v2080
    %3017 = vmatpush2.bf16.msra.mxu0 %v2079
    %3018 = vmatprep.mubr.bf16.mxu0 %v127
    %3019 = vmatmul.mubr.bf16.gmra.mxu0 %v126
    %v3020 = vpop.f32.mrf.mxu0
    %v3021 = vadd.f32 %v2980, %v3020
    %v3022 = vpop.f32.mrf.mxu0
    %v3023 = vadd.f32 %v2982, %v3022
    %v3024 = vpop.f32.mrf.mxu0
    %v3025 = vpop.f32.mrf.mxu0
    %3026 = vdwg.mxu0
    %3027 = vmatprep.subr.bf16.mxu0 0
    %3028 = vmatpush1.bf16.msra.mxu0 0
    %3029 = vmatprep.subr.bf16.mxu0 0
    %3030 = vmatpush1.bf16.msra.mxu0 0
    %3031 = vmatprep.subr.bf16.mxu0 0
    %3032 = vmatpush1.bf16.msra.mxu0 0
    %3033 = vmatprep.subr.bf16.mxu0 0
    %3034 = vmatpush1.bf16.msra.mxu0 0
    %3035 = vmatprep.subr.bf16.mxu0 0
    %3036 = vmatpush1.bf16.msra.mxu0 0
    %3037 = vmatprep.subr.bf16.mxu0 0
    %3038 = vmatpush1.bf16.msra.mxu0 0
    %3039 = vmatprep.subr.bf16.mxu0 %v2568
    %3040 = vmatpush1.bf16.msra.mxu0 %v2565
    %3041 = vmatprep.subr.bf16.mxu0 %v2144
    %3042 = vmatpush1.bf16.msra.mxu0 %v2143
    %3043 = vmatprep.subr.bf16.mxu0 0
    %3044 = vmatpush2.bf16.msra.mxu0 0
    %3045 = vmatprep.subr.bf16.mxu0 0
    %3046 = vmatpush2.bf16.msra.mxu0 0
    %3047 = vmatprep.subr.bf16.mxu0 0
    %3048 = vmatpush2.bf16.msra.mxu0 0
    %3049 = vmatprep.subr.bf16.mxu0 0
    %3050 = vmatpush2.bf16.msra.mxu0 0
    %3051 = vmatprep.subr.bf16.mxu0 0
    %3052 = vmatpush2.bf16.msra.mxu0 0
    %3053 = vmatprep.subr.bf16.mxu0 0
    %3054 = vmatpush2.bf16.msra.mxu0 0
    %3055 = vmatprep.subr.bf16.mxu0 0
    %3056 = vmatpush2.bf16.msra.mxu0 0
    %3057 = vmatprep.subr.bf16.mxu0 0
    %3058 = vmatpush2.bf16.msra.mxu0 0
    %3059 = vmatprep.mubr.bf16.mxu0 0
    %3060 = vmatmul.mubr.bf16.gmra.mxu0 %v2549
    %v3061 = vpop.f32.mrf.mxu0
    %v3062 = vadd.f32 %v3021, %v3061
    %v3063 = vpop.f32.mrf.mxu0
    %v3064 = vadd.f32 %v3023, %v3063
    %v3065 = vpop.f32.mrf.mxu0
    %v3066 = vpop.f32.mrf.mxu0
    %3067 = vdwg.mxu0
    %3068 = vmatprep.subr.bf16.mxu0 %v1818
    %3069 = vmatpush1.bf16.msra.mxu0 %v1817
    %3070 = vmatprep.subr.bf16.mxu0 %v1810
    %3071 = vmatpush1.bf16.msra.mxu0 %v1809
    %3072 = vmatprep.subr.bf16.mxu0 %v1802
    %3073 = vmatpush1.bf16.msra.mxu0 %v1801
    %3074 = vmatprep.subr.bf16.mxu0 %v1794
    %3075 = vmatpush1.bf16.msra.mxu0 %v1793
    %3076 = vmatprep.subr.bf16.mxu0 %v1786
    %3077 = vmatpush1.bf16.msra.mxu0 %v1785
    %3078 = vmatprep.subr.bf16.mxu0 %v1778
    %3079 = vmatpush1.bf16.msra.mxu0 %v1777
    %3080 = vmatprep.subr.bf16.mxu0 %v1770
    %3081 = vmatpush1.bf16.msra.mxu0 %v1769
    %3082 = vmatprep.subr.bf16.mxu0 %v1762
    %3083 = vmatpush1.bf16.msra.mxu0 %v1761
    %3084 = vmatprep.subr.bf16.mxu0 %v1882
    %3085 = vmatpush2.bf16.msra.mxu0 %v1881
    %3086 = vmatprep.subr.bf16.mxu0 %v1874
    %3087 = vmatpush2.bf16.msra.mxu0 %v1873
    %3088 = vmatprep.subr.bf16.mxu0 %v1866
    %3089 = vmatpush2.bf16.msra.mxu0 %v1865
    %3090 = vmatprep.subr.bf16.mxu0 %v1858
    %3091 = vmatpush2.bf16.msra.mxu0 %v1857
    %3092 = vmatprep.subr.bf16.mxu0 %v1850
    %3093 = vmatpush2.bf16.msra.mxu0 %v1849
    %3094 = vmatprep.subr.bf16.mxu0 %v1842
    %3095 = vmatpush2.bf16.msra.mxu0 %v1841
    %3096 = vmatprep.subr.bf16.mxu0 %v1834
    %3097 = vmatpush2.bf16.msra.mxu0 %v1833
    %3098 = vmatprep.subr.bf16.mxu0 %v1826
    %3099 = vmatpush2.bf16.msra.mxu0 %v1825
    %3100 = vmatprep.mubr.bf16.mxu0 %v123
    %3101 = vmatmul.mubr.bf16.gmra.mxu0 %v122
    %v3102 = vpop.f32.mrf.mxu0
    %v3103 = vadd.f32 %v554, %v3102
    %v3104 = vpop.f32.mrf.mxu0
    %v3105 = vadd.f32 %v558, %v3104
    %v3106 = vpop.f32.mrf.mxu0
    %v3107 = vpop.f32.mrf.mxu0
    %3108 = vdwg.mxu0
    %3109 = vmatprep.subr.bf16.mxu0 %v1946
    %3110 = vmatpush1.bf16.msra.mxu0 %v1945
    %3111 = vmatprep.subr.bf16.mxu0 %v1938
    %3112 = vmatpush1.bf16.msra.mxu0 %v1937
    %3113 = vmatprep.subr.bf16.mxu0 %v1930
    %3114 = vmatpush1.bf16.msra.mxu0 %v1929
    %3115 = vmatprep.subr.bf16.mxu0 %v1922
    %3116 = vmatpush1.bf16.msra.mxu0 %v1921
    %3117 = vmatprep.subr.bf16.mxu0 %v1914
    %3118 = vmatpush1.bf16.msra.mxu0 %v1913
    %3119 = vmatprep.subr.bf16.mxu0 %v1906
    %3120 = vmatpush1.bf16.msra.mxu0 %v1905
    %3121 = vmatprep.subr.bf16.mxu0 %v1898
    %3122 = vmatpush1.bf16.msra.mxu0 %v1897
    %3123 = vmatprep.subr.bf16.mxu0 %v1890
    %3124 = vmatpush1.bf16.msra.mxu0 %v1889
    %3125 = vmatprep.subr.bf16.mxu0 %v2010
    %3126 = vmatpush2.bf16.msra.mxu0 %v2009
    %3127 = vmatprep.subr.bf16.mxu0 %v2002
    %3128 = vmatpush2.bf16.msra.mxu0 %v2001
    %3129 = vmatprep.subr.bf16.mxu0 %v1994
    %3130 = vmatpush2.bf16.msra.mxu0 %v1993
    %3131 = vmatprep.subr.bf16.mxu0 %v1986
    %3132 = vmatpush2.bf16.msra.mxu0 %v1985
    %3133 = vmatprep.subr.bf16.mxu0 %v1978
    %3134 = vmatpush2.bf16.msra.mxu0 %v1977
    %3135 = vmatprep.subr.bf16.mxu0 %v1970
    %3136 = vmatpush2.bf16.msra.mxu0 %v1969
    %3137 = vmatprep.subr.bf16.mxu0 %v1962
    %3138 = vmatpush2.bf16.msra.mxu0 %v1961
    %3139 = vmatprep.subr.bf16.mxu0 %v1954
    %3140 = vmatpush2.bf16.msra.mxu0 %v1953
    %3141 = vmatprep.mubr.bf16.mxu0 %v125
    %3142 = vmatmul.mubr.bf16.gmra.mxu0 %v124
    %v3143 = vpop.f32.mrf.mxu0
    %v3144 = vadd.f32 %v3103, %v3143
    %v3145 = vpop.f32.mrf.mxu0
    %v3146 = vadd.f32 %v3105, %v3145
    %v3147 = vpop.f32.mrf.mxu0
    %v3148 = vpop.f32.mrf.mxu0
    %3149 = vdwg.mxu0
    %3150 = vmatprep.subr.bf16.mxu0 %v2074
    %3151 = vmatpush1.bf16.msra.mxu0 %v2073
    %3152 = vmatprep.subr.bf16.mxu0 %v2066
    %3153 = vmatpush1.bf16.msra.mxu0 %v2065
    %3154 = vmatprep.subr.bf16.mxu0 %v2058
    %3155 = vmatpush1.bf16.msra.mxu0 %v2057
    %3156 = vmatprep.subr.bf16.mxu0 %v2050
    %3157 = vmatpush1.bf16.msra.mxu0 %v2049
    %3158 = vmatprep.subr.bf16.mxu0 %v2042
    %3159 = vmatpush1.bf16.msra.mxu0 %v2041
    %3160 = vmatprep.subr.bf16.mxu0 %v2034
    %3161 = vmatpush1.bf16.msra.mxu0 %v2033
    %3162 = vmatprep.subr.bf16.mxu0 %v2026
    %3163 = vmatpush1.bf16.msra.mxu0 %v2025
    %3164 = vmatprep.subr.bf16.mxu0 %v2018
    %3165 = vmatpush1.bf16.msra.mxu0 %v2017
    %3166 = vmatprep.subr.bf16.mxu0 %v2138
    %3167 = vmatpush2.bf16.msra.mxu0 %v2137
    %3168 = vmatprep.subr.bf16.mxu0 %v2130
    %3169 = vmatpush2.bf16.msra.mxu0 %v2129
    %3170 = vmatprep.subr.bf16.mxu0 %v2122
    %3171 = vmatpush2.bf16.msra.mxu0 %v2121
    %3172 = vmatprep.subr.bf16.mxu0 %v2114
    %3173 = vmatpush2.bf16.msra.mxu0 %v2113
    %3174 = vmatprep.subr.bf16.mxu0 %v2106
    %3175 = vmatpush2.bf16.msra.mxu0 %v2105
    %3176 = vmatprep.subr.bf16.mxu0 %v2098
    %3177 = vmatpush2.bf16.msra.mxu0 %v2097
    %3178 = vmatprep.subr.bf16.mxu0 %v2090
    %3179 = vmatpush2.bf16.msra.mxu0 %v2089
    %3180 = vmatprep.subr.bf16.mxu0 %v2082
    %3181 = vmatpush2.bf16.msra.mxu0 %v2081
    %3182 = vmatprep.mubr.bf16.mxu0 %v127
    %3183 = vmatmul.mubr.bf16.gmra.mxu0 %v126
    %v3184 = vpop.f32.mrf.mxu0
    %v3185 = vadd.f32 %v3144, %v3184
    %v3186 = vpop.f32.mrf.mxu0
    %v3187 = vadd.f32 %v3146, %v3186
    %v3188 = vpop.f32.mrf.mxu0
    %v3189 = vpop.f32.mrf.mxu0
    %3190 = vdwg.mxu0
    %3191 = vmatprep.subr.bf16.mxu0 0
    %3192 = vmatpush1.bf16.msra.mxu0 0
    %3193 = vmatprep.subr.bf16.mxu0 0
    %3194 = vmatpush1.bf16.msra.mxu0 0
    %3195 = vmatprep.subr.bf16.mxu0 0
    %3196 = vmatpush1.bf16.msra.mxu0 0
    %3197 = vmatprep.subr.bf16.mxu0 0
    %3198 = vmatpush1.bf16.msra.mxu0 0
    %3199 = vmatprep.subr.bf16.mxu0 0
    %3200 = vmatpush1.bf16.msra.mxu0 0
    %3201 = vmatprep.subr.bf16.mxu0 0
    %3202 = vmatpush1.bf16.msra.mxu0 0
    %3203 = vmatprep.subr.bf16.mxu0 %v2574
    %3204 = vmatpush1.bf16.msra.mxu0 %v2571
    %3205 = vmatprep.subr.bf16.mxu0 %v2146
    %3206 = vmatpush1.bf16.msra.mxu0 %v2145
    %3207 = vmatprep.subr.bf16.mxu0 0
    %3208 = vmatpush2.bf16.msra.mxu0 0
    %3209 = vmatprep.subr.bf16.mxu0 0
    %3210 = vmatpush2.bf16.msra.mxu0 0
    %3211 = vmatprep.subr.bf16.mxu0 0
    %3212 = vmatpush2.bf16.msra.mxu0 0
    %3213 = vmatprep.subr.bf16.mxu0 0
    %3214 = vmatpush2.bf16.msra.mxu0 0
    %3215 = vmatprep.subr.bf16.mxu0 0
    %3216 = vmatpush2.bf16.msra.mxu0 0
    %3217 = vmatprep.subr.bf16.mxu0 0
    %3218 = vmatpush2.bf16.msra.mxu0 0
    %3219 = vmatprep.subr.bf16.mxu0 0
    %3220 = vmatpush2.bf16.msra.mxu0 0
    %3221 = vmatprep.subr.bf16.mxu0 0
    %3222 = vmatpush2.bf16.msra.mxu0 0
    %3223 = vmatprep.mubr.bf16.mxu0 0
    %3224 = vmatmul.mubr.bf16.gmra.mxu0 %v2549
    %v3225 = vpop.f32.mrf.mxu0
    %v3226 = vadd.f32 %v3185, %v3225
    %v3227 = vpop.f32.mrf.mxu0
    %v3228 = vadd.f32 %v3187, %v3227
    %v3229 = vpop.f32.mrf.mxu0
    %v3230 = vpop.f32.mrf.mxu0
    %3231 = vdwg.mxu0
    %v3232 = vmax.f32 %v2734, 0.0
    %v3233 = vmax.f32 %v2736, 0.0
    %v3234 = vmax.f32 %v2898, 0.0
    %v3235 = vmax.f32 %v2900, 0.0
    %v3236 = vmax.f32 %v3062, 0.0
    %v3237 = vmax.f32 %v3064, 0.0
    %v3238 = vmax.f32 %v3226, 0.0
    %v3239 = vmax.f32 %v3228, 0.0
    %v3240 = vpack.c.bf16 %v3232, %v3232
    %v3241 = vpack.c.bf16 %v3233, %v3233
    %v3242 = vpack.c.bf16 %v3234, %v3234
    %v3243 = vpack.c.bf16 %v3235, %v3235
    %v3244 = vpack.c.bf16 %v3236, %v3236
    %v3245 = vpack.c.bf16 %v3237, %v3237
    %v3246 = vpack.c.bf16 %v3238, %v3238
    %v3247 = vpack.c.bf16 %v3239, %v3239
    %v3248 = vld [vmem:[#allocation8] sm:$0xff]
    %v3249 = vld [vmem:[#allocation8 + $0x8] sm:$0xff]
    %v3250 = vld [vmem:[#allocation8 + $0x10] sm:$0xff]
    %v3251 = vld [vmem:[#allocation8 + $0x18] sm:$0xff]
    %v3252 = vld [vmem:[#allocation8 + $0x20] sm:$0xff]
    %v3253 = vld [vmem:[#allocation8 + $0x28] sm:$0xff]
    %v3254 = vld [vmem:[#allocation8 + $0x30] sm:$0xff]
    %v3255 = vld [vmem:[#allocation8 + $0x38] sm:$0xff]
    %v3256 = vld [vmem:[#allocation8 + $0x40] sm:$0xff]
    %v3257 = vld [vmem:[#allocation8 + $0x48] sm:$0xff]
    %v3258 = vld [vmem:[#allocation8 + $0x50] sm:$0xff]
    %v3259 = vld [vmem:[#allocation8 + $0x58] sm:$0xff]
    %v3260 = vld [vmem:[#allocation8 + $0x60] sm:$0xff]
    %v3261 = vld [vmem:[#allocation8 + $0x68] sm:$0xff]
    %v3262 = vld [vmem:[#allocation8 + $0x70] sm:$0xff]
    %v3263 = vld [vmem:[#allocation8 + $0x78] sm:$0xff]
    %v3264 = vld [vmem:[#allocation8 + $0x80] sm:$0xff]
    %v3265 = vld [vmem:[#allocation8 + $0x88] sm:$0xff]
    %v3266 = vld [vmem:[#allocation8 + $0x90] sm:$0xff]
    %v3267 = vld [vmem:[#allocation8 + $0x98] sm:$0xff]
    %v3268 = vld [vmem:[#allocation8 + $0xa0] sm:$0xff]
    %v3269 = vld [vmem:[#allocation8 + $0xa8] sm:$0xff]
    %v3270 = vld [vmem:[#allocation8 + $0xb0] sm:$0xff]
    %v3271 = vld [vmem:[#allocation8 + $0xb8] sm:$0xff]
    %v3272 = vld [vmem:[#allocation8 + $0xc0] sm:$0xff]
    %v3273 = vld [vmem:[#allocation8 + $0xc8] sm:$0xff]
    %v3274 = vld [vmem:[#allocation8 + $0xd0] sm:$0xff]
    %v3275 = vld [vmem:[#allocation8 + $0xd8] sm:$0xff]
    %v3276 = vld [vmem:[#allocation8 + $0xe0] sm:$0xff]
    %v3277 = vld [vmem:[#allocation8 + $0xe8] sm:$0xff]
    %v3278 = vld [vmem:[#allocation8 + $0xf0] sm:$0xff]
    %v3279 = vld [vmem:[#allocation8 + $0xf8] sm:$0xff]
    %v3280 = vld [vmem:[#allocation8 + $0x100] sm:$0xff]
    %v3281 = vld [vmem:[#allocation8 + $0x108] sm:$0xff]
    %v3282 = vld [vmem:[#allocation8 + $0x110] sm:$0xff]
    %v3283 = vld [vmem:[#allocation8 + $0x118] sm:$0xff]
    %v3284 = vld [vmem:[#allocation8 + $0x120] sm:$0xff]
    %v3285 = vld [vmem:[#allocation8 + $0x128] sm:$0xff]
    %v3286 = vld [vmem:[#allocation8 + $0x130] sm:$0xff]
    %v3287 = vld [vmem:[#allocation8 + $0x138] sm:$0xff]
    %v3288 = vld [vmem:[#allocation8 + $0x140] sm:$0xff]
    %v3289 = vld [vmem:[#allocation8 + $0x148] sm:$0xff]
    %v3290 = vld [vmem:[#allocation8 + $0x150] sm:$0xff]
    %v3291 = vld [vmem:[#allocation8 + $0x158] sm:$0xff]
    %v3292 = vld [vmem:[#allocation8 + $0x160] sm:$0xff]
    %v3293 = vld [vmem:[#allocation8 + $0x168] sm:$0xff]
    %v3294 = vld [vmem:[#allocation8 + $0x170] sm:$0xff]
    %v3295 = vld [vmem:[#allocation8 + $0x178] sm:$0xff]
    %v3296 = vld [vmem:[#allocation8 + $0x180] sm:$0xff]
    %v3297 = vld [vmem:[#allocation8 + $0x188] sm:$0xff]
    %v3298 = vld [vmem:[#allocation8 + $0x190] sm:$0xff]
    %v3299 = vld [vmem:[#allocation8 + $0x198] sm:$0xff]
    %v3300 = vld [vmem:[#allocation8 + $0x1a0] sm:$0xff]
    %v3301 = vld [vmem:[#allocation8 + $0x1a8] sm:$0xff]
    %v3302 = vld [vmem:[#allocation8 + $0x1b0] sm:$0xff]
    %v3303 = vld [vmem:[#allocation8 + $0x1b8] sm:$0xff]
    %v3304 = vld [vmem:[#allocation8 + $0x1c0] sm:$0xff]
    %v3305 = vld [vmem:[#allocation8 + $0x1c8] sm:$0xff]
    %v3306 = vld [vmem:[#allocation8 + $0x1d0] sm:$0xff]
    %v3307 = vld [vmem:[#allocation8 + $0x1d8] sm:$0xff]
    %v3308 = vld [vmem:[#allocation8 + $0x1e0] sm:$0xff]
    %v3309 = vld [vmem:[#allocation8 + $0x1e8] sm:$0xff]
    %v3310 = vld [vmem:[#allocation8 + $0x1f0] sm:$0xff]
    %v3311 = vld [vmem:[#allocation8 + $0x1f8] sm:$0xff]
    %v3312 = vld [vmem:[#allocation8 + $0x200] sm:$0xff]
    %v3313 = vld [vmem:[#allocation8 + $0x208] sm:$0xff]
    %v3314 = vld [vmem:[#allocation8 + $0x210] sm:$0xff]
    %v3315 = vld [vmem:[#allocation8 + $0x218] sm:$0xff]
    %v3316 = vld [vmem:[#allocation8 + $0x220] sm:$0xff]
    %v3317 = vld [vmem:[#allocation8 + $0x228] sm:$0xff]
    %v3318 = vld [vmem:[#allocation8 + $0x230] sm:$0xff]
    %v3319 = vld [vmem:[#allocation8 + $0x238] sm:$0xff]
    %v3320 = vld [vmem:[#allocation8 + $0x240] sm:$0xff]
    %v3321 = vld [vmem:[#allocation8 + $0x248] sm:$0xff]
    %v3322 = vld [vmem:[#allocation8 + $0x250] sm:$0xff]
    %v3323 = vld [vmem:[#allocation8 + $0x258] sm:$0xff]
    %v3324 = vld [vmem:[#allocation8 + $0x260] sm:$0xff]
    %v3325 = vld [vmem:[#allocation8 + $0x268] sm:$0xff]
    %v3326 = vld [vmem:[#allocation8 + $0x270] sm:$0xff]
    %v3327 = vld [vmem:[#allocation8 + $0x278] sm:$0xff]
    %v3328 = vld [vmem:[#allocation8 + $0x280] sm:$0xff]
    %v3329 = vld [vmem:[#allocation8 + $0x288] sm:$0xff]
    %v3330 = vld [vmem:[#allocation8 + $0x290] sm:$0xff]
    %v3331 = vld [vmem:[#allocation8 + $0x298] sm:$0xff]
    %v3332 = vld [vmem:[#allocation8 + $0x2a0] sm:$0xff]
    %v3333 = vld [vmem:[#allocation8 + $0x2a8] sm:$0xff]
    %v3334 = vld [vmem:[#allocation8 + $0x2b0] sm:$0xff]
    %v3335 = vld [vmem:[#allocation8 + $0x2b8] sm:$0xff]
    %v3336 = vld [vmem:[#allocation8 + $0x2c0] sm:$0xff]
    %v3337 = vld [vmem:[#allocation8 + $0x2c8] sm:$0xff]
    %v3338 = vld [vmem:[#allocation8 + $0x2d0] sm:$0xff]
    %v3339 = vld [vmem:[#allocation8 + $0x2d8] sm:$0xff]
    %v3340 = vld [vmem:[#allocation8 + $0x2e0] sm:$0xff]
    %v3341 = vld [vmem:[#allocation8 + $0x2e8] sm:$0xff]
    %v3342 = vld [vmem:[#allocation8 + $0x2f0] sm:$0xff]
    %v3343 = vld [vmem:[#allocation8 + $0x2f8] sm:$0xff]
    %v3344 = vld [vmem:[#allocation8 + $0x300] sm:$0xff]
    %v3345 = vld [vmem:[#allocation8 + $0x308] sm:$0xff]
    %v3346 = vld [vmem:[#allocation8 + $0x310] sm:$0xff]
    %v3347 = vld [vmem:[#allocation8 + $0x318] sm:$0xff]
    %v3348 = vld [vmem:[#allocation8 + $0x320] sm:$0xff]
    %v3349 = vld [vmem:[#allocation8 + $0x328] sm:$0xff]
    %v3350 = vld [vmem:[#allocation8 + $0x330] sm:$0xff]
    %v3351 = vld [vmem:[#allocation8 + $0x338] sm:$0xff]
    %v3352 = vld [vmem:[#allocation8 + $0x340] sm:$0xff]
    %v3353 = vld [vmem:[#allocation8 + $0x348] sm:$0xff]
    %v3354 = vld [vmem:[#allocation8 + $0x350] sm:$0xff]
    %v3355 = vld [vmem:[#allocation8 + $0x358] sm:$0xff]
    %v3356 = vld [vmem:[#allocation8 + $0x360] sm:$0xff]
    %v3357 = vld [vmem:[#allocation8 + $0x368] sm:$0xff]
    %v3358 = vld [vmem:[#allocation8 + $0x370] sm:$0xff]
    %v3359 = vld [vmem:[#allocation8 + $0x378] sm:$0xff]
    %v3360 = vld [vmem:[#allocation8 + $0x380] sm:$0xff]
    %v3361 = vld [vmem:[#allocation8 + $0x388] sm:$0xff]
    %v3362 = vld [vmem:[#allocation8 + $0x390] sm:$0xff]
    %v3363 = vld [vmem:[#allocation8 + $0x398] sm:$0xff]
    %v3364 = vld [vmem:[#allocation8 + $0x3a0] sm:$0xff]
    %v3365 = vld [vmem:[#allocation8 + $0x3a8] sm:$0xff]
    %v3366 = vld [vmem:[#allocation8 + $0x3b0] sm:$0xff]
    %v3367 = vld [vmem:[#allocation8 + $0x3b8] sm:$0xff]
    %v3368 = vld [vmem:[#allocation8 + $0x3c0] sm:$0xff]
    %v3369 = vld [vmem:[#allocation8 + $0x3c8] sm:$0xff]
    %v3370 = vld [vmem:[#allocation8 + $0x3d0] sm:$0xff]
    %v3371 = vld [vmem:[#allocation8 + $0x3d8] sm:$0xff]
    %v3372 = vld [vmem:[#allocation8 + $0x3e0] sm:$0xff]
    %v3373 = vld [vmem:[#allocation8 + $0x3e8] sm:$0xff]
    %v3374 = vld [vmem:[#allocation8 + $0x3f0] sm:$0xff]
    %v3375 = vld [vmem:[#allocation8 + $0x3f8] sm:$0xff]
    %v3376 = vld [vmem:[#allocation10] sm:$0x3]
    %v3378 = vlaneseq
    %v3379 = vshrl.u32 %v3378, 7
    %v3380 = vsub.s32 0, %v3379
    %v3381 = vrot.slane %v3376, %v3380
    %v3382 = vlaneseq
    %v3383 = vshrl.u32 %v3382, 7
    %v3384 = vsub.s32 1, %v3383
    %v3385 = vrot.slane %v3376, %v3384
    %v3516 = vunpack.c.l.b16 %v3248
    %v3517 = vunpack.c.h.b16 %v3248
    %v3518 = vunpack.c.l.b16 %v3249
    %v3519 = vunpack.c.h.b16 %v3249
    %v3520 = vunpack.c.l.b16 %v3250
    %v3521 = vunpack.c.h.b16 %v3250
    %v3522 = vunpack.c.l.b16 %v3251
    %v3523 = vunpack.c.h.b16 %v3251
    %v3524 = vunpack.c.l.b16 %v3252
    %v3525 = vunpack.c.h.b16 %v3252
    %v3526 = vunpack.c.l.b16 %v3253
    %v3527 = vunpack.c.h.b16 %v3253
    %v3528 = vunpack.c.l.b16 %v3254
    %v3529 = vunpack.c.h.b16 %v3254
    %v3530 = vunpack.c.l.b16 %v3255
    %v3531 = vunpack.c.h.b16 %v3255
    %v3532 = vunpack.c.l.b16 %v3256
    %v3533 = vunpack.c.h.b16 %v3256
    %v3534 = vunpack.c.l.b16 %v3257
    %v3535 = vunpack.c.h.b16 %v3257
    %v3536 = vunpack.c.l.b16 %v3258
    %v3537 = vunpack.c.h.b16 %v3258
    %v3538 = vunpack.c.l.b16 %v3259
    %v3539 = vunpack.c.h.b16 %v3259
    %v3540 = vunpack.c.l.b16 %v3260
    %v3541 = vunpack.c.h.b16 %v3260
    %v3542 = vunpack.c.l.b16 %v3261
    %v3543 = vunpack.c.h.b16 %v3261
    %v3544 = vunpack.c.l.b16 %v3262
    %v3545 = vunpack.c.h.b16 %v3262
    %v3546 = vunpack.c.l.b16 %v3263
    %v3547 = vunpack.c.h.b16 %v3263
    %v3548 = vunpack.c.l.b16 %v3264
    %v3549 = vunpack.c.h.b16 %v3264
    %v3550 = vunpack.c.l.b16 %v3265
    %v3551 = vunpack.c.h.b16 %v3265
    %v3552 = vunpack.c.l.b16 %v3266
    %v3553 = vunpack.c.h.b16 %v3266
    %v3554 = vunpack.c.l.b16 %v3267
    %v3555 = vunpack.c.h.b16 %v3267
    %v3556 = vunpack.c.l.b16 %v3268
    %v3557 = vunpack.c.h.b16 %v3268
    %v3558 = vunpack.c.l.b16 %v3269
    %v3559 = vunpack.c.h.b16 %v3269
    %v3560 = vunpack.c.l.b16 %v3270
    %v3561 = vunpack.c.h.b16 %v3270
    %v3562 = vunpack.c.l.b16 %v3271
    %v3563 = vunpack.c.h.b16 %v3271
    %v3564 = vunpack.c.l.b16 %v3272
    %v3565 = vunpack.c.h.b16 %v3272
    %v3566 = vunpack.c.l.b16 %v3273
    %v3567 = vunpack.c.h.b16 %v3273
    %v3568 = vunpack.c.l.b16 %v3274
    %v3569 = vunpack.c.h.b16 %v3274
    %v3570 = vunpack.c.l.b16 %v3275
    %v3571 = vunpack.c.h.b16 %v3275
    %v3572 = vunpack.c.l.b16 %v3276
    %v3573 = vunpack.c.h.b16 %v3276
    %v3574 = vunpack.c.l.b16 %v3277
    %v3575 = vunpack.c.h.b16 %v3277
    %v3576 = vunpack.c.l.b16 %v3278
    %v3577 = vunpack.c.h.b16 %v3278
    %v3578 = vunpack.c.l.b16 %v3279
    %v3579 = vunpack.c.h.b16 %v3279
    %v3580 = vunpack.c.l.b16 %v3280
    %v3581 = vunpack.c.h.b16 %v3280
    %v3582 = vunpack.c.l.b16 %v3281
    %v3583 = vunpack.c.h.b16 %v3281
    %v3584 = vunpack.c.l.b16 %v3282
    %v3585 = vunpack.c.h.b16 %v3282
    %v3586 = vunpack.c.l.b16 %v3283
    %v3587 = vunpack.c.h.b16 %v3283
    %v3588 = vunpack.c.l.b16 %v3284
    %v3589 = vunpack.c.h.b16 %v3284
    %v3590 = vunpack.c.l.b16 %v3285
    %v3591 = vunpack.c.h.b16 %v3285
    %v3592 = vunpack.c.l.b16 %v3286
    %v3593 = vunpack.c.h.b16 %v3286
    %v3594 = vunpack.c.l.b16 %v3287
    %v3595 = vunpack.c.h.b16 %v3287
    %v3596 = vunpack.c.l.b16 %v3288
    %v3597 = vunpack.c.h.b16 %v3288
    %v3598 = vunpack.c.l.b16 %v3289
    %v3599 = vunpack.c.h.b16 %v3289
    %v3600 = vunpack.c.l.b16 %v3290
    %v3601 = vunpack.c.h.b16 %v3290
    %v3602 = vunpack.c.l.b16 %v3291
    %v3603 = vunpack.c.h.b16 %v3291
    %v3604 = vunpack.c.l.b16 %v3292
    %v3605 = vunpack.c.h.b16 %v3292
    %v3606 = vunpack.c.l.b16 %v3293
    %v3607 = vunpack.c.h.b16 %v3293
    %v3608 = vunpack.c.l.b16 %v3294
    %v3609 = vunpack.c.h.b16 %v3294
    %v3610 = vunpack.c.l.b16 %v3295
    %v3611 = vunpack.c.h.b16 %v3295
    %v3612 = vunpack.c.l.b16 %v3296
    %v3613 = vunpack.c.h.b16 %v3296
    %v3614 = vunpack.c.l.b16 %v3297
    %v3615 = vunpack.c.h.b16 %v3297
    %v3616 = vunpack.c.l.b16 %v3298
    %v3617 = vunpack.c.h.b16 %v3298
    %v3618 = vunpack.c.l.b16 %v3299
    %v3619 = vunpack.c.h.b16 %v3299
    %v3620 = vunpack.c.l.b16 %v3300
    %v3621 = vunpack.c.h.b16 %v3300
    %v3622 = vunpack.c.l.b16 %v3301
    %v3623 = vunpack.c.h.b16 %v3301
    %v3624 = vunpack.c.l.b16 %v3302
    %v3625 = vunpack.c.h.b16 %v3302
    %v3626 = vunpack.c.l.b16 %v3303
    %v3627 = vunpack.c.h.b16 %v3303
    %v3628 = vunpack.c.l.b16 %v3304
    %v3629 = vunpack.c.h.b16 %v3304
    %v3630 = vunpack.c.l.b16 %v3305
    %v3631 = vunpack.c.h.b16 %v3305
    %v3632 = vunpack.c.l.b16 %v3306
    %v3633 = vunpack.c.h.b16 %v3306
    %v3634 = vunpack.c.l.b16 %v3307
    %v3635 = vunpack.c.h.b16 %v3307
    %v3636 = vunpack.c.l.b16 %v3308
    %v3637 = vunpack.c.h.b16 %v3308
    %v3638 = vunpack.c.l.b16 %v3309
    %v3639 = vunpack.c.h.b16 %v3309
    %v3640 = vunpack.c.l.b16 %v3310
    %v3641 = vunpack.c.h.b16 %v3310
    %v3642 = vunpack.c.l.b16 %v3311
    %v3643 = vunpack.c.h.b16 %v3311
    %v3644 = vunpack.c.l.b16 %v3312
    %v3645 = vunpack.c.h.b16 %v3312
    %v3646 = vunpack.c.l.b16 %v3313
    %v3647 = vunpack.c.h.b16 %v3313
    %v3648 = vunpack.c.l.b16 %v3314
    %v3649 = vunpack.c.h.b16 %v3314
    %v3650 = vunpack.c.l.b16 %v3315
    %v3651 = vunpack.c.h.b16 %v3315
    %v3652 = vunpack.c.l.b16 %v3316
    %v3653 = vunpack.c.h.b16 %v3316
    %v3654 = vunpack.c.l.b16 %v3317
    %v3655 = vunpack.c.h.b16 %v3317
    %v3656 = vunpack.c.l.b16 %v3318
    %v3657 = vunpack.c.h.b16 %v3318
    %v3658 = vunpack.c.l.b16 %v3319
    %v3659 = vunpack.c.h.b16 %v3319
    %v3660 = vunpack.c.l.b16 %v3320
    %v3661 = vunpack.c.h.b16 %v3320
    %v3662 = vunpack.c.l.b16 %v3321
    %v3663 = vunpack.c.h.b16 %v3321
    %v3664 = vunpack.c.l.b16 %v3322
    %v3665 = vunpack.c.h.b16 %v3322
    %v3666 = vunpack.c.l.b16 %v3323
    %v3667 = vunpack.c.h.b16 %v3323
    %v3668 = vunpack.c.l.b16 %v3324
    %v3669 = vunpack.c.h.b16 %v3324
    %v3670 = vunpack.c.l.b16 %v3325
    %v3671 = vunpack.c.h.b16 %v3325
    %v3672 = vunpack.c.l.b16 %v3326
    %v3673 = vunpack.c.h.b16 %v3326
    %v3674 = vunpack.c.l.b16 %v3327
    %v3675 = vunpack.c.h.b16 %v3327
    %v3676 = vunpack.c.l.b16 %v3328
    %v3677 = vunpack.c.h.b16 %v3328
    %v3678 = vunpack.c.l.b16 %v3329
    %v3679 = vunpack.c.h.b16 %v3329
    %v3680 = vunpack.c.l.b16 %v3330
    %v3681 = vunpack.c.h.b16 %v3330
    %v3682 = vunpack.c.l.b16 %v3331
    %v3683 = vunpack.c.h.b16 %v3331
    %v3684 = vunpack.c.l.b16 %v3332
    %v3685 = vunpack.c.h.b16 %v3332
    %v3686 = vunpack.c.l.b16 %v3333
    %v3687 = vunpack.c.h.b16 %v3333
    %v3688 = vunpack.c.l.b16 %v3334
    %v3689 = vunpack.c.h.b16 %v3334
    %v3690 = vunpack.c.l.b16 %v3335
    %v3691 = vunpack.c.h.b16 %v3335
    %v3692 = vunpack.c.l.b16 %v3336
    %v3693 = vunpack.c.h.b16 %v3336
    %v3694 = vunpack.c.l.b16 %v3337
    %v3695 = vunpack.c.h.b16 %v3337
    %v3696 = vunpack.c.l.b16 %v3338
    %v3697 = vunpack.c.h.b16 %v3338
    %v3698 = vunpack.c.l.b16 %v3339
    %v3699 = vunpack.c.h.b16 %v3339
    %v3700 = vunpack.c.l.b16 %v3340
    %v3701 = vunpack.c.h.b16 %v3340
    %v3702 = vunpack.c.l.b16 %v3341
    %v3703 = vunpack.c.h.b16 %v3341
    %v3704 = vunpack.c.l.b16 %v3342
    %v3705 = vunpack.c.h.b16 %v3342
    %v3706 = vunpack.c.l.b16 %v3343
    %v3707 = vunpack.c.h.b16 %v3343
    %v3708 = vunpack.c.l.b16 %v3344
    %v3709 = vunpack.c.h.b16 %v3344
    %v3710 = vunpack.c.l.b16 %v3345
    %v3711 = vunpack.c.h.b16 %v3345
    %v3712 = vunpack.c.l.b16 %v3346
    %v3713 = vunpack.c.h.b16 %v3346
    %v3714 = vunpack.c.l.b16 %v3347
    %v3715 = vunpack.c.h.b16 %v3347
    %v3716 = vunpack.c.l.b16 %v3348
    %v3717 = vunpack.c.h.b16 %v3348
    %v3718 = vunpack.c.l.b16 %v3349
    %v3719 = vunpack.c.h.b16 %v3349
    %v3720 = vunpack.c.l.b16 %v3350
    %v3721 = vunpack.c.h.b16 %v3350
    %v3722 = vunpack.c.l.b16 %v3351
    %v3723 = vunpack.c.h.b16 %v3351
    %v3724 = vunpack.c.l.b16 %v3352
    %v3725 = vunpack.c.h.b16 %v3352
    %v3726 = vunpack.c.l.b16 %v3353
    %v3727 = vunpack.c.h.b16 %v3353
    %v3728 = vunpack.c.l.b16 %v3354
    %v3729 = vunpack.c.h.b16 %v3354
    %v3730 = vunpack.c.l.b16 %v3355
    %v3731 = vunpack.c.h.b16 %v3355
    %v3732 = vunpack.c.l.b16 %v3356
    %v3733 = vunpack.c.h.b16 %v3356
    %v3734 = vunpack.c.l.b16 %v3357
    %v3735 = vunpack.c.h.b16 %v3357
    %v3736 = vunpack.c.l.b16 %v3358
    %v3737 = vunpack.c.h.b16 %v3358
    %v3738 = vunpack.c.l.b16 %v3359
    %v3739 = vunpack.c.h.b16 %v3359
    %v3740 = vunpack.c.l.b16 %v3360
    %v3741 = vunpack.c.h.b16 %v3360
    %v3742 = vunpack.c.l.b16 %v3361
    %v3743 = vunpack.c.h.b16 %v3361
    %v3744 = vunpack.c.l.b16 %v3362
    %v3745 = vunpack.c.h.b16 %v3362
    %v3746 = vunpack.c.l.b16 %v3363
    %v3747 = vunpack.c.h.b16 %v3363
    %v3748 = vunpack.c.l.b16 %v3364
    %v3749 = vunpack.c.h.b16 %v3364
    %v3750 = vunpack.c.l.b16 %v3365
    %v3751 = vunpack.c.h.b16 %v3365
    %v3752 = vunpack.c.l.b16 %v3366
    %v3753 = vunpack.c.h.b16 %v3366
    %v3754 = vunpack.c.l.b16 %v3367
    %v3755 = vunpack.c.h.b16 %v3367
    %v3756 = vunpack.c.l.b16 %v3368
    %v3757 = vunpack.c.h.b16 %v3368
    %v3758 = vunpack.c.l.b16 %v3369
    %v3759 = vunpack.c.h.b16 %v3369
    %v3760 = vunpack.c.l.b16 %v3370
    %v3761 = vunpack.c.h.b16 %v3370
    %v3762 = vunpack.c.l.b16 %v3371
    %v3763 = vunpack.c.h.b16 %v3371
    %v3764 = vunpack.c.l.b16 %v3372
    %v3765 = vunpack.c.h.b16 %v3372
    %v3766 = vunpack.c.l.b16 %v3373
    %v3767 = vunpack.c.h.b16 %v3373
    %v3768 = vunpack.c.l.b16 %v3374
    %v3769 = vunpack.c.h.b16 %v3374
    %v3770 = vunpack.c.l.b16 %v3375
    %v3771 = vunpack.c.h.b16 %v3375
    %v3772 = vpack.c.b16 %v3518, %v3516
    %v3773 = vpack.c.b16 %v3519, %v3517
    %v3774 = vpack.c.b16 %v3522, %v3520
    %v3775 = vpack.c.b16 %v3523, %v3521
    %v3776 = vpack.c.b16 %v3526, %v3524
    %v3777 = vpack.c.b16 %v3527, %v3525
    %v3778 = vpack.c.b16 %v3530, %v3528
    %v3779 = vpack.c.b16 %v3531, %v3529
    %v3780 = vpack.c.b16 %v3534, %v3532
    %v3781 = vpack.c.b16 %v3535, %v3533
    %v3782 = vpack.c.b16 %v3538, %v3536
    %v3783 = vpack.c.b16 %v3539, %v3537
    %v3784 = vpack.c.b16 %v3542, %v3540
    %v3785 = vpack.c.b16 %v3543, %v3541
    %v3786 = vpack.c.b16 %v3546, %v3544
    %v3787 = vpack.c.b16 %v3547, %v3545
    %v3788 = vpack.c.b16 %v3550, %v3548
    %v3789 = vpack.c.b16 %v3551, %v3549
    %v3790 = vpack.c.b16 %v3554, %v3552
    %v3791 = vpack.c.b16 %v3555, %v3553
    %v3792 = vpack.c.b16 %v3558, %v3556
    %v3793 = vpack.c.b16 %v3559, %v3557
    %v3794 = vpack.c.b16 %v3562, %v3560
    %v3795 = vpack.c.b16 %v3563, %v3561
    %v3796 = vpack.c.b16 %v3566, %v3564
    %v3797 = vpack.c.b16 %v3567, %v3565
    %v3798 = vpack.c.b16 %v3570, %v3568
    %v3799 = vpack.c.b16 %v3571, %v3569
    %v3800 = vpack.c.b16 %v3574, %v3572
    %v3801 = vpack.c.b16 %v3575, %v3573
    %v3802 = vpack.c.b16 %v3578, %v3576
    %v3803 = vpack.c.b16 %v3579, %v3577
    %v3804 = vpack.c.b16 %v3582, %v3580
    %v3805 = vpack.c.b16 %v3583, %v3581
    %v3806 = vpack.c.b16 %v3586, %v3584
    %v3807 = vpack.c.b16 %v3587, %v3585
    %v3808 = vpack.c.b16 %v3590, %v3588
    %v3809 = vpack.c.b16 %v3591, %v3589
    %v3810 = vpack.c.b16 %v3594, %v3592
    %v3811 = vpack.c.b16 %v3595, %v3593
    %v3812 = vpack.c.b16 %v3598, %v3596
    %v3813 = vpack.c.b16 %v3599, %v3597
    %v3814 = vpack.c.b16 %v3602, %v3600
    %v3815 = vpack.c.b16 %v3603, %v3601
    %v3816 = vpack.c.b16 %v3606, %v3604
    %v3817 = vpack.c.b16 %v3607, %v3605
    %v3818 = vpack.c.b16 %v3610, %v3608
    %v3819 = vpack.c.b16 %v3611, %v3609
    %v3820 = vpack.c.b16 %v3614, %v3612
    %v3821 = vpack.c.b16 %v3615, %v3613
    %v3822 = vpack.c.b16 %v3618, %v3616
    %v3823 = vpack.c.b16 %v3619, %v3617
    %v3824 = vpack.c.b16 %v3622, %v3620
    %v3825 = vpack.c.b16 %v3623, %v3621
    %v3826 = vpack.c.b16 %v3626, %v3624
    %v3827 = vpack.c.b16 %v3627, %v3625
    %v3828 = vpack.c.b16 %v3630, %v3628
    %v3829 = vpack.c.b16 %v3631, %v3629
    %v3830 = vpack.c.b16 %v3634, %v3632
    %v3831 = vpack.c.b16 %v3635, %v3633
    %v3832 = vpack.c.b16 %v3638, %v3636
    %v3833 = vpack.c.b16 %v3639, %v3637
    %v3834 = vpack.c.b16 %v3642, %v3640
    %v3835 = vpack.c.b16 %v3643, %v3641
    %v3836 = vpack.c.b16 %v3646, %v3644
    %v3837 = vpack.c.b16 %v3647, %v3645
    %v3838 = vpack.c.b16 %v3650, %v3648
    %v3839 = vpack.c.b16 %v3651, %v3649
    %v3840 = vpack.c.b16 %v3654, %v3652
    %v3841 = vpack.c.b16 %v3655, %v3653
    %v3842 = vpack.c.b16 %v3658, %v3656
    %v3843 = vpack.c.b16 %v3659, %v3657
    %v3844 = vpack.c.b16 %v3662, %v3660
    %v3845 = vpack.c.b16 %v3663, %v3661
    %v3846 = vpack.c.b16 %v3666, %v3664
    %v3847 = vpack.c.b16 %v3667, %v3665
    %v3848 = vpack.c.b16 %v3670, %v3668
    %v3849 = vpack.c.b16 %v3671, %v3669
    %v3850 = vpack.c.b16 %v3674, %v3672
    %v3851 = vpack.c.b16 %v3675, %v3673
    %v3852 = vpack.c.b16 %v3678, %v3676
    %v3853 = vpack.c.b16 %v3679, %v3677
    %v3854 = vpack.c.b16 %v3682, %v3680
    %v3855 = vpack.c.b16 %v3683, %v3681
    %v3856 = vpack.c.b16 %v3686, %v3684
    %v3857 = vpack.c.b16 %v3687, %v3685
    %v3858 = vpack.c.b16 %v3690, %v3688
    %v3859 = vpack.c.b16 %v3691, %v3689
    %v3860 = vpack.c.b16 %v3694, %v3692
    %v3861 = vpack.c.b16 %v3695, %v3693
    %v3862 = vpack.c.b16 %v3698, %v3696
    %v3863 = vpack.c.b16 %v3699, %v3697
    %v3864 = vpack.c.b16 %v3702, %v3700
    %v3865 = vpack.c.b16 %v3703, %v3701
    %v3866 = vpack.c.b16 %v3706, %v3704
    %v3867 = vpack.c.b16 %v3707, %v3705
    %v3868 = vpack.c.b16 %v3710, %v3708
    %v3869 = vpack.c.b16 %v3711, %v3709
    %v3870 = vpack.c.b16 %v3714, %v3712
    %v3871 = vpack.c.b16 %v3715, %v3713
    %v3872 = vpack.c.b16 %v3718, %v3716
    %v3873 = vpack.c.b16 %v3719, %v3717
    %v3874 = vpack.c.b16 %v3722, %v3720
    %v3875 = vpack.c.b16 %v3723, %v3721
    %v3876 = vpack.c.b16 %v3726, %v3724
    %v3877 = vpack.c.b16 %v3727, %v3725
    %v3878 = vpack.c.b16 %v3730, %v3728
    %v3879 = vpack.c.b16 %v3731, %v3729
    %v3880 = vpack.c.b16 %v3734, %v3732
    %v3881 = vpack.c.b16 %v3735, %v3733
    %v3882 = vpack.c.b16 %v3738, %v3736
    %v3883 = vpack.c.b16 %v3739, %v3737
    %v3884 = vpack.c.b16 %v3742, %v3740
    %v3885 = vpack.c.b16 %v3743, %v3741
    %v3886 = vpack.c.b16 %v3746, %v3744
    %v3887 = vpack.c.b16 %v3747, %v3745
    %v3888 = vpack.c.b16 %v3750, %v3748
    %v3889 = vpack.c.b16 %v3751, %v3749
    %v3890 = vpack.c.b16 %v3754, %v3752
    %v3891 = vpack.c.b16 %v3755, %v3753
    %v3892 = vpack.c.b16 %v3758, %v3756
    %v3893 = vpack.c.b16 %v3759, %v3757
    %v3894 = vpack.c.b16 %v3762, %v3760
    %v3895 = vpack.c.b16 %v3763, %v3761
    %v3896 = vpack.c.b16 %v3766, %v3764
    %v3897 = vpack.c.b16 %v3767, %v3765
    %v3898 = vpack.c.b16 %v3770, %v3768
    %v3899 = vpack.c.b16 %v3771, %v3769
    %4028 = vmatprep.subr.bf16.mxu0 %v3787
    %4029 = vmatpush1.bf16.msra.mxu0 %v3786
    %4030 = vmatprep.subr.bf16.mxu0 %v3785
    %4031 = vmatpush1.bf16.msra.mxu0 %v3784
    %4032 = vmatprep.subr.bf16.mxu0 %v3783
    %4033 = vmatpush1.bf16.msra.mxu0 %v3782
    %4034 = vmatprep.subr.bf16.mxu0 %v3781
    %4035 = vmatpush1.bf16.msra.mxu0 %v3780
    %4036 = vmatprep.subr.bf16.mxu0 %v3779
    %4037 = vmatpush1.bf16.msra.mxu0 %v3778
    %4038 = vmatprep.subr.bf16.mxu0 %v3777
    %4039 = vmatpush1.bf16.msra.mxu0 %v3776
    %4040 = vmatprep.subr.bf16.mxu0 %v3775
    %4041 = vmatpush1.bf16.msra.mxu0 %v3774
    %4042 = vmatprep.subr.bf16.mxu0 %v3773
    %4043 = vmatpush1.bf16.msra.mxu0 %v3772
    %4044 = vmatprep.subr.bf16.mxu0 %v3803
    %4045 = vmatpush2.bf16.msra.mxu0 %v3802
    %4046 = vmatprep.subr.bf16.mxu0 %v3801
    %4047 = vmatpush2.bf16.msra.mxu0 %v3800
    %4048 = vmatprep.subr.bf16.mxu0 %v3799
    %4049 = vmatpush2.bf16.msra.mxu0 %v3798
    %4050 = vmatprep.subr.bf16.mxu0 %v3797
    %4051 = vmatpush2.bf16.msra.mxu0 %v3796
    %4052 = vmatprep.subr.bf16.mxu0 %v3795
    %4053 = vmatpush2.bf16.msra.mxu0 %v3794
    %4054 = vmatprep.subr.bf16.mxu0 %v3793
    %4055 = vmatpush2.bf16.msra.mxu0 %v3792
    %4056 = vmatprep.subr.bf16.mxu0 %v3791
    %4057 = vmatpush2.bf16.msra.mxu0 %v3790
    %4058 = vmatprep.subr.bf16.mxu0 %v3789
    %4059 = vmatpush2.bf16.msra.mxu0 %v3788
    %4060 = vmatprep.mubr.bf16.mxu0 %v3241
    %4061 = vmatmul.mubr.bf16.gmra.mxu0 %v3240
    %v4062 = vpop.f32.mrf.mxu0
    %v4063 = vadd.f32 %v3381, %v4062
    %v4064 = vpop.f32.mrf.mxu0
    %v4065 = vadd.f32 %v3385, %v4064
    %v4066 = vpop.f32.mrf.mxu0
    %v4067 = vpop.f32.mrf.mxu0
    %4068 = vdwg.mxu0
    %4069 = vmatprep.subr.bf16.mxu0 %v3819
    %4070 = vmatpush1.bf16.msra.mxu0 %v3818
    %4071 = vmatprep.subr.bf16.mxu0 %v3817
    %4072 = vmatpush1.bf16.msra.mxu0 %v3816
    %4073 = vmatprep.subr.bf16.mxu0 %v3815
    %4074 = vmatpush1.bf16.msra.mxu0 %v3814
    %4075 = vmatprep.subr.bf16.mxu0 %v3813
    %4076 = vmatpush1.bf16.msra.mxu0 %v3812
    %4077 = vmatprep.subr.bf16.mxu0 %v3811
    %4078 = vmatpush1.bf16.msra.mxu0 %v3810
    %4079 = vmatprep.subr.bf16.mxu0 %v3809
    %4080 = vmatpush1.bf16.msra.mxu0 %v3808
    %4081 = vmatprep.subr.bf16.mxu0 %v3807
    %4082 = vmatpush1.bf16.msra.mxu0 %v3806
    %4083 = vmatprep.subr.bf16.mxu0 %v3805
    %4084 = vmatpush1.bf16.msra.mxu0 %v3804
    %4085 = vmatprep.subr.bf16.mxu0 %v3835
    %4086 = vmatpush2.bf16.msra.mxu0 %v3834
    %4087 = vmatprep.subr.bf16.mxu0 %v3833
    %4088 = vmatpush2.bf16.msra.mxu0 %v3832
    %4089 = vmatprep.subr.bf16.mxu0 %v3831
    %4090 = vmatpush2.bf16.msra.mxu0 %v3830
    %4091 = vmatprep.subr.bf16.mxu0 %v3829
    %4092 = vmatpush2.bf16.msra.mxu0 %v3828
    %4093 = vmatprep.subr.bf16.mxu0 %v3827
    %4094 = vmatpush2.bf16.msra.mxu0 %v3826
    %4095 = vmatprep.subr.bf16.mxu0 %v3825
    %4096 = vmatpush2.bf16.msra.mxu0 %v3824
    %4097 = vmatprep.subr.bf16.mxu0 %v3823
    %4098 = vmatpush2.bf16.msra.mxu0 %v3822
    %4099 = vmatprep.subr.bf16.mxu0 %v3821
    %4100 = vmatpush2.bf16.msra.mxu0 %v3820
    %4101 = vmatprep.mubr.bf16.mxu0 %v3243
    %4102 = vmatmul.mubr.bf16.gmra.mxu0 %v3242
    %v4103 = vpop.f32.mrf.mxu0
    %v4104 = vadd.f32 %v4063, %v4103
    %v4105 = vpop.f32.mrf.mxu0
    %v4106 = vadd.f32 %v4065, %v4105
    %v4107 = vpop.f32.mrf.mxu0
    %v4108 = vpop.f32.mrf.mxu0
    %4109 = vdwg.mxu0
    %4110 = vmatprep.subr.bf16.mxu0 %v3851
    %4111 = vmatpush1.bf16.msra.mxu0 %v3850
    %4112 = vmatprep.subr.bf16.mxu0 %v3849
    %4113 = vmatpush1.bf16.msra.mxu0 %v3848
    %4114 = vmatprep.subr.bf16.mxu0 %v3847
    %4115 = vmatpush1.bf16.msra.mxu0 %v3846
    %4116 = vmatprep.subr.bf16.mxu0 %v3845
    %4117 = vmatpush1.bf16.msra.mxu0 %v3844
    %4118 = vmatprep.subr.bf16.mxu0 %v3843
    %4119 = vmatpush1.bf16.msra.mxu0 %v3842
    %4120 = vmatprep.subr.bf16.mxu0 %v3841
    %4121 = vmatpush1.bf16.msra.mxu0 %v3840
    %4122 = vmatprep.subr.bf16.mxu0 %v3839
    %4123 = vmatpush1.bf16.msra.mxu0 %v3838
    %4124 = vmatprep.subr.bf16.mxu0 %v3837
    %4125 = vmatpush1.bf16.msra.mxu0 %v3836
    %4126 = vmatprep.subr.bf16.mxu0 %v3867
    %4127 = vmatpush2.bf16.msra.mxu0 %v3866
    %4128 = vmatprep.subr.bf16.mxu0 %v3865
    %4129 = vmatpush2.bf16.msra.mxu0 %v3864
    %4130 = vmatprep.subr.bf16.mxu0 %v3863
    %4131 = vmatpush2.bf16.msra.mxu0 %v3862
    %4132 = vmatprep.subr.bf16.mxu0 %v3861
    %4133 = vmatpush2.bf16.msra.mxu0 %v3860
    %4134 = vmatprep.subr.bf16.mxu0 %v3859
    %4135 = vmatpush2.bf16.msra.mxu0 %v3858
    %4136 = vmatprep.subr.bf16.mxu0 %v3857
    %4137 = vmatpush2.bf16.msra.mxu0 %v3856
    %4138 = vmatprep.subr.bf16.mxu0 %v3855
    %4139 = vmatpush2.bf16.msra.mxu0 %v3854
    %4140 = vmatprep.subr.bf16.mxu0 %v3853
    %4141 = vmatpush2.bf16.msra.mxu0 %v3852
    %4142 = vmatprep.mubr.bf16.mxu0 %v3245
    %4143 = vmatmul.mubr.bf16.gmra.mxu0 %v3244
    %v4144 = vpop.f32.mrf.mxu0
    %v4145 = vadd.f32 %v4104, %v4144
    %v4146 = vpop.f32.mrf.mxu0
    %v4147 = vadd.f32 %v4106, %v4146
    %v4148 = vpop.f32.mrf.mxu0
    %v4149 = vpop.f32.mrf.mxu0
    %4150 = vdwg.mxu0
    %4151 = vmatprep.subr.bf16.mxu0 %v3883
    %4152 = vmatpush1.bf16.msra.mxu0 %v3882
    %4153 = vmatprep.subr.bf16.mxu0 %v3881
    %4154 = vmatpush1.bf16.msra.mxu0 %v3880
    %4155 = vmatprep.subr.bf16.mxu0 %v3879
    %4156 = vmatpush1.bf16.msra.mxu0 %v3878
    %4157 = vmatprep.subr.bf16.mxu0 %v3877
    %4158 = vmatpush1.bf16.msra.mxu0 %v3876
    %4159 = vmatprep.subr.bf16.mxu0 %v3875
    %4160 = vmatpush1.bf16.msra.mxu0 %v3874
    %4161 = vmatprep.subr.bf16.mxu0 %v3873
    %4162 = vmatpush1.bf16.msra.mxu0 %v3872
    %4163 = vmatprep.subr.bf16.mxu0 %v3871
    %4164 = vmatpush1.bf16.msra.mxu0 %v3870
    %4165 = vmatprep.subr.bf16.mxu0 %v3869
    %4166 = vmatpush1.bf16.msra.mxu0 %v3868
    %4167 = vmatprep.subr.bf16.mxu0 %v3899
    %4168 = vmatpush2.bf16.msra.mxu0 %v3898
    %4169 = vmatprep.subr.bf16.mxu0 %v3897
    %4170 = vmatpush2.bf16.msra.mxu0 %v3896
    %4171 = vmatprep.subr.bf16.mxu0 %v3895
    %4172 = vmatpush2.bf16.msra.mxu0 %v3894
    %4173 = vmatprep.subr.bf16.mxu0 %v3893
    %4174 = vmatpush2.bf16.msra.mxu0 %v3892
    %4175 = vmatprep.subr.bf16.mxu0 %v3891
    %4176 = vmatpush2.bf16.msra.mxu0 %v3890
    %4177 = vmatprep.subr.bf16.mxu0 %v3889
    %4178 = vmatpush2.bf16.msra.mxu0 %v3888
    %4179 = vmatprep.subr.bf16.mxu0 %v3887
    %4180 = vmatpush2.bf16.msra.mxu0 %v3886
    %4181 = vmatprep.subr.bf16.mxu0 %v3885
    %4182 = vmatpush2.bf16.msra.mxu0 %v3884
    %4183 = vmatprep.mubr.bf16.mxu0 %v3247
    %4184 = vmatmul.mubr.bf16.gmra.mxu0 %v3246
    %v4185 = vpop.f32.mrf.mxu0
    %v4186 = vadd.f32 %v4145, %v4185
    %v4187 = vpop.f32.mrf.mxu0
    %v4188 = vadd.f32 %v4147, %v4187
    %v4189 = vpop.f32.mrf.mxu0
    %v4190 = vpop.f32.mrf.mxu0
    %4191 = vdwg.mxu0
    %v4192 = vmax.f32 %v4186, 0.0
    %v4193 = vmax.f32 %v4188, 0.0
    %v4194 = vpack.c.bf16 %v4192, %v4192
    %v4195 = vpack.c.bf16 %v4193, %v4193
    %v4196 = vld [vmem:[#allocation11] sm:$0xf]
    %v4197 = vld [vmem:[#allocation11 + $0x4] sm:$0xf]
    %v4198 = vld [vmem:[#allocation11 + $0x8] sm:$0xf]
    %v4199 = vld [vmem:[#allocation11 + $0xc] sm:$0xf]
    %v4200 = vld [vmem:[#allocation11 + $0x10] sm:$0xf]
    %v4201 = vld [vmem:[#allocation11 + $0x14] sm:$0xf]
    %v4202 = vld [vmem:[#allocation11 + $0x18] sm:$0xf]
    %v4203 = vld [vmem:[#allocation11 + $0x1c] sm:$0xf]
    %v4204 = vld [vmem:[#allocation11 + $0x20] sm:$0xf]
    %v4205 = vld [vmem:[#allocation11 + $0x24] sm:$0xf]
    %v4206 = vld [vmem:[#allocation11 + $0x28] sm:$0xf]
    %v4207 = vld [vmem:[#allocation11 + $0x2c] sm:$0xf]
    %v4208 = vld [vmem:[#allocation11 + $0x30] sm:$0xf]
    %v4209 = vld [vmem:[#allocation11 + $0x34] sm:$0xf]
    %v4210 = vld [vmem:[#allocation11 + $0x38] sm:$0xf]
    %v4211 = vld [vmem:[#allocation11 + $0x3c] sm:$0xf]
    %v4212 = vld [vmem:[#allocation11 + $0x40] sm:$0xf]
    %v4213 = vld [vmem:[#allocation11 + $0x44] sm:$0xf]
    %v4214 = vld [vmem:[#allocation11 + $0x48] sm:$0xf]
    %v4215 = vld [vmem:[#allocation11 + $0x4c] sm:$0xf]
    %v4216 = vld [vmem:[#allocation11 + $0x50] sm:$0xf]
    %v4217 = vld [vmem:[#allocation11 + $0x54] sm:$0xf]
    %v4218 = vld [vmem:[#allocation11 + $0x58] sm:$0xf]
    %v4219 = vld [vmem:[#allocation11 + $0x5c] sm:$0xf]
    %v4220 = vld [vmem:[#allocation11 + $0x60] sm:$0xf]
    %v4221 = vld [vmem:[#allocation11 + $0x64] sm:$0xf]
    %v4222 = vld [vmem:[#allocation11 + $0x68] sm:$0xf]
    %v4223 = vld [vmem:[#allocation11 + $0x6c] sm:$0xf]
    %v4224 = vld [vmem:[#allocation11 + $0x70] sm:$0xf]
    %v4225 = vld [vmem:[#allocation11 + $0x74] sm:$0xf]
    %v4226 = vld [vmem:[#allocation11 + $0x78] sm:$0xf]
    %v4227 = vld [vmem:[#allocation11 + $0x7c] sm:$0xf]
    %v4228 = vld [vmem:[#allocation13] sm:$0x1]
    %v4230 = vlaneseq
    %v4231 = vshrl.u32 %v4230, 7
    %v4232 = vsub.s32 0, %v4231
    %v4233 = vrot.slane %v4228, %v4232
    %v4267 = vunpack.c.l.b16 %v4196
    %v4268 = vunpack.c.l.b16 %v4197
    %v4269 = vunpack.c.l.b16 %v4198
    %v4270 = vunpack.c.l.b16 %v4199
    %v4271 = vunpack.c.l.b16 %v4200
    %v4272 = vunpack.c.l.b16 %v4201
    %v4273 = vunpack.c.l.b16 %v4202
    %v4274 = vunpack.c.l.b16 %v4203
    %v4275 = vunpack.c.l.b16 %v4204
    %v4276 = vunpack.c.l.b16 %v4205
    %v4277 = vunpack.c.l.b16 %v4206
    %v4278 = vunpack.c.l.b16 %v4207
    %v4279 = vunpack.c.l.b16 %v4208
    %v4280 = vunpack.c.l.b16 %v4209
    %v4281 = vunpack.c.l.b16 %v4210
    %v4282 = vunpack.c.l.b16 %v4211
    %v4283 = vunpack.c.l.b16 %v4212
    %v4284 = vunpack.c.l.b16 %v4213
    %v4285 = vunpack.c.l.b16 %v4214
    %v4286 = vunpack.c.l.b16 %v4215
    %v4287 = vunpack.c.l.b16 %v4216
    %v4288 = vunpack.c.l.b16 %v4217
    %v4289 = vunpack.c.l.b16 %v4218
    %v4290 = vunpack.c.l.b16 %v4219
    %v4291 = vunpack.c.l.b16 %v4220
    %v4292 = vunpack.c.l.b16 %v4221
    %v4293 = vunpack.c.l.b16 %v4222
    %v4294 = vunpack.c.l.b16 %v4223
    %v4295 = vunpack.c.l.b16 %v4224
    %v4296 = vunpack.c.l.b16 %v4225
    %v4297 = vunpack.c.l.b16 %v4226
    %v4298 = vunpack.c.l.b16 %v4227
    %v4299 = vpack.c.b16 %v4268, %v4267
    %v4300 = vpack.c.b16 %v4270, %v4269
    %v4301 = vpack.c.b16 %v4272, %v4271
    %v4302 = vpack.c.b16 %v4274, %v4273
    %v4303 = vpack.c.b16 %v4276, %v4275
    %v4304 = vpack.c.b16 %v4278, %v4277
    %v4305 = vpack.c.b16 %v4280, %v4279
    %v4306 = vpack.c.b16 %v4282, %v4281
    %v4307 = vpack.c.b16 %v4284, %v4283
    %v4308 = vpack.c.b16 %v4286, %v4285
    %v4309 = vpack.c.b16 %v4288, %v4287
    %v4310 = vpack.c.b16 %v4290, %v4289
    %v4311 = vpack.c.b16 %v4292, %v4291
    %v4312 = vpack.c.b16 %v4294, %v4293
    %v4313 = vpack.c.b16 %v4296, %v4295
    %v4314 = vpack.c.b16 %v4298, %v4297
    %4331 = vmatprep.subr.bf16.mxu0 0
    %4332 = vmatpush1.bf16.msra.mxu0 %v4306
    %4333 = vmatprep.subr.bf16.mxu0 0
    %4334 = vmatpush1.bf16.msra.mxu0 %v4305
    %4335 = vmatprep.subr.bf16.mxu0 0
    %4336 = vmatpush1.bf16.msra.mxu0 %v4304
    %4337 = vmatprep.subr.bf16.mxu0 0
    %4338 = vmatpush1.bf16.msra.mxu0 %v4303
    %4339 = vmatprep.subr.bf16.mxu0 0
    %4340 = vmatpush1.bf16.msra.mxu0 %v4302
    %4341 = vmatprep.subr.bf16.mxu0 0
    %4342 = vmatpush1.bf16.msra.mxu0 %v4301
    %4343 = vmatprep.subr.bf16.mxu0 0
    %4344 = vmatpush1.bf16.msra.mxu0 %v4300
    %4345 = vmatprep.subr.bf16.mxu0 0
    %4346 = vmatpush1.bf16.msra.mxu0 %v4299
    %4347 = vmatprep.subr.bf16.mxu0 0
    %4348 = vmatpush2.bf16.msra.mxu0 %v4314
    %4349 = vmatprep.subr.bf16.mxu0 0
    %4350 = vmatpush2.bf16.msra.mxu0 %v4313
    %4351 = vmatprep.subr.bf16.mxu0 0
    %4352 = vmatpush2.bf16.msra.mxu0 %v4312
    %4353 = vmatprep.subr.bf16.mxu0 0
    %4354 = vmatpush2.bf16.msra.mxu0 %v4311
    %4355 = vmatprep.subr.bf16.mxu0 0
    %4356 = vmatpush2.bf16.msra.mxu0 %v4310
    %4357 = vmatprep.subr.bf16.mxu0 0
    %4358 = vmatpush2.bf16.msra.mxu0 %v4309
    %4359 = vmatprep.subr.bf16.mxu0 0
    %4360 = vmatpush2.bf16.msra.mxu0 %v4308
    %4361 = vmatprep.subr.bf16.mxu0 0
    %4362 = vmatpush2.bf16.msra.mxu0 %v4307
    %4363 = vmatprep.mubr.bf16.mxu0 %v4195
    %4364 = vmatmul.mubr.bf16.gmra.mxu0 %v4194
    %v4365 = vpop.f32.mrf.mxu0
    %v4366 = vadd.f32 %v4233, %v4365
    %v4367 = vpop.f32.mrf.mxu0
    %v4368 = vpop.f32.mrf.mxu0
    %v4369 = vpop.f32.mrf.mxu0
    %4370 = vdwg.mxu0
    %v4371 = vmax.f32 %v4366, 0.0
    %4372 = vst [vmem:[#allocation14] sm:$0xff] %v4371
    // Predicated region
    $region58: #{b_k_model_forward.1} parent=1 // pred_check
      _
    $region59: #{b_k_model_forward.1} parent=1 // pred_check_branch
      %4374 = sbr.rel (0) target = $region61
    $region60: #{b_k_model_forward.1} parent=1 // pred_region
      %s4376 = ssub.s32 128, 128
      %4377 = vsyncadd [#allocation4], %s4376
      %s4379 = sshll.u32 [#allocation14], 4
      %s4380 = int_to_ptr.vmem [resolvable:$true] %s4379
      %4382 = dma.vmem_to_hbm [thread:$0]  %s4380, 128, %s7, [#allocation4]
    $region61: #{b_k_model_forward.1} parent=1 // pred_fallthru
      _
    // Predicated region
    $region62: #{b_k_model_forward.1} parent=1 // pred_check
      _
    $region63: #{b_k_model_forward.1} parent=1 // pred_check_branch
      %4384 = sbr.rel (0) target = $region65
    $region64: #{b_k_model_forward.1} parent=1 // pred_region
      %4385 = dma.done [#allocation4], 128
    $region65: #{b_k_model_forward.1} parent=1 // pred_fallthru
      _
    %4386 = vsyncpa [#allocation3], 1
    %4387 = vsyncpa [#allocation6], 1
    %4388 = vsyncpa [#allocation9], 1
    %4389 = vsyncpa [#allocation12], 1
    %4390 = vsyncpa [#allocation4], 1

</llo_original>
